<compile_context>
chip_gen: v7x
topology: tpu7x:2x2x1
jax: 0.10.0
libtpu: 0.0.40
codegen_flags: <defaults>
</compile_context>

<pallas_src>
import functools

import jax
import jax.numpy as jnp
from jax.experimental import pallas as pl
from jax.experimental.pallas import tpu as pltpu

OUT_CHANNELS = 256 // 2          # 128, fixed by _LRASPP.__init__
POOL_K, POOL_S = 25, 8           # dataset != 'city': AvgPool2d((25,25),(8,8))
BN_EPS = 1e-5


def _cdiv(a, b):
    return (a + b - 1) // b


def _vmem_capacity_bytes():
    try:
        return int(pltpu.get_tpu_info().vmem_capacity_bytes)
    except Exception:
        return 64 << 20          # conservative fallback (v7x per-TC VMEM)


_VMEM_CAP = _vmem_capacity_bytes()
# Explicit scoped-VMEM limit: ~80% of physical, capped at 100 MiB, >= 32 MiB.
_VMEM_LIMIT = max(min(int(_VMEM_CAP * 0.8), 100 << 20), 32 << 20)


def _choose_tile(hw, per_col_bytes, fixed_bytes, budget_bytes):
    """HW tile size (multiple of 128) and number of tiles, VMEM-budgeted."""
    avail = max(budget_bytes - fixed_bytes, 4 << 20)
    max_thw = max(256, (avail // max(per_col_bytes, 1)) // 128 * 128)
    full = _cdiv(hw, 128) * 128
    thw = min(full, max_thw)
    num_tiles = max(1, _cdiv(hw, thw))
    thw = min(_cdiv(_cdiv(hw, num_tiles), 128) * 128, max_thw)
    while thw * num_tiles < hw:                       # guarantee coverage
        num_tiles += 1
    while num_tiles > 1 and (num_tiles - 1) * thw >= hw:   # drop empty tiles
        num_tiles -= 1
    return thw, num_tiles


# --------------------------------------------------------------------------
# Pallas kernels
# --------------------------------------------------------------------------
def _main_kernel(x_ref, w0_ref, b0_ref, gate_ref, mt_ref, o_ref):
    # x_ref   : (1, Cin, THW)   HW tile of one batch element (NCHW-flat)
    # w0_ref  : (Cout, Cin)     b0 1x1 conv weight, BN folded
    # b0_ref  : (Cout, 1)       folded BN shift (f32)
    # gate_ref: (1, Cout, PP)   pooled b1 branch (post conv+hsigmoid)
    # mt_ref  : (PP, THW)       bilinear align_corners=True interp columns
    # o_ref   : (1, Cout, THW)
    x = x_ref[0]
    f1 = jnp.dot(w0_ref[...], x, preferred_element_type=jnp.float32) + b0_ref[...]
    f1 = jnp.maximum(f1, 0.0)                                    # ReLU (_ConvBNReLU)
    f2 = jnp.dot(gate_ref[0], mt_ref[...],
                 preferred_element_type=jnp.float32)             # fused upsample
    o_ref[0] = (f1 * f2).astype(o_ref.dtype)                     # quant_mul.mul


def _branch_kernel(x_ref, pc_ref, w1_ref, b1_ref, o_ref, acc_ref, *, hw, thw):
    # x_ref  : (1, Cin, THW)   HW tile of one batch element
    # pc_ref : (THW, PP)       avg-pool matrix tile (zeros beyond true HW)
    # w1_ref : (Cout, Cin)     b1 1x1 conv weight, BN folded (conv bias=False)
    # b1_ref : (Cout, 1)       folded BN shift (f32)
    # o_ref  : (1, Cout, PP)   pooled+conv+hsigmoid gate
    # acc_ref: (Cin, PP)       f32 VMEM scratch accumulator for the pooling reduce
    t = pl.program_id(1)
    last = pl.num_programs(1) - 1

    @pl.when(t == 0)
    def _():
        acc_ref[...] = jnp.zeros_like(acc_ref)

    @pl.when(t < last)
    def _():
        # Interior tiles are fully in-bounds: plain accumulate, no mask.
        acc_ref[...] += jnp.dot(x_ref[0], pc_ref[...],
                                preferred_element_type=jnp.float32)

    @pl.when(t == last)
    def _():
        # Last tile: columns >= HW may hold OOB garbage (possibly NaN/Inf);
        # pc's zero rows would not neutralize them (0*NaN=NaN), so mask here.
        xt = x_ref[0]
        col = jax.lax.broadcasted_iota(jnp.int32, (1, thw), 1) + t * thw
        xm = jnp.where(col < hw, xt, jnp.zeros((), xt.dtype))
        acc_ref[...] += jnp.dot(xm, pc_ref[...],
                                preferred_element_type=jnp.float32)
        y = jnp.dot(w1_ref[...].astype(jnp.float32), acc_ref[...],
                    preferred_element_type=jnp.float32) + b1_ref[...]
        y = jnp.clip(y + 3.0, 0.0, 6.0) * (1.0 / 6.0)            # Hsigmoid
        o_ref[0] = y.astype(o_ref.dtype)


# --------------------------------------------------------------------------
# pallas_call wrappers
# --------------------------------------------------------------------------
def _branch_pallas(x_flat, pc, w1, b1, thw, num_tiles, gate_dtype):
    B, Cin, HW = x_flat.shape
    Cout = w1.shape[0]
    PP = pc.shape[1]
    kern = functools.partial(_branch_kernel, hw=HW, thw=thw)
    return pl.pallas_call(
        kern,
        out_shape=jax.ShapeDtypeStruct((B, Cout, PP), gate_dtype),
        grid=(B, num_tiles),                         # t innermost: accumulator carry
        in_specs=[pl.BlockSpec((1, Cin, thw), lambda b, t: (b, 0, t)),
                  pl.BlockSpec((thw, PP), lambda b, t: (t, 0)),
                  pl.BlockSpec((Cout, Cin), lambda b, t: (0, 0)),
                  pl.BlockSpec((Cout, 1), lambda b, t: (0, 0))],
        out_specs=pl.BlockSpec((1, Cout, PP), lambda b, t: (b, 0, 0)),
        scratch_shapes=[pltpu.VMEM((Cin, PP), jnp.float32)],
        compiler_params=pltpu.CompilerParams(
            dimension_semantics=("parallel", "arbitrary"),
            vmem_limit_bytes=_VMEM_LIMIT),
    )(x_flat, pc, w1, b1)


def _main_pallas(x_flat, w0, b0, gate, mt, thw, num_tiles, out_dtype):
    B, Cin, HW = x_flat.shape
    Cout = w0.shape[0]
    PP = gate.shape[2]
    # Grid (num_tiles, B): mt's block index is constant across the inner batch
    # loop, so mt is DMA'd once total instead of once per batch element.
    return pl.pallas_call(
        _main_kernel,
        out_shape=jax.ShapeDtypeStruct((B, Cout, HW), out_dtype),
        grid=(num_tiles, B),
        in_specs=[pl.BlockSpec((1, Cin, thw), lambda t, b: (b, 0, t)),
                  pl.BlockSpec((Cout, Cin), lambda t, b: (0, 0)),
                  pl.BlockSpec((Cout, 1), lambda t, b: (0, 0)),
                  pl.BlockSpec((1, Cout, PP), lambda t, b: (b, 0, 0)),
                  pl.BlockSpec((PP, thw), lambda t, b: (0, t))],
        out_specs=pl.BlockSpec((1, Cout, thw), lambda t, b: (b, 0, t)),
        compiler_params=pltpu.CompilerParams(
            dimension_semantics=("parallel", "parallel"),
            vmem_limit_bytes=_VMEM_LIMIT),
    )(x_flat, w0, b0, gate, mt)


# --------------------------------------------------------------------------
# Glue: pooling / interpolation matrices, parameter folding
# --------------------------------------------------------------------------
def _pool_matrix(out_size, in_size, k, s):
    """(out_size, in_size) row-averaging matrix for AvgPool1d(k, s)."""
    p = jnp.arange(out_size, dtype=jnp.int32)[:, None]
    i = jnp.arange(in_size, dtype=jnp.int32)[None, :]
    mask = (i >= p * s) & (i < p * s + k)
    return mask.astype(jnp.float32) * (1.0 / k)


def _interp_matrix(out_size, in_size):
    """(out_size, in_size) bilinear align_corners=True interpolation matrix."""
    if in_size == 1:
        return jnp.ones((out_size, 1), jnp.float32)
    if out_size == 1:
        return jnp.zeros((1, in_size), jnp.float32).at[0, 0].set(1.0)
    src = jnp.arange(out_size, dtype=jnp.float32) * ((in_size - 1) / (out_size - 1))
    i0 = jnp.clip(jnp.floor(src).astype(jnp.int32), 0, in_size - 2)
    frac = src - i0.astype(jnp.float32)
    rows = jnp.arange(out_size)
    m = jnp.zeros((out_size, in_size), jnp.float32)
    m = m.at[rows, i0].add(1.0 - frac)
    m = m.at[rows, i0 + 1].add(frac)
    return m


@functools.partial(jax.jit, static_argnames=("storage_dtype",))
def lraspp_forward(x_nchw, w0, b0, w1, b1, storage_dtype=jnp.bfloat16):
    B, Cin, H, W = x_nchw.shape
    HW = H * W
    PH = (H - POOL_K) // POOL_S + 1
    PW = (W - POOL_K) // POOL_S + 1
    PP = PH * PW
    Cout = w0.shape[0]

    # VMEM budget per pipeline step for the main kernel (the bigger of the two):
    # double-buffered x / mt / out blocks + f32 f1/f2/product temporaries.
    isz = jnp.dtype(storage_dtype).itemsize
    per_col = 2 * isz * (Cin + PP + Cout) + 12 * Cout
    fixed = 4 * Cout * Cin * isz + (Cin + 2 * Cout) * PP * 4 + (2 << 20)
    thw, num_tiles = _choose_tile(HW, per_col, fixed, int(_VMEM_LIMIT * 0.85))
    padded_hw = thw * num_tiles

    # NCHW-flat, no transpose. Storage cast (no-op for f32; in a real network
    # the backbone activations would already arrive in bf16).
    x_flat = x_nchw.reshape(B, Cin, HW).astype(storage_dtype)
    w0s = w0.astype(storage_dtype)
    w1s = w1.astype(storage_dtype)
    b0s = b0.astype(jnp.float32)
    b1s = b1.astype(jnp.float32)

    # Combined avg-pool matrix: pc[h*W+w, p*PW+q] = Ph[p,h] * Pw[q,w]
    ph_m = _pool_matrix(PH, H, POOL_K, POOL_S)       # (PH, H)
    pw_m = _pool_matrix(PW, W, POOL_K, POOL_S)       # (PW, W)
    pc = jnp.einsum('ph,qw->hwpq', ph_m, pw_m).reshape(HW, PP)
    pc = jnp.pad(pc, ((0, padded_hw - HW), (0, 0))).astype(storage_dtype)

    # Combined bilinear interp matrix: mt[p*PW+q, h*W+w] = Mh[h,p] * Mw[w,q]
    mh = _interp_matrix(H, PH)                       # (H, PH)
    mw = _interp_matrix(W, PW)                       # (W, PW)
    mt = jnp.einsum('hp,wq->pqhw', mh, mw).reshape(PP, HW)
    mt = jnp.pad(mt, ((0, 0), (0, padded_hw - HW))).astype(storage_dtype)

    # b1 branch: tiled avgpool (matmul) + 1x1 conv/BN + hsigmoid
    gate = _branch_pallas(x_flat, pc, w1s, b1s, thw, num_tiles, storage_dtype)
    # b0 branch + fused bilinear upsample + final multiply
    out_flat = _main_pallas(x_flat, w0s, b0s, gate, mt, thw, num_tiles,
                            storage_dtype)
    return out_flat.reshape(B, Cout, H, W)           # already NCHW


def init_params(key, in_channels, out_channels=OUT_CHANNELS):
    ks = jax.random.split(key, 10)

    def bn_fold(kg, kb, km, kv, conv_w):
        gamma = 1.0 + 0.1 * jax.random.normal(kg, (out_channels,), jnp.float32)
        beta = 0.1 * jax.random.normal(kb, (out_channels,), jnp.float32)
        mean = 0.1 * jax.random.normal(km, (out_channels,), jnp.float32)
        var = jnp.abs(1.0 + 0.1 * jax.random.normal(kv, (out_channels,), jnp.float32))
        scale = gamma / jnp.sqrt(var + BN_EPS)
        w_eff = conv_w * scale[:, None]              # (Cout, Cin)
        b_eff = (beta - mean * scale)[:, None]       # (Cout, 1)
        return w_eff, b_eff

    # PyTorch 1x1 conv weights are (Cout, Cin, 1, 1); the 1x1 taps are squeezed.
    w0_raw = 0.1 * jax.random.normal(ks[0], (out_channels, in_channels), jnp.float32)
    w1_raw = 0.1 * jax.random.normal(ks[1], (out_channels, in_channels), jnp.float32)
    w0, b0 = bn_fold(ks[2], ks[3], ks[4], ks[5], w0_raw)
    w1, b1 = bn_fold(ks[6], ks[7], ks[8], ks[9], w1_raw)
    return w0, b0, w1, b1


# Pure-JAX reference (numerical sanity check of the kernels)
def lraspp_ref(x_nchw, w0, b0, w1, b1):
    B, Cin, H, W = x_nchw.shape
    bias0 = b0.reshape(1, -1, 1, 1)
    bias1 = b1.reshape(1, -1, 1, 1)
    f1 = jnp.maximum(jnp.einsum('oc,bchw->bohw', w0, x_nchw) + bias0, 0.0)
    PH = (H - POOL_K) // POOL_S + 1
    PW = (W - POOL_K) // POOL_S + 1
    pooled = jnp.stack([
        jnp.stack([
            jnp.mean(x_nchw[:, :, ph * POOL_S:ph * POOL_S + POOL_K,
                               pw * POOL_S:pw * POOL_S + POOL_K], axis=(2, 3))
            for pw in range(PW)], axis=-1)
        for ph in range(PH)], axis=-2)                    # (B, Cin, PH, PW)
    f2 = jnp.einsum('oc,bcpq->bopq', w1, pooled) + bias1
    f2 = jnp.clip(f2 + 3.0, 0.0, 6.0) / 6.0
    mh = _interp_matrix(H, PH)
    mw = _interp_matrix(W, PW)
    f2u = jnp.einsum('hp,bopq,wq->bohw', mh, f2, mw)
    return f1 * f2u


if __name__ == "__main__":
    # H, W must be >= pool kernel (25) for AvgPool2d((25,25),(8,8)) to be valid.
    B, Cin, H, W = 2, 16, 33, 33
    key = jax.random.PRNGKey(0)
    kx, kp = jax.random.split(key)
    x = jax.random.normal(kx, (B, Cin, H, W), jnp.float32)
    w0, b0, w1, b1 = init_params(kp, Cin)

    # --- strict check: exact-float path (storage_dtype=f32) vs f32 reference
    out_f32 = jax.block_until_ready(
        lraspp_forward(x, w0, b0, w1, b1, storage_dtype=jnp.float32))
    assert out_f32.shape == (B, OUT_CHANNELS, H, W), out_f32.shape
    ref = lraspp_ref(x, w0, b0, w1, b1)
    err32 = float(jnp.max(jnp.abs(out_f32 - ref)))
    # small slack for MXU matmul-reassociation of the pooling reduction
    assert err32 < 2e-3, f"f32 max abs error {err32}"

    # --- fast path: bf16 storage (default), compared against a reference that
    # uses the same bf16-rounded x / weights (f32 math); loose sanity bound for
    # the remaining bf16 storage of gate/mt/pc and the bf16 output cast.
    out_bf16 = jax.block_until_ready(lraspp_forward(x, w0, b0, w1, b1))
    assert out_bf16.shape == (B, OUT_CHANNELS, H, W), out_bf16.shape
    xq = x.astype(jnp.bfloat16).astype(jnp.float32)
    w0q = w0.astype(jnp.bfloat16).astype(jnp.float32)
    w1q = w1.astype(jnp.bfloat16).astype(jnp.float32)
    ref_q = lraspp_ref(xq, w0q, b0, w1q, b1)
    err16 = float(jnp.max(jnp.abs(out_bf16.astype(jnp.float32) - ref_q)))
    assert err16 < 8e-2, f"bf16 max abs error {err16}"

    print("KERNEL_OK")
</pallas_src>

<mosaic_0001>
module attributes {stable_mosaic.version = 11 : i64} {
  func.func @_branch_kernel(%arg0: i32, %arg1: i32, %arg2: memref<1x16x1152xf32, #tpu.memory_space<vmem>>, %arg3: memref<1152x4xf32, #tpu.memory_space<vmem>>, %arg4: memref<128x16xf32, #tpu.memory_space<vmem>>, %arg5: memref<128x1xf32, #tpu.memory_space<vmem>>, %arg6: memref<1x128x4xf32, #tpu.memory_space<vmem>>, %arg7: memref<16x4xf32, #tpu.memory_space<vmem>>) attributes {dimension_semantics = [#tpu.dimension_semantics<parallel>, #tpu.dimension_semantics<arbitrary>], iteration_bounds = array<i64: 2, 1>, scalar_prefetch = 0 : i64, scratch_operands = 1 : i64, tpu.core_type = #tpu.core_type<tc>, window_params = [{transform_indices = @transform_0, window_bounds = array<i64: 1, 16, 1152>}, {transform_indices = @transform_1, window_bounds = array<i64: 1152, 4>}, {pipeline_mode = #tpu.pipeline_mode<synchronous>, transform_indices = @transform_2, window_bounds = array<i64: 128, 16>}, {pipeline_mode = #tpu.pipeline_mode<synchronous>, transform_indices = @transform_3, window_bounds = array<i64: 128, 1>}, {transform_indices = @transform_4, window_bounds = array<i64: 1, 128, 4>}]} {
    %c0_i32 = arith.constant 0 : i32
    %0 = arith.cmpi eq, %arg1, %c0_i32 : i32
    %1 = arith.extui %0 : i1 to i32
    %c0_i32_0 = arith.constant 0 : i32
    %2 = arith.cmpi ne, %1, %c0_i32_0 : i32
    scf.if %2 {
      %cst = arith.constant 0.000000e+00 : f32
      %9 = vector.broadcast %cst : f32 to vector<16x4xf32>
      %c0 = arith.constant 0 : index
      %c0_5 = arith.constant 0 : index
      %10 = vector.load %arg7[%c0, %c0_5] : memref<16x4xf32, #tpu.memory_space<vmem>>, vector<16x4xf32>
      tpu.vector_store %arg7[%c0, %c0_5], %9 {strides = array<i32>} : memref<16x4xf32, #tpu.memory_space<vmem>>, vector<16x4xf32>,
    } else {
    }
    %c0_i32_1 = arith.constant 0 : i32
    %3 = arith.cmpi slt, %arg1, %c0_i32_1 : i32
    %4 = arith.extui %3 : i1 to i32
    %c0_i32_2 = arith.constant 0 : i32
    %5 = arith.cmpi ne, %4, %c0_i32_2 : i32
    scf.if %5 {
      %c0 = arith.constant 0 : index
      %c0_5 = arith.constant 0 : index
      %9 = vector.load %arg7[%c0, %c0_5] : memref<16x4xf32, #tpu.memory_space<vmem>>, vector<16x4xf32>
      %c0_6 = arith.constant 0 : index
      %c0_7 = arith.constant 0 : index
      %c0_8 = arith.constant 0 : index
      %10 = vector.load %arg2[%c0_6, %c0_7, %c0_8] : memref<1x16x1152xf32, #tpu.memory_space<vmem>>, vector<1x16x1152xf32>
      %11 = vector.shape_cast %10 : vector<1x16x1152xf32> to vector<16x1152xf32>
      %c0_9 = arith.constant 0 : index
      %c0_10 = arith.constant 0 : index
      %12 = vector.load %arg3[%c0_9, %c0_10] : memref<1152x4xf32, #tpu.memory_space<vmem>>, vector<1152x4xf32>
      %cst = arith.constant dense<0.000000e+00> : vector<16x4xf32>
      %13 = tpu.matmul %11, %12, %cst {dimension_numbers = #tpu.dot_dimension_numbers<[1], [0], [0], [1], [0, 0, 1, 1], [], []>} : vector<16x1152xf32>, vector<1152x4xf32>, vector<16x4xf32> -> vector<16x4xf32>
      %14 = arith.addf %9, %13 : vector<16x4xf32>
      %c0_11 = arith.constant 0 : index
      %c0_12 = arith.constant 0 : index
      %15 = vector.load %arg7[%c0_11, %c0_12] : memref<16x4xf32, #tpu.memory_space<vmem>>, vector<16x4xf32>
      tpu.vector_store %arg7[%c0_11, %c0_12], %14 {strides = array<i32>} : memref<16x4xf32, #tpu.memory_space<vmem>>, vector<16x4xf32>,
    } else {
    }
    %c0_i32_3 = arith.constant 0 : i32
    %6 = arith.cmpi eq, %arg1, %c0_i32_3 : i32
    %7 = arith.extui %6 : i1 to i32
    %c0_i32_4 = arith.constant 0 : i32
    %8 = arith.cmpi ne, %7, %c0_i32_4 : i32
    scf.if %8 {
      %c0 = arith.constant 0 : index
      %c0_5 = arith.constant 0 : index
      %c0_6 = arith.constant 0 : index
      %9 = vector.load %arg2[%c0, %c0_5, %c0_6] : memref<1x16x1152xf32, #tpu.memory_space<vmem>>, vector<1x16x1152xf32>
      %10 = vector.shape_cast %9 : vector<1x16x1152xf32> to vector<16x1152xf32>
      %11 = tpu.iota {dimensions = array<i32: 1>} : vector<1x1152xi32>
      %c1152_i32 = arith.constant 1152 : i32
      %12 = arith.muli %arg1, %c1152_i32 : i32
      %13 = vector.broadcast %12 : i32 to vector<1x1152xi32>
      %14 = arith.addi %11, %13 : vector<1x1152xi32>
      %c1089_i32 = arith.constant 1089 : i32
      %15 = vector.broadcast %c1089_i32 : i32 to vector<1x1152xi32>
      %16 = arith.cmpi slt, %14, %15 : vector<1x1152xi32>
      %cst = arith.constant 0.000000e+00 : f32
      %17 = vector.shape_cast %16 : vector<1x1152xi1> to vector<1x1152xi1>
      %18 = vector.broadcast %17 : vector<1x1152xi1> to vector<16x1152xi1>
      %19 = vector.broadcast %cst : f32 to vector<16x1152xf32>
      %20 = arith.select %18, %10, %19 : vector<16x1152xi1>, vector<16x1152xf32>
      %c0_7 = arith.constant 0 : index
      %c0_8 = arith.constant 0 : index
      %21 = vector.load %arg7[%c0_7, %c0_8] : memref<16x4xf32, #tpu.memory_space<vmem>>, vector<16x4xf32>
      %c0_9 = arith.constant 0 : index
      %c0_10 = arith.constant 0 : index
      %22 = vector.load %arg3[%c0_9, %c0_10] : memref<1152x4xf32, #tpu.memory_space<vmem>>, vector<1152x4xf32>
      %cst_11 = arith.constant dense<0.000000e+00> : vector<16x4xf32>
      %23 = tpu.matmul %20, %22, %cst_11 {dimension_numbers = #tpu.dot_dimension_numbers<[1], [0], [0], [1], [0, 0, 1, 1], [], []>} : vector<16x1152xf32>, vector<1152x4xf32>, vector<16x4xf32> -> vector<16x4xf32>
      %24 = arith.addf %21, %23 : vector<16x4xf32>
      %c0_12 = arith.constant 0 : index
      %c0_13 = arith.constant 0 : index
      %25 = vector.load %arg7[%c0_12, %c0_13] : memref<16x4xf32, #tpu.memory_space<vmem>>, vector<16x4xf32>
      tpu.vector_store %arg7[%c0_12, %c0_13], %24 {strides = array<i32>} : memref<16x4xf32, #tpu.memory_space<vmem>>, vector<16x4xf32>,
      %c0_14 = arith.constant 0 : index
      %c0_15 = arith.constant 0 : index
      %26 = vector.load %arg4[%c0_14, %c0_15] : memref<128x16xf32, #tpu.memory_space<vmem>>, vector<128x16xf32>
      %c0_16 = arith.constant 0 : index
      %c0_17 = arith.constant 0 : index
      %27 = vector.load %arg7[%c0_16, %c0_17] : memref<16x4xf32, #tpu.memory_space<vmem>>, vector<16x4xf32>
      %cst_18 = arith.constant dense<0.000000e+00> : vector<128x4xf32>
      %28 = tpu.matmul %26, %27, %cst_18 {dimension_numbers = #tpu.dot_dimension_numbers<[1], [0], [0], [1], [0, 0, 1, 1], [], []>} : vector<128x16xf32>, vector<16x4xf32>, vector<128x4xf32> -> vector<128x4xf32>
      %c0_19 = arith.constant 0 : index
      %c0_20 = arith.constant 0 : index
      %29 = vector.load %arg5[%c0_19, %c0_20] : memref<128x1xf32, #tpu.memory_space<vmem>>, vector<128x1xf32>
      %30 = vector.broadcast %29 : vector<128x1xf32> to vector<128x4xf32>
      %31 = arith.addf %28, %30 : vector<128x4xf32>
      %cst_21 = arith.constant 3.000000e+00 : f32
      %32 = vector.broadcast %cst_21 : f32 to vector<128x4xf32>
      %33 = arith.addf %31, %32 : vector<128x4xf32>
      %cst_22 = arith.constant 0.000000e+00 : f32
      %cst_23 = arith.constant 6.000000e+00 : f32
      %34 = vector.broadcast %cst_22 : f32 to vector<128x4xf32>
      %35 = arith.maximumf %34, %33 : vector<128x4xf32>
      %36 = vector.broadcast %cst_23 : f32 to vector<128x4xf32>
      %37 = arith.minimumf %36, %35 : vector<128x4xf32>
      %cst_24 = arith.constant 0.166666672 : f32
      %38 = vector.broadcast %cst_24 : f32 to vector<128x4xf32>
      %39 = arith.mulf %37, %38 : vector<128x4xf32>
      %c0_25 = arith.constant 0 : index
      %c0_26 = arith.constant 0 : index
      %c0_27 = arith.constant 0 : index
      %40 = vector.load %arg6[%c0_25, %c0_26, %c0_27] : memref<1x128x4xf32, #tpu.memory_space<vmem>>, vector<1x128x4xf32>
      %41 = vector.shape_cast %40 : vector<1x128x4xf32> to vector<128x4xf32>
      %42 = vector.shape_cast %39 : vector<128x4xf32> to vector<1x128x4xf32>
      tpu.vector_store %arg6[%c0_25, %c0_26, %c0_27], %42 {strides = array<i32>} : memref<1x128x4xf32, #tpu.memory_space<vmem>>, vector<1x128x4xf32>,
    } else {
    }
    return
  }
  func.func @transform_0(%arg0: i32, %arg1: i32) -> (i32, i32, i32) {
    %c0_i32 = arith.constant 0 : i32
    %c0_i32_0 = arith.constant 0 : i32
    return %arg0, %c0_i32, %arg1 : i32, i32, i32
  }
  func.func @transform_1(%arg0: i32, %arg1: i32) -> (i32, i32) {
    %c0_i32 = arith.constant 0 : i32
    %c0_i32_0 = arith.constant 0 : i32
    return %arg1, %c0_i32 : i32, i32
  }
  func.func @transform_2(%arg0: i32, %arg1: i32) -> (i32, i32) {
    %c0_i32 = arith.constant 0 : i32
    %c0_i32_0 = arith.constant 0 : i32
    %c0_i32_1 = arith.constant 0 : i32
    return %c0_i32, %c0_i32_0 : i32, i32
  }
  func.func @transform_3(%arg0: i32, %arg1: i32) -> (i32, i32) {
    %c0_i32 = arith.constant 0 : i32
    %c0_i32_0 = arith.constant 0 : i32
    %c0_i32_1 = arith.constant 0 : i32
    return %c0_i32, %c0_i32_0 : i32, i32
  }
  func.func @transform_4(%arg0: i32, %arg1: i32) -> (i32, i32, i32) {
    %c0_i32 = arith.constant 0 : i32
    %c0_i32_0 = arith.constant 0 : i32
    %c0_i32_1 = arith.constant 0 : i32
    return %arg0, %c0_i32, %c0_i32_0 : i32, i32, i32
  }
}

module attributes {stable_mosaic.version = 11 : i64} {
  func.func @_main_kernel(%arg0: i32, %arg1: i32, %arg2: memref<1x16x1152xf32, #tpu.memory_space<vmem>>, %arg3: memref<128x16xf32, #tpu.memory_space<vmem>>, %arg4: memref<128x1xf32, #tpu.memory_space<vmem>>, %arg5: memref<1x128x4xf32, #tpu.memory_space<vmem>>, %arg6: memref<4x1152xf32, #tpu.memory_space<vmem>>, %arg7: memref<1x128x1152xf32, #tpu.memory_space<vmem>>) attributes {dimension_semantics = [#tpu.dimension_semantics<parallel>, #tpu.dimension_semantics<parallel>], iteration_bounds = array<i64: 1, 2>, scalar_prefetch = 0 : i64, scratch_operands = 0 : i64, tpu.core_type = #tpu.core_type<tc>, window_params = [{transform_indices = @transform_0, window_bounds = array<i64: 1, 16, 1152>}, {pipeline_mode = #tpu.pipeline_mode<synchronous>, transform_indices = @transform_1, window_bounds = array<i64: 128, 16>}, {pipeline_mode = #tpu.pipeline_mode<synchronous>, transform_indices = @transform_2, window_bounds = array<i64: 128, 1>}, {transform_indices = @transform_3, window_bounds = array<i64: 1, 128, 4>}, {transform_indices = @transform_4, window_bounds = array<i64: 4, 1152>}, {transform_indices = @transform_5, window_bounds = array<i64: 1, 128, 1152>}]} {
    %c0 = arith.constant 0 : index
    %c0_0 = arith.constant 0 : index
    %c0_1 = arith.constant 0 : index
    %0 = vector.load %arg2[%c0, %c0_0, %c0_1] : memref<1x16x1152xf32, #tpu.memory_space<vmem>>, vector<1x16x1152xf32>
    %1 = vector.shape_cast %0 : vector<1x16x1152xf32> to vector<16x1152xf32>
    %c0_2 = arith.constant 0 : index
    %c0_3 = arith.constant 0 : index
    %2 = vector.load %arg3[%c0_2, %c0_3] : memref<128x16xf32, #tpu.memory_space<vmem>>, vector<128x16xf32>
    %cst = arith.constant dense<0.000000e+00> : vector<128x1152xf32>
    %3 = tpu.matmul %2, %1, %cst {dimension_numbers = #tpu.dot_dimension_numbers<[1], [0], [0], [1], [0, 0, 1, 1], [], []>} : vector<128x16xf32>, vector<16x1152xf32>, vector<128x1152xf32> -> vector<128x1152xf32>
    %c0_4 = arith.constant 0 : index
    %c0_5 = arith.constant 0 : index
    %4 = vector.load %arg4[%c0_4, %c0_5] : memref<128x1xf32, #tpu.memory_space<vmem>>, vector<128x1xf32>
    %5 = vector.broadcast %4 : vector<128x1xf32> to vector<128x1152xf32>
    %6 = arith.addf %3, %5 : vector<128x1152xf32>
    %cst_6 = arith.constant 0.000000e+00 : f32
    %7 = vector.broadcast %cst_6 : f32 to vector<128x1152xf32>
    %8 = arith.maximumf %6, %7 : vector<128x1152xf32>
    %c0_7 = arith.constant 0 : index
    %c0_8 = arith.constant 0 : index
    %c0_9 = arith.constant 0 : index
    %9 = vector.load %arg5[%c0_7, %c0_8, %c0_9] : memref<1x128x4xf32, #tpu.memory_space<vmem>>, vector<1x128x4xf32>
    %10 = vector.shape_cast %9 : vector<1x128x4xf32> to vector<128x4xf32>
    %c0_10 = arith.constant 0 : index
    %c0_11 = arith.constant 0 : index
    %11 = vector.load %arg6[%c0_10, %c0_11] : memref<4x1152xf32, #tpu.memory_space<vmem>>, vector<4x1152xf32>
    %cst_12 = arith.constant dense<0.000000e+00> : vector<128x1152xf32>
    %12 = tpu.matmul %10, %11, %cst_12 {dimension_numbers = #tpu.dot_dimension_numbers<[1], [0], [0], [1], [0, 0, 1, 1], [], []>} : vector<128x4xf32>, vector<4x1152xf32>, vector<128x1152xf32> -> vector<128x1152xf32>
    %13 = arith.mulf %8, %12 : vector<128x1152xf32>
    %c0_13 = arith.constant 0 : index
    %c0_14 = arith.constant 0 : index
    %c0_15 = arith.constant 0 : index
    %14 = vector.load %arg7[%c0_13, %c0_14, %c0_15] : memref<1x128x1152xf32, #tpu.memory_space<vmem>>, vector<1x128x1152xf32>
    %15 = vector.shape_cast %14 : vector<1x128x1152xf32> to vector<128x1152xf32>
    %16 = vector.shape_cast %13 : vector<128x1152xf32> to vector<1x128x1152xf32>
    tpu.vector_store %arg7[%c0_13, %c0_14, %c0_15], %16 {strides = array<i32>} : memref<1x128x1152xf32, #tpu.memory_space<vmem>>, vector<1x128x1152xf32>,
    return
  }
  func.func @transform_0(%arg0: i32, %arg1: i32) -> (i32, i32, i32) {
    %c0_i32 = arith.constant 0 : i32
    %c0_i32_0 = arith.constant 0 : i32
    return %arg1, %c0_i32, %arg0 : i32, i32, i32
  }
  func.func @transform_1(%arg0: i32, %arg1: i32) -> (i32, i32) {
    %c0_i32 = arith.constant 0 : i32
    %c0_i32_0 = arith.constant 0 : i32
    %c0_i32_1 = arith.constant 0 : i32
    return %c0_i32, %c0_i32_0 : i32, i32
  }
  func.func @transform_2(%arg0: i32, %arg1: i32) -> (i32, i32) {
    %c0_i32 = arith.constant 0 : i32
    %c0_i32_0 = arith.constant 0 : i32
    %c0_i32_1 = arith.constant 0 : i32
    return %c0_i32, %c0_i32_0 : i32, i32
  }
  func.func @transform_3(%arg0: i32, %arg1: i32) -> (i32, i32, i32) {
    %c0_i32 = arith.constant 0 : i32
    %c0_i32_0 = arith.constant 0 : i32
    %c0_i32_1 = arith.constant 0 : i32
    return %arg1, %c0_i32, %c0_i32_0 : i32, i32, i32
  }
  func.func @transform_4(%arg0: i32, %arg1: i32) -> (i32, i32) {
    %c0_i32 = arith.constant 0 : i32
    %c0_i32_0 = arith.constant 0 : i32
    return %c0_i32, %arg0 : i32, i32
  }
  func.func @transform_5(%arg0: i32, %arg1: i32) -> (i32, i32, i32) {
    %c0_i32 = arith.constant 0 : i32
    %c0_i32_0 = arith.constant 0 : i32
    return %arg1, %c0_i32, %arg0 : i32, i32, i32
  }
}

</mosaic_0001>

<llo_original>
// kernel: lraspp_forward.2
$region0: #{lraspp_forward.2}
  #allocation0 [shape = 'u32[]', space=smem, size = 0x4, offset = 0x4, fixed_abs, tag = 'smem constant byte address 0x4 - core index']
  #allocation1 [shape = 'u32[144,128]{1,0:T(1,128)}', space=vmem, size = 0x12000, scoped, tag = 'internal scratch']
  #allocation2 [shape = 'f32[16,4]{1,0:T(8,128)}', space=vmem, size = 0x2000, scoped, tag = 'scratch operand']
  %s0 = inlined_call_operand.vmem [shape: f32[2,16,1089], index: 0, kind: input, shape index: {}]
  %s1 = inlined_call_operand.vmem [shape: f32[1152,4], index: 1, kind: input, shape index: {}]
  %s2 = inlined_call_operand.vmem [shape: f32[128,16], index: 2, kind: input, shape index: {}]
  %s3 = inlined_call_operand.vmem [shape: f32[128,1], index: 3, kind: input, shape index: {}]
  %s4 = inlined_call_operand.vmem [shape: f32[2,128,4], index: 4, kind: output, shape index: {}]
  %s5 = sld [smem:[#allocation0]]
  $region61: #{lraspp_forward.2} parent=0
    _
  %s7 = ssub.s32 1, %s5
  %s8 = scalar_select 0, %s7, %s5
  loop: start=0, step=1, limit=4
  $region2: #{lraspp_forward.2} parent=0 // loop_pre_header
    _
  $region3: #{lraspp_forward.2} parent=0 // loop_header
    %s10 = sphi 0, %s14
    %p11 = scmp.ge.s32.totalorder %s10, 4
    %s17 = sphi 0, %s29
    %s18 = sphi 0, %s25
    %s19 = sphi 0, %s17
    %s20 = sphi 0, %s18
    %s21 = sphi 0, %s19
    %s22 = sphi 0, %s20
    %s34 = sphi 0, %s36
    %s37 = sphi 0, %s34
    %s38 = sphi 0, %s37
    %s54 = sphi 0, %s38
    %s60 = sphi 0, %s62
    %s63 = sphi 0, %s60
    %s64 = sphi 0, %s63
    %s80 = sphi 0, %s64
    %s84 = sphi 0, %s84
    %s86 = sphi 0, %s84
    %s87 = sphi 0, %s86
    %s101 = sphi 0, %s87
    %s105 = sphi 0, %s105
    %s107 = sphi 0, %s105
    %s108 = sphi 0, %s107
    %s122 = sphi 0, %s108
    %s128 = sphi 0, %s130
    %s131 = sphi 0, %s128
    %s132 = sphi 0, %s131
    %s148 = sphi 0, %s132
  $region4: #{lraspp_forward.2} parent=0 // loop_header_branch
    %13 = sbr.rel (%p11) target = $region8
  $region5: #{lraspp_forward.2} parent=0 // loop_body
    %s15 = ssub.s32 %s10, 1
    %s16 = ssub.s32 %s10, 2
    %s23 = sadd.s32 1, %s18
    %p24 = scmp.ge.s32.totalorder %s23, 1
    %s25 = scalar_select %p24, 0, %s23
    %s26 = sadd.s32 1, %s17
    %s27 = scalar_select %p24, %s26, %s17
    %p28 = scmp.ge.s32.totalorder %s27, 2
    %s29 = scalar_select %p28, 0, %s27
    %s30 = ssub.s32 %s17, %s29
    %s31 = ssub.s32 %s18, %s25
    %s32 = sor.u32 %s30, %s31
    %p33 = scmp.eq.s32.totalorder %s32, 0
    %s35 = sadd.s32 %s34, 1
    %s36 = scalar_select %p33, %s34, %s35
    %p39 = pneg %p33
    %p40 = scmp.eq.s32.totalorder %s10, 1
    %p41 = por %p39, %p40
    %p42 = scmp.ne.s32.totalorder %s34, %s37
    %p43 = scmp.eq.s32.totalorder %s10, 0
    %p44 = por %p42, %p43
    %p45 = scmp.ne.s32.totalorder %s34, %s37
    %p46 = scmp.eq.s32.totalorder %s15, 1
    %p47 = por %p45, %p46
    %p48 = scmp.ne.s32.totalorder %s37, %s38
    %p49 = scmp.eq.s32.totalorder %s15, 0
    %p50 = por %p48, %p49
    %p51 = scmp.ne.s32.totalorder %s37, %s38
    %p52 = scmp.eq.s32.totalorder %s16, 1
    %p53 = por %p51, %p52
    %p55 = scmp.ne.s32.totalorder %s38, %s54
    %p56 = scmp.eq.s32.totalorder %s16, 0
    %p57 = por %p55, %p56
    %s58 = ssub.s32 %s18, %s25
    %p59 = scmp.eq.s32.totalorder %s58, 0
    %s61 = sadd.s32 %s60, 1
    %s62 = scalar_select %p59, %s60, %s61
    %p65 = pneg %p59
    %p66 = scmp.eq.s32.totalorder %s10, 1
    %p67 = por %p65, %p66
    %p68 = scmp.ne.s32.totalorder %s60, %s63
    %p69 = scmp.eq.s32.totalorder %s10, 0
    %p70 = por %p68, %p69
    %p71 = scmp.ne.s32.totalorder %s60, %s63
    %p72 = scmp.eq.s32.totalorder %s15, 1
    %p73 = por %p71, %p72
    %p74 = scmp.ne.s32.totalorder %s63, %s64
    %p75 = scmp.eq.s32.totalorder %s15, 0
    %p76 = por %p74, %p75
    %p77 = scmp.ne.s32.totalorder %s63, %s64
    %p78 = scmp.eq.s32.totalorder %s16, 1
    %p79 = por %p77, %p78
    %p81 = scmp.ne.s32.totalorder %s64, %s80
    %p82 = scmp.eq.s32.totalorder %s16, 0
    %p83 = por %p81, %p82
    %s85 = sadd.s32 %s84, 1
    %p88 = scmp.eq.s32.totalorder %s10, 1
    %p89 = scmp.ne.s32.totalorder %s84, %s86
    %p90 = scmp.eq.s32.totalorder %s10, 0
    %p91 = por %p89, %p90
    %p92 = scmp.ne.s32.totalorder %s84, %s86
    %p93 = scmp.eq.s32.totalorder %s15, 1
    %p94 = por %p92, %p93
    %p95 = scmp.ne.s32.totalorder %s86, %s87
    %p96 = scmp.eq.s32.totalorder %s15, 0
    %p97 = por %p95, %p96
    %p98 = scmp.ne.s32.totalorder %s86, %s87
    %p99 = scmp.eq.s32.totalorder %s16, 1
    %p100 = por %p98, %p99
    %p102 = scmp.ne.s32.totalorder %s87, %s101
    %p103 = scmp.eq.s32.totalorder %s16, 0
    %p104 = por %p102, %p103
    %s106 = sadd.s32 %s105, 1
    %p109 = scmp.eq.s32.totalorder %s10, 1
    %p110 = scmp.ne.s32.totalorder %s105, %s107
    %p111 = scmp.eq.s32.totalorder %s10, 0
    %p112 = por %p110, %p111
    %p113 = scmp.ne.s32.totalorder %s105, %s107
    %p114 = scmp.eq.s32.totalorder %s15, 1
    %p115 = por %p113, %p114
    %p116 = scmp.ne.s32.totalorder %s107, %s108
    %p117 = scmp.eq.s32.totalorder %s15, 0
    %p118 = por %p116, %p117
    %p119 = scmp.ne.s32.totalorder %s107, %s108
    %p120 = scmp.eq.s32.totalorder %s16, 1
    %p121 = por %p119, %p120
    %p123 = scmp.ne.s32.totalorder %s108, %s122
    %p124 = scmp.eq.s32.totalorder %s16, 0
    %p125 = por %p123, %p124
    %s126 = ssub.s32 %s17, %s29
    %p127 = scmp.eq.s32.totalorder %s126, 0
    %s129 = sadd.s32 %s128, 1
    %s130 = scalar_select %p127, %s128, %s129
    %p133 = pneg %p127
    %p134 = scmp.eq.s32.totalorder %s10, 1
    %p135 = por %p133, %p134
    %p136 = scmp.ne.s32.totalorder %s128, %s131
    %p137 = scmp.eq.s32.totalorder %s10, 0
    %p138 = por %p136, %p137
    %p139 = scmp.ne.s32.totalorder %s128, %s131
    %p140 = scmp.eq.s32.totalorder %s15, 1
    %p141 = por %p139, %p140
    %p142 = scmp.ne.s32.totalorder %s131, %s132
    %p143 = scmp.eq.s32.totalorder %s15, 0
    %p144 = por %p142, %p143
    %p145 = scmp.ne.s32.totalorder %s131, %s132
    %p146 = scmp.eq.s32.totalorder %s16, 1
    %p147 = por %p145, %p146
    %p149 = scmp.ne.s32.totalorder %s132, %s148
    %p150 = scmp.eq.s32.totalorder %s16, 0
    %p151 = por %p149, %p150
    %p152 = scmp.le.s32.totalorder 1, %s10
    %p153 = scmp.lt.s32.totalorder %s10, 3
    %p154 = pnand %p152, %p153
    %p155 = pneg %p154
    // Predicated region
    $region9: #{lraspp_forward.2} parent=5 // pred_check
      _
    $region10: #{lraspp_forward.2} parent=5 // pred_check_branch
      %157 = sbr.rel (%p154) target = $region12
    $region11: #{lraspp_forward.2} parent=5 // pred_region
      %s158 = ssub.s32 %s10, 1
      // Predicated region
      $region13: #{lraspp_forward.2} parent=11 // pred_check
        %p159 = pneg %p76
      $region14: #{lraspp_forward.2} parent=11 // pred_check_branch
        %161 = sbr.rel (%p159) target = $region16
      $region15: #{lraspp_forward.2} parent=11 // pred_region
        %s162 = smul.u32 144, %s20
        %p163 = scmp.lt.s32.totalorder %s162, 143
        %s164 = scalar_select %p163, %s162, 143
        %s165 = smul.addr %s164, 8
        %s166 = scalar_lea.vmem %s1, %s165
        %s167 = smul.u32 144, %s20
      $region16: #{lraspp_forward.2} parent=11 // pred_fallthru
        _
      // Predicated region
      $region17: #{lraspp_forward.2} parent=11 // pred_check
        %p168 = pneg %p97
      $region18: #{lraspp_forward.2} parent=11 // pred_check_branch
        %170 = sbr.rel (%p168) target = $region20
      $region19: #{lraspp_forward.2} parent=11 // pred_region
        _
      $region20: #{lraspp_forward.2} parent=11 // pred_fallthru
        _
      // Predicated region
      $region21: #{lraspp_forward.2} parent=11 // pred_check
        %p171 = pneg %p118
      $region22: #{lraspp_forward.2} parent=11 // pred_check_branch
        %173 = sbr.rel (%p171) target = $region24
      $region23: #{lraspp_forward.2} parent=11 // pred_region
        _
      $region24: #{lraspp_forward.2} parent=11 // pred_fallthru
        _
    $region12: #{lraspp_forward.2} parent=5 // pred_fallthru
      _
    %p174 = scmp.lt.s32.totalorder %s10, 2
    // Predicated region
    $region25: #{lraspp_forward.2} parent=5 // pred_check
      %p175 = pneg %p174
    $region26: #{lraspp_forward.2} parent=5 // pred_check_branch
      %177 = sbr.rel (%p175) target = $region28
    $region27: #{lraspp_forward.2} parent=5 // pred_region
      // Predicated region
      $region29: #{lraspp_forward.2} parent=27 // pred_check
        %p178 = pneg %p44
      $region30: #{lraspp_forward.2} parent=27 // pred_check_branch
        %180 = sbr.rel (%p178) target = $region32
      $region31: #{lraspp_forward.2} parent=27 // pred_region
        %s181 = smul.u32 9, %s18
        %p182 = scmp.lt.s32.totalorder %s17, 1
        %s183 = scalar_select %p182, %s17, 1
        %p184 = scmp.lt.s32.totalorder %s181, 8
        %s185 = scalar_select %p184, %s181, 8
        %s186 = smul.addr %s183, 18
        %s187 = sadd.s32 %s185, %s186
        %s188 = smul.addr %s187, 8
        %s189 = scalar_lea.vmem %s0, %s188
        %s190 = smul.u32 9, %s18
      $region32: #{lraspp_forward.2} parent=27 // pred_fallthru
        _
    $region28: #{lraspp_forward.2} parent=5 // pred_fallthru
      _
    %p191 = scmp.le.s32.totalorder 1, %s10
    %p192 = scmp.lt.s32.totalorder %s10, 3
    %p193 = pnand %p191, %p192
    %p194 = pneg %p193
    // Predicated region
    $region33: #{lraspp_forward.2} parent=5 // pred_check
      _
    $region34: #{lraspp_forward.2} parent=5 // pred_check_branch
      %196 = sbr.rel (%p193) target = $region36
    $region35: #{lraspp_forward.2} parent=5 // pred_region
      %s197 = ssub.s32 %s10, 1
      %s198 = smul.u32 9, %s20
      %p199 = scmp.lt.s32.totalorder %s19, 1
      %s200 = scalar_select %p199, %s19, 1
      %p201 = scmp.lt.s32.totalorder %s198, 8
      %s202 = scalar_select %p201, %s198, 8
      %s203 = smul.addr %s200, 18
      %s204 = sadd.s32 %s202, %s203
      %s205 = smul.addr %s204, 8
      %s206 = scalar_lea.vmem %s0, %s205
      %p207 = pneg %p50
      %p208 = pneg %p47
      %s209 = smul.u32 144, %s20
      %p210 = scmp.lt.s32.totalorder %s209, 143
      %s211 = scalar_select %p210, %s209, 143
      %s212 = smul.addr %s211, 8
      %s213 = scalar_lea.vmem %s1, %s212
      %p214 = pneg %p76
      %p215 = pneg %p73
      %p216 = pneg %p97
      %p217 = pneg %p94
      %p218 = pneg %p118
      %p219 = pneg %p115
      %p220 = pneg %p144
      %p221 = pneg %p141
      %p222 = scmp.lt.s32.totalorder %s19, 1
      %s223 = scalar_select %p222, %s19, 1
      %s224 = smul.addr %s223, 16
      %s225 = smul.addr %s224, 8
      %s226 = scalar_lea.vmem %s4, %s225
      %s227 = smul.u32 9, %s20
      %p228 = scmp.lt.s32.totalorder %s19, 1
      %s229 = scalar_select %p228, %s19, 1
      %p230 = scmp.lt.s32.totalorder %s227, 8
      %s231 = scalar_select %p230, %s227, 8
      %s232 = smul.addr %s229, 18
      %s233 = sadd.s32 %s231, %s232
      %s234 = smul.addr %s233, 8
      %s235 = scalar_lea.vmem %s0, %s234
      %s236 = smul.u32 9, %s20
      %s237 = smul.u32 144, %s20
      %p238 = scmp.lt.s32.totalorder %s237, 143
      %s239 = scalar_select %p238, %s237, 143
      %s240 = smul.addr %s239, 8
      %s241 = scalar_lea.vmem %s1, %s240
      %s242 = smul.u32 144, %s20
      %p243 = scmp.lt.s32.totalorder %s19, 1
      %s244 = scalar_select %p243, %s19, 1
      %s245 = smul.addr %s244, 16
      %s246 = smul.addr %s245, 8
      %s247 = scalar_lea.vmem %s4, %s246
      %p248 = scmp.eq.s32.totalorder %s20, 0
      // Predicated region
      $region37: #{lraspp_forward.2} parent=35 // pred_check
        %p249 = pneg %p248
      $region38: #{lraspp_forward.2} parent=35 // pred_check_branch
        %251 = sbr.rel (%p249) target = $region40
      $region39: #{lraspp_forward.2} parent=35 // pred_region
        %vm252 = vcmask 31744
        %253 = vst.msk [vmem:[#allocation2] sm:$0xff] %vm252, 0.0
        %254 = vst.msk [vmem:[#allocation2 + $0x8] sm:$0xff] %vm252, 0.0
      $region40: #{lraspp_forward.2} parent=35 // pred_fallthru
        _
      %p255 = scmp.lt.s32.totalorder %s20, 0
      // Predicated region
      $region41: #{lraspp_forward.2} parent=35 // pred_check
        %p256 = pneg %p255
      $region42: #{lraspp_forward.2} parent=35 // pred_check_branch
        %258 = sbr.rel (%p256) target = $region44
      $region43: #{lraspp_forward.2} parent=35 // pred_region
        %v259 = vld [vmem:[#allocation2] sm:$0xff]
        %v260 = vld [vmem:[#allocation2 + $0x8] sm:$0xff]
        %v261 = vld [vmem:[%s235] sm:$0xff]
        %v262 = vld [vmem:[%s235 + $0x8] sm:$0xff]
        %v263 = vld [vmem:[%s235 + $0x10] sm:$0xff]
        %v264 = vld [vmem:[%s235 + $0x18] sm:$0xff]
        %v265 = vld [vmem:[%s235 + $0x20] sm:$0xff]
        %v266 = vld [vmem:[%s235 + $0x28] sm:$0xff]
        %v267 = vld [vmem:[%s235 + $0x30] sm:$0xff]
        %v268 = vld [vmem:[%s235 + $0x38] sm:$0xff]
        %v269 = vld [vmem:[%s235 + $0x40] sm:$0xff]
        %v270 = vld [vmem:[%s235 + $0x48] sm:$0xff]
        %v271 = vld [vmem:[%s235 + $0x50] sm:$0xff]
        %v272 = vld [vmem:[%s235 + $0x58] sm:$0xff]
        %v273 = vld [vmem:[%s235 + $0x60] sm:$0xff]
        %v274 = vld [vmem:[%s235 + $0x68] sm:$0xff]
        %v275 = vld [vmem:[%s235 + $0x70] sm:$0xff]
        %v276 = vld [vmem:[%s235 + $0x78] sm:$0xff]
        %v277 = vld [vmem:[%s235 + $0x80] sm:$0xff]
        %v278 = vld [vmem:[%s235 + $0x88] sm:$0xff]
        %v279 = vld [vmem:[%s241] sm:$0xff]
        %v280 = vld [vmem:[%s241 + $0x8] sm:$0xff]
        %v281 = vld [vmem:[%s241 + $0x10] sm:$0xff]
        %v282 = vld [vmem:[%s241 + $0x18] sm:$0xff]
        %v283 = vld [vmem:[%s241 + $0x20] sm:$0xff]
        %v284 = vld [vmem:[%s241 + $0x28] sm:$0xff]
        %v285 = vld [vmem:[%s241 + $0x30] sm:$0xff]
        %v286 = vld [vmem:[%s241 + $0x38] sm:$0xff]
        %v287 = vld [vmem:[%s241 + $0x40] sm:$0xff]
        %v288 = vld [vmem:[%s241 + $0x48] sm:$0xff]
        %v289 = vld [vmem:[%s241 + $0x50] sm:$0xff]
        %v290 = vld [vmem:[%s241 + $0x58] sm:$0xff]
        %v291 = vld [vmem:[%s241 + $0x60] sm:$0xff]
        %v292 = vld [vmem:[%s241 + $0x68] sm:$0xff]
        %v293 = vld [vmem:[%s241 + $0x70] sm:$0xff]
        %v294 = vld [vmem:[%s241 + $0x78] sm:$0xff]
        %v295 = vld [vmem:[%s241 + $0x80] sm:$0xff]
        %v296 = vld [vmem:[%s241 + $0x88] sm:$0xff]
        %v297 = vld [vmem:[%s241 + $0x90] sm:$0xff]
        %v298 = vld [vmem:[%s241 + $0x98] sm:$0xff]
        %v299 = vld [vmem:[%s241 + $0xa0] sm:$0xff]
        %v300 = vld [vmem:[%s241 + $0xa8] sm:$0xff]
        %v301 = vld [vmem:[%s241 + $0xb0] sm:$0xff]
        %v302 = vld [vmem:[%s241 + $0xb8] sm:$0xff]
        %v303 = vld [vmem:[%s241 + $0xc0] sm:$0xff]
        %v304 = vld [vmem:[%s241 + $0xc8] sm:$0xff]
        %v305 = vld [vmem:[%s241 + $0xd0] sm:$0xff]
        %v306 = vld [vmem:[%s241 + $0xd8] sm:$0xff]
        %v307 = vld [vmem:[%s241 + $0xe0] sm:$0xff]
        %v308 = vld [vmem:[%s241 + $0xe8] sm:$0xff]
        %v309 = vld [vmem:[%s241 + $0xf0] sm:$0xff]
        %v310 = vld [vmem:[%s241 + $0xf8] sm:$0xff]
        %v311 = vld [vmem:[%s241 + $0x100] sm:$0xff]
        %v312 = vld [vmem:[%s241 + $0x108] sm:$0xff]
        %v313 = vld [vmem:[%s241 + $0x110] sm:$0xff]
        %v314 = vld [vmem:[%s241 + $0x118] sm:$0xff]
        %v315 = vld [vmem:[%s241 + $0x120] sm:$0xff]
        %v316 = vld [vmem:[%s241 + $0x128] sm:$0xff]
        %v317 = vld [vmem:[%s241 + $0x130] sm:$0xff]
        %v318 = vld [vmem:[%s241 + $0x138] sm:$0xff]
        %v319 = vld [vmem:[%s241 + $0x140] sm:$0xff]
        %v320 = vld [vmem:[%s241 + $0x148] sm:$0xff]
        %v321 = vld [vmem:[%s241 + $0x150] sm:$0xff]
        %v322 = vld [vmem:[%s241 + $0x158] sm:$0xff]
        %v323 = vld [vmem:[%s241 + $0x160] sm:$0xff]
        %v324 = vld [vmem:[%s241 + $0x168] sm:$0xff]
        %v325 = vld [vmem:[%s241 + $0x170] sm:$0xff]
        %v326 = vld [vmem:[%s241 + $0x178] sm:$0xff]
        %v327 = vld [vmem:[%s241 + $0x180] sm:$0xff]
        %v328 = vld [vmem:[%s241 + $0x188] sm:$0xff]
        %v329 = vld [vmem:[%s241 + $0x190] sm:$0xff]
        %v330 = vld [vmem:[%s241 + $0x198] sm:$0xff]
        %v331 = vld [vmem:[%s241 + $0x1a0] sm:$0xff]
        %v332 = vld [vmem:[%s241 + $0x1a8] sm:$0xff]
        %v333 = vld [vmem:[%s241 + $0x1b0] sm:$0xff]
        %v334 = vld [vmem:[%s241 + $0x1b8] sm:$0xff]
        %v335 = vld [vmem:[%s241 + $0x1c0] sm:$0xff]
        %v336 = vld [vmem:[%s241 + $0x1c8] sm:$0xff]
        %v337 = vld [vmem:[%s241 + $0x1d0] sm:$0xff]
        %v338 = vld [vmem:[%s241 + $0x1d8] sm:$0xff]
        %v339 = vld [vmem:[%s241 + $0x1e0] sm:$0xff]
        %v340 = vld [vmem:[%s241 + $0x1e8] sm:$0xff]
        %v341 = vld [vmem:[%s241 + $0x1f0] sm:$0xff]
        %v342 = vld [vmem:[%s241 + $0x1f8] sm:$0xff]
        %v343 = vld [vmem:[%s241 + $0x200] sm:$0xff]
        %v344 = vld [vmem:[%s241 + $0x208] sm:$0xff]
        %v345 = vld [vmem:[%s241 + $0x210] sm:$0xff]
        %v346 = vld [vmem:[%s241 + $0x218] sm:$0xff]
        %v347 = vld [vmem:[%s241 + $0x220] sm:$0xff]
        %v348 = vld [vmem:[%s241 + $0x228] sm:$0xff]
        %v349 = vld [vmem:[%s241 + $0x230] sm:$0xff]
        %v350 = vld [vmem:[%s241 + $0x238] sm:$0xff]
        %v351 = vld [vmem:[%s241 + $0x240] sm:$0xff]
        %v352 = vld [vmem:[%s241 + $0x248] sm:$0xff]
        %v353 = vld [vmem:[%s241 + $0x250] sm:$0xff]
        %v354 = vld [vmem:[%s241 + $0x258] sm:$0xff]
        %v355 = vld [vmem:[%s241 + $0x260] sm:$0xff]
        %v356 = vld [vmem:[%s241 + $0x268] sm:$0xff]
        %v357 = vld [vmem:[%s241 + $0x270] sm:$0xff]
        %v358 = vld [vmem:[%s241 + $0x278] sm:$0xff]
        %v359 = vld [vmem:[%s241 + $0x280] sm:$0xff]
        %v360 = vld [vmem:[%s241 + $0x288] sm:$0xff]
        %v361 = vld [vmem:[%s241 + $0x290] sm:$0xff]
        %v362 = vld [vmem:[%s241 + $0x298] sm:$0xff]
        %v363 = vld [vmem:[%s241 + $0x2a0] sm:$0xff]
        %v364 = vld [vmem:[%s241 + $0x2a8] sm:$0xff]
        %v365 = vld [vmem:[%s241 + $0x2b0] sm:$0xff]
        %v366 = vld [vmem:[%s241 + $0x2b8] sm:$0xff]
        %v367 = vld [vmem:[%s241 + $0x2c0] sm:$0xff]
        %v368 = vld [vmem:[%s241 + $0x2c8] sm:$0xff]
        %v369 = vld [vmem:[%s241 + $0x2d0] sm:$0xff]
        %v370 = vld [vmem:[%s241 + $0x2d8] sm:$0xff]
        %v371 = vld [vmem:[%s241 + $0x2e0] sm:$0xff]
        %v372 = vld [vmem:[%s241 + $0x2e8] sm:$0xff]
        %v373 = vld [vmem:[%s241 + $0x2f0] sm:$0xff]
        %v374 = vld [vmem:[%s241 + $0x2f8] sm:$0xff]
        %v375 = vld [vmem:[%s241 + $0x300] sm:$0xff]
        %v376 = vld [vmem:[%s241 + $0x308] sm:$0xff]
        %v377 = vld [vmem:[%s241 + $0x310] sm:$0xff]
        %v378 = vld [vmem:[%s241 + $0x318] sm:$0xff]
        %v379 = vld [vmem:[%s241 + $0x320] sm:$0xff]
        %v380 = vld [vmem:[%s241 + $0x328] sm:$0xff]
        %v381 = vld [vmem:[%s241 + $0x330] sm:$0xff]
        %v382 = vld [vmem:[%s241 + $0x338] sm:$0xff]
        %v383 = vld [vmem:[%s241 + $0x340] sm:$0xff]
        %v384 = vld [vmem:[%s241 + $0x348] sm:$0xff]
        %v385 = vld [vmem:[%s241 + $0x350] sm:$0xff]
        %v386 = vld [vmem:[%s241 + $0x358] sm:$0xff]
        %v387 = vld [vmem:[%s241 + $0x360] sm:$0xff]
        %v388 = vld [vmem:[%s241 + $0x368] sm:$0xff]
        %v389 = vld [vmem:[%s241 + $0x370] sm:$0xff]
        %v390 = vld [vmem:[%s241 + $0x378] sm:$0xff]
        %v391 = vld [vmem:[%s241 + $0x380] sm:$0xff]
        %v392 = vld [vmem:[%s241 + $0x388] sm:$0xff]
        %v393 = vld [vmem:[%s241 + $0x390] sm:$0xff]
        %v394 = vld [vmem:[%s241 + $0x398] sm:$0xff]
        %v395 = vld [vmem:[%s241 + $0x3a0] sm:$0xff]
        %v396 = vld [vmem:[%s241 + $0x3a8] sm:$0xff]
        %v397 = vld [vmem:[%s241 + $0x3b0] sm:$0xff]
        %v398 = vld [vmem:[%s241 + $0x3b8] sm:$0xff]
        %v399 = vld [vmem:[%s241 + $0x3c0] sm:$0xff]
        %v400 = vld [vmem:[%s241 + $0x3c8] sm:$0xff]
        %v401 = vld [vmem:[%s241 + $0x3d0] sm:$0xff]
        %v402 = vld [vmem:[%s241 + $0x3d8] sm:$0xff]
        %v403 = vld [vmem:[%s241 + $0x3e0] sm:$0xff]
        %v404 = vld [vmem:[%s241 + $0x3e8] sm:$0xff]
        %v405 = vld [vmem:[%s241 + $0x3f0] sm:$0xff]
        %v406 = vld [vmem:[%s241 + $0x3f8] sm:$0xff]
        %v407 = vld [vmem:[%s241 + $0x400] sm:$0xff]
        %v408 = vld [vmem:[%s241 + $0x408] sm:$0xff]
        %v409 = vld [vmem:[%s241 + $0x410] sm:$0xff]
        %v410 = vld [vmem:[%s241 + $0x418] sm:$0xff]
        %v411 = vld [vmem:[%s241 + $0x420] sm:$0xff]
        %v412 = vld [vmem:[%s241 + $0x428] sm:$0xff]
        %v413 = vld [vmem:[%s241 + $0x430] sm:$0xff]
        %v414 = vld [vmem:[%s241 + $0x438] sm:$0xff]
        %v415 = vld [vmem:[%s241 + $0x440] sm:$0xff]
        %v416 = vld [vmem:[%s241 + $0x448] sm:$0xff]
        %v417 = vld [vmem:[%s241 + $0x450] sm:$0xff]
        %v418 = vld [vmem:[%s241 + $0x458] sm:$0xff]
        %v419 = vld [vmem:[%s241 + $0x460] sm:$0xff]
        %v420 = vld [vmem:[%s241 + $0x468] sm:$0xff]
        %v421 = vld [vmem:[%s241 + $0x470] sm:$0xff]
        %v422 = vld [vmem:[%s241 + $0x478] sm:$0xff]
        %423 = vmatprep.subr.mxu0 0.0
        %424 = vmatpush1.msra.mxu0 %v279
        %425 = vmatprep.subr.mxu0 0.0
        %426 = vmatpush1.msra.mxu0 %v280
        %427 = vmatprep.subr.mxu0 0.0
        %428 = vmatpush1.msra.mxu0 %v281
        %429 = vmatprep.subr.mxu0 0.0
        %430 = vmatpush1.msra.mxu0 %v282
        %431 = vmatprep.subr.mxu0 0.0
        %432 = vmatpush1.msra.mxu0 %v283
        %433 = vmatprep.subr.mxu0 0.0
        %434 = vmatpush1.msra.mxu0 %v284
        %435 = vmatprep.subr.mxu0 0.0
        %436 = vmatpush1.msra.mxu0 %v285
        %437 = vmatprep.subr.mxu0 0.0
        %438 = vmatpush1.msra.mxu0 %v286
        %439 = vmatprep.subr.mxu0 0.0
        %440 = vmatpush1.msra.mxu0 %v287
        %441 = vmatprep.subr.mxu0 0.0
        %442 = vmatpush1.msra.mxu0 %v288
        %443 = vmatprep.subr.mxu0 0.0
        %444 = vmatpush1.msra.mxu0 %v289
        %445 = vmatprep.subr.mxu0 0.0
        %446 = vmatpush1.msra.mxu0 %v290
        %447 = vmatprep.subr.mxu0 0.0
        %448 = vmatpush1.msra.mxu0 %v291
        %449 = vmatprep.subr.mxu0 0.0
        %450 = vmatpush1.msra.mxu0 %v292
        %451 = vmatprep.subr.mxu0 0.0
        %452 = vmatpush1.msra.mxu0 %v293
        %453 = vmatprep.subr.mxu0 0.0
        %454 = vmatpush1.msra.mxu0 %v294
        %455 = vmatprep.subr.mxu0 0.0
        %456 = vmatpush1.msra.mxu0 %v295
        %457 = vmatprep.subr.mxu0 0.0
        %458 = vmatpush1.msra.mxu0 %v296
        %459 = vmatprep.subr.mxu0 0.0
        %460 = vmatpush1.msra.mxu0 %v297
        %461 = vmatprep.subr.mxu0 0.0
        %462 = vmatpush1.msra.mxu0 %v298
        %463 = vmatprep.subr.mxu0 0.0
        %464 = vmatpush1.msra.mxu0 %v299
        %465 = vmatprep.subr.mxu0 0.0
        %466 = vmatpush1.msra.mxu0 %v300
        %467 = vmatprep.subr.mxu0 0.0
        %468 = vmatpush1.msra.mxu0 %v301
        %469 = vmatprep.subr.mxu0 0.0
        %470 = vmatpush1.msra.mxu0 %v302
        %471 = vmatprep.subr.mxu0 0.0
        %472 = vmatpush1.msra.mxu0 %v303
        %473 = vmatprep.subr.mxu0 0.0
        %474 = vmatpush1.msra.mxu0 %v304
        %475 = vmatprep.subr.mxu0 0.0
        %476 = vmatpush1.msra.mxu0 %v305
        %477 = vmatprep.subr.mxu0 0.0
        %478 = vmatpush1.msra.mxu0 %v306
        %479 = vmatprep.subr.mxu0 0.0
        %480 = vmatpush1.msra.mxu0 %v307
        %481 = vmatprep.subr.mxu0 0.0
        %482 = vmatpush1.msra.mxu0 %v308
        %483 = vmatprep.subr.mxu0 0.0
        %484 = vmatpush1.msra.mxu0 %v309
        %485 = vmatprep.subr.mxu0 0.0
        %486 = vmatpush1.msra.mxu0 %v310
        %487 = vmatprep.mubr.f32.mxu0 %v262
        %488 = vmatmul.mubr.f32.gmra.mrb[0].mxu0 %v261
        %v489 = vpop.f32.mrb[0].mxu0
        %v490 = vadd.f32 0.0, %v489
        %v491 = vpop.f32.mrb[0].mxu0
        %492 = vmatprep.mubr.f32.mxu0 %v271
        %493 = vmatmul.mubr.f32.gmra.mrb[0].mxu0 %v270
        %v494 = vpop.f32.mrb[0].mxu0
        %v495 = vadd.f32 0.0, %v494
        %v496 = vpop.f32.mrb[0].mxu0
        %497 = vdwg.mxu0
        %498 = vmatprep.subr.mxu0 0.0
        %499 = vmatpush1.msra.mxu0 %v311
        %500 = vmatprep.subr.mxu0 0.0
        %501 = vmatpush1.msra.mxu0 %v312
        %502 = vmatprep.subr.mxu0 0.0
        %503 = vmatpush1.msra.mxu0 %v313
        %504 = vmatprep.subr.mxu0 0.0
        %505 = vmatpush1.msra.mxu0 %v314
        %506 = vmatprep.subr.mxu0 0.0
        %507 = vmatpush1.msra.mxu0 %v315
        %508 = vmatprep.subr.mxu0 0.0
        %509 = vmatpush1.msra.mxu0 %v316
        %510 = vmatprep.subr.mxu0 0.0
        %511 = vmatpush1.msra.mxu0 %v317
        %512 = vmatprep.subr.mxu0 0.0
        %513 = vmatpush1.msra.mxu0 %v318
        %514 = vmatprep.subr.mxu0 0.0
        %515 = vmatpush1.msra.mxu0 %v319
        %516 = vmatprep.subr.mxu0 0.0
        %517 = vmatpush1.msra.mxu0 %v320
        %518 = vmatprep.subr.mxu0 0.0
        %519 = vmatpush1.msra.mxu0 %v321
        %520 = vmatprep.subr.mxu0 0.0
        %521 = vmatpush1.msra.mxu0 %v322
        %522 = vmatprep.subr.mxu0 0.0
        %523 = vmatpush1.msra.mxu0 %v323
        %524 = vmatprep.subr.mxu0 0.0
        %525 = vmatpush1.msra.mxu0 %v324
        %526 = vmatprep.subr.mxu0 0.0
        %527 = vmatpush1.msra.mxu0 %v325
        %528 = vmatprep.subr.mxu0 0.0
        %529 = vmatpush1.msra.mxu0 %v326
        %530 = vmatprep.subr.mxu0 0.0
        %531 = vmatpush1.msra.mxu0 %v327
        %532 = vmatprep.subr.mxu0 0.0
        %533 = vmatpush1.msra.mxu0 %v328
        %534 = vmatprep.subr.mxu0 0.0
        %535 = vmatpush1.msra.mxu0 %v329
        %536 = vmatprep.subr.mxu0 0.0
        %537 = vmatpush1.msra.mxu0 %v330
        %538 = vmatprep.subr.mxu0 0.0
        %539 = vmatpush1.msra.mxu0 %v331
        %540 = vmatprep.subr.mxu0 0.0
        %541 = vmatpush1.msra.mxu0 %v332
        %542 = vmatprep.subr.mxu0 0.0
        %543 = vmatpush1.msra.mxu0 %v333
        %544 = vmatprep.subr.mxu0 0.0
        %545 = vmatpush1.msra.mxu0 %v334
        %546 = vmatprep.subr.mxu0 0.0
        %547 = vmatpush1.msra.mxu0 %v335
        %548 = vmatprep.subr.mxu0 0.0
        %549 = vmatpush1.msra.mxu0 %v336
        %550 = vmatprep.subr.mxu0 0.0
        %551 = vmatpush1.msra.mxu0 %v337
        %552 = vmatprep.subr.mxu0 0.0
        %553 = vmatpush1.msra.mxu0 %v338
        %554 = vmatprep.subr.mxu0 0.0
        %555 = vmatpush1.msra.mxu0 %v339
        %556 = vmatprep.subr.mxu0 0.0
        %557 = vmatpush1.msra.mxu0 %v340
        %558 = vmatprep.subr.mxu0 0.0
        %559 = vmatpush1.msra.mxu0 %v341
        %560 = vmatprep.subr.mxu0 0.0
        %561 = vmatpush1.msra.mxu0 %v342
        %562 = vmatprep.mubr.f32.mxu0 %v264
        %563 = vmatmul.mubr.f32.gmra.mrb[0].mxu0 %v263
        %v564 = vpop.f32.mrb[0].mxu0
        %v565 = vadd.f32 %v490, %v564
        %v566 = vpop.f32.mrb[0].mxu0
        %567 = vmatprep.mubr.f32.mxu0 %v273
        %568 = vmatmul.mubr.f32.gmra.mrb[0].mxu0 %v272
        %v569 = vpop.f32.mrb[0].mxu0
        %v570 = vadd.f32 %v495, %v569
        %v571 = vpop.f32.mrb[0].mxu0
        %572 = vdwg.mxu0
        %573 = vmatprep.subr.mxu0 0.0
        %574 = vmatpush1.msra.mxu0 %v343
        %575 = vmatprep.subr.mxu0 0.0
        %576 = vmatpush1.msra.mxu0 %v344
        %577 = vmatprep.subr.mxu0 0.0
        %578 = vmatpush1.msra.mxu0 %v345
        %579 = vmatprep.subr.mxu0 0.0
        %580 = vmatpush1.msra.mxu0 %v346
        %581 = vmatprep.subr.mxu0 0.0
        %582 = vmatpush1.msra.mxu0 %v347
        %583 = vmatprep.subr.mxu0 0.0
        %584 = vmatpush1.msra.mxu0 %v348
        %585 = vmatprep.subr.mxu0 0.0
        %586 = vmatpush1.msra.mxu0 %v349
        %587 = vmatprep.subr.mxu0 0.0
        %588 = vmatpush1.msra.mxu0 %v350
        %589 = vmatprep.subr.mxu0 0.0
        %590 = vmatpush1.msra.mxu0 %v351
        %591 = vmatprep.subr.mxu0 0.0
        %592 = vmatpush1.msra.mxu0 %v352
        %593 = vmatprep.subr.mxu0 0.0
        %594 = vmatpush1.msra.mxu0 %v353
        %595 = vmatprep.subr.mxu0 0.0
        %596 = vmatpush1.msra.mxu0 %v354
        %597 = vmatprep.subr.mxu0 0.0
        %598 = vmatpush1.msra.mxu0 %v355
        %599 = vmatprep.subr.mxu0 0.0
        %600 = vmatpush1.msra.mxu0 %v356
        %601 = vmatprep.subr.mxu0 0.0
        %602 = vmatpush1.msra.mxu0 %v357
        %603 = vmatprep.subr.mxu0 0.0
        %604 = vmatpush1.msra.mxu0 %v358
        %605 = vmatprep.subr.mxu0 0.0
        %606 = vmatpush1.msra.mxu0 %v359
        %607 = vmatprep.subr.mxu0 0.0
        %608 = vmatpush1.msra.mxu0 %v360
        %609 = vmatprep.subr.mxu0 0.0
        %610 = vmatpush1.msra.mxu0 %v361
        %611 = vmatprep.subr.mxu0 0.0
        %612 = vmatpush1.msra.mxu0 %v362
        %613 = vmatprep.subr.mxu0 0.0
        %614 = vmatpush1.msra.mxu0 %v363
        %615 = vmatprep.subr.mxu0 0.0
        %616 = vmatpush1.msra.mxu0 %v364
        %617 = vmatprep.subr.mxu0 0.0
        %618 = vmatpush1.msra.mxu0 %v365
        %619 = vmatprep.subr.mxu0 0.0
        %620 = vmatpush1.msra.mxu0 %v366
        %621 = vmatprep.subr.mxu0 0.0
        %622 = vmatpush1.msra.mxu0 %v367
        %623 = vmatprep.subr.mxu0 0.0
        %624 = vmatpush1.msra.mxu0 %v368
        %625 = vmatprep.subr.mxu0 0.0
        %626 = vmatpush1.msra.mxu0 %v369
        %627 = vmatprep.subr.mxu0 0.0
        %628 = vmatpush1.msra.mxu0 %v370
        %629 = vmatprep.subr.mxu0 0.0
        %630 = vmatpush1.msra.mxu0 %v371
        %631 = vmatprep.subr.mxu0 0.0
        %632 = vmatpush1.msra.mxu0 %v372
        %633 = vmatprep.subr.mxu0 0.0
        %634 = vmatpush1.msra.mxu0 %v373
        %635 = vmatprep.subr.mxu0 0.0
        %636 = vmatpush1.msra.mxu0 %v374
        %637 = vmatprep.mubr.f32.mxu0 %v266
        %638 = vmatmul.mubr.f32.gmra.mrb[0].mxu0 %v265
        %v639 = vpop.f32.mrb[0].mxu0
        %v640 = vadd.f32 %v565, %v639
        %v641 = vpop.f32.mrb[0].mxu0
        %642 = vmatprep.mubr.f32.mxu0 %v275
        %643 = vmatmul.mubr.f32.gmra.mrb[0].mxu0 %v274
        %v644 = vpop.f32.mrb[0].mxu0
        %v645 = vadd.f32 %v570, %v644
        %v646 = vpop.f32.mrb[0].mxu0
        %647 = vdwg.mxu0
        %648 = vmatprep.subr.mxu0 0.0
        %649 = vmatpush1.msra.mxu0 %v375
        %650 = vmatprep.subr.mxu0 0.0
        %651 = vmatpush1.msra.mxu0 %v376
        %652 = vmatprep.subr.mxu0 0.0
        %653 = vmatpush1.msra.mxu0 %v377
        %654 = vmatprep.subr.mxu0 0.0
        %655 = vmatpush1.msra.mxu0 %v378
        %656 = vmatprep.subr.mxu0 0.0
        %657 = vmatpush1.msra.mxu0 %v379
        %658 = vmatprep.subr.mxu0 0.0
        %659 = vmatpush1.msra.mxu0 %v380
        %660 = vmatprep.subr.mxu0 0.0
        %661 = vmatpush1.msra.mxu0 %v381
        %662 = vmatprep.subr.mxu0 0.0
        %663 = vmatpush1.msra.mxu0 %v382
        %664 = vmatprep.subr.mxu0 0.0
        %665 = vmatpush1.msra.mxu0 %v383
        %666 = vmatprep.subr.mxu0 0.0
        %667 = vmatpush1.msra.mxu0 %v384
        %668 = vmatprep.subr.mxu0 0.0
        %669 = vmatpush1.msra.mxu0 %v385
        %670 = vmatprep.subr.mxu0 0.0
        %671 = vmatpush1.msra.mxu0 %v386
        %672 = vmatprep.subr.mxu0 0.0
        %673 = vmatpush1.msra.mxu0 %v387
        %674 = vmatprep.subr.mxu0 0.0
        %675 = vmatpush1.msra.mxu0 %v388
        %676 = vmatprep.subr.mxu0 0.0
        %677 = vmatpush1.msra.mxu0 %v389
        %678 = vmatprep.subr.mxu0 0.0
        %679 = vmatpush1.msra.mxu0 %v390
        %680 = vmatprep.subr.mxu0 0.0
        %681 = vmatpush1.msra.mxu0 %v391
        %682 = vmatprep.subr.mxu0 0.0
        %683 = vmatpush1.msra.mxu0 %v392
        %684 = vmatprep.subr.mxu0 0.0
        %685 = vmatpush1.msra.mxu0 %v393
        %686 = vmatprep.subr.mxu0 0.0
        %687 = vmatpush1.msra.mxu0 %v394
        %688 = vmatprep.subr.mxu0 0.0
        %689 = vmatpush1.msra.mxu0 %v395
        %690 = vmatprep.subr.mxu0 0.0
        %691 = vmatpush1.msra.mxu0 %v396
        %692 = vmatprep.subr.mxu0 0.0
        %693 = vmatpush1.msra.mxu0 %v397
        %694 = vmatprep.subr.mxu0 0.0
        %695 = vmatpush1.msra.mxu0 %v398
        %696 = vmatprep.subr.mxu0 0.0
        %697 = vmatpush1.msra.mxu0 %v399
        %698 = vmatprep.subr.mxu0 0.0
        %699 = vmatpush1.msra.mxu0 %v400
        %700 = vmatprep.subr.mxu0 0.0
        %701 = vmatpush1.msra.mxu0 %v401
        %702 = vmatprep.subr.mxu0 0.0
        %703 = vmatpush1.msra.mxu0 %v402
        %704 = vmatprep.subr.mxu0 0.0
        %705 = vmatpush1.msra.mxu0 %v403
        %706 = vmatprep.subr.mxu0 0.0
        %707 = vmatpush1.msra.mxu0 %v404
        %708 = vmatprep.subr.mxu0 0.0
        %709 = vmatpush1.msra.mxu0 %v405
        %710 = vmatprep.subr.mxu0 0.0
        %711 = vmatpush1.msra.mxu0 %v406
        %712 = vmatprep.mubr.f32.mxu0 %v268
        %713 = vmatmul.mubr.f32.gmra.mrb[0].mxu0 %v267
        %v714 = vpop.f32.mrb[0].mxu0
        %v715 = vadd.f32 %v640, %v714
        %v716 = vpop.f32.mrb[0].mxu0
        %717 = vmatprep.mubr.f32.mxu0 %v277
        %718 = vmatmul.mubr.f32.gmra.mrb[0].mxu0 %v276
        %v719 = vpop.f32.mrb[0].mxu0
        %v720 = vadd.f32 %v645, %v719
        %v721 = vpop.f32.mrb[0].mxu0
        %722 = vdwg.mxu0
        %723 = vmatprep.subr.mxu0 0.0
        %724 = vmatpush1.msra.mxu0 %v407
        %725 = vmatprep.subr.mxu0 0.0
        %726 = vmatpush1.msra.mxu0 %v408
        %727 = vmatprep.subr.mxu0 0.0
        %728 = vmatpush1.msra.mxu0 %v409
        %729 = vmatprep.subr.mxu0 0.0
        %730 = vmatpush1.msra.mxu0 %v410
        %731 = vmatprep.subr.mxu0 0.0
        %732 = vmatpush1.msra.mxu0 %v411
        %733 = vmatprep.subr.mxu0 0.0
        %734 = vmatpush1.msra.mxu0 %v412
        %735 = vmatprep.subr.mxu0 0.0
        %736 = vmatpush1.msra.mxu0 %v413
        %737 = vmatprep.subr.mxu0 0.0
        %738 = vmatpush1.msra.mxu0 %v414
        %739 = vmatprep.subr.mxu0 0.0
        %740 = vmatpush1.msra.mxu0 %v415
        %741 = vmatprep.subr.mxu0 0.0
        %742 = vmatpush1.msra.mxu0 %v416
        %743 = vmatprep.subr.mxu0 0.0
        %744 = vmatpush1.msra.mxu0 %v417
        %745 = vmatprep.subr.mxu0 0.0
        %746 = vmatpush1.msra.mxu0 %v418
        %747 = vmatprep.subr.mxu0 0.0
        %748 = vmatpush1.msra.mxu0 %v419
        %749 = vmatprep.subr.mxu0 0.0
        %750 = vmatpush1.msra.mxu0 %v420
        %751 = vmatprep.subr.mxu0 0.0
        %752 = vmatpush1.msra.mxu0 %v421
        %753 = vmatprep.subr.mxu0 0.0
        %754 = vmatpush1.msra.mxu0 %v422
        %755 = vmatprep.subr.mxu0 0.0
        %756 = vmatpush1.msra.mxu0 0.0
        %757 = vmatprep.subr.mxu0 0.0
        %758 = vmatpush1.msra.mxu0 0.0
        %759 = vmatprep.subr.mxu0 0.0
        %760 = vmatpush1.msra.mxu0 0.0
        %761 = vmatprep.subr.mxu0 0.0
        %762 = vmatpush1.msra.mxu0 0.0
        %763 = vmatprep.subr.mxu0 0.0
        %764 = vmatpush1.msra.mxu0 0.0
        %765 = vmatprep.subr.mxu0 0.0
        %766 = vmatpush1.msra.mxu0 0.0
        %767 = vmatprep.subr.mxu0 0.0
        %768 = vmatpush1.msra.mxu0 0.0
        %769 = vmatprep.subr.mxu0 0.0
        %770 = vmatpush1.msra.mxu0 0.0
        %771 = vmatprep.subr.mxu0 0.0
        %772 = vmatpush1.msra.mxu0 0.0
        %773 = vmatprep.subr.mxu0 0.0
        %774 = vmatpush1.msra.mxu0 0.0
        %775 = vmatprep.subr.mxu0 0.0
        %776 = vmatpush1.msra.mxu0 0.0
        %777 = vmatprep.subr.mxu0 0.0
        %778 = vmatpush1.msra.mxu0 0.0
        %779 = vmatprep.subr.mxu0 0.0
        %780 = vmatpush1.msra.mxu0 0.0
        %781 = vmatprep.subr.mxu0 0.0
        %782 = vmatpush1.msra.mxu0 0.0
        %783 = vmatprep.subr.mxu0 0.0
        %784 = vmatpush1.msra.mxu0 0.0
        %785 = vmatprep.subr.mxu0 0.0
        %786 = vmatpush1.msra.mxu0 0.0
        %787 = vmatprep.mubr.f32.mxu0 0.0
        %788 = vmatmul.mubr.f32.gmra.mrb[0].mxu0 %v269
        %v789 = vpop.f32.mrb[0].mxu0
        %v790 = vadd.f32 %v715, %v789
        %v791 = vpop.f32.mrb[0].mxu0
        %792 = vmatprep.mubr.f32.mxu0 0.0
        %793 = vmatmul.mubr.f32.gmra.mrb[0].mxu0 %v278
        %v794 = vpop.f32.mrb[0].mxu0
        %v795 = vadd.f32 %v720, %v794
        %v796 = vpop.f32.mrb[0].mxu0
        %797 = vdwg.mxu0
        %v798 = vadd.f32 %v259, %v790
        %v799 = vadd.f32 %v260, %v795
        %vm800 = vcmask 31744
        %801 = vst.msk [vmem:[#allocation2] sm:$0xff] %vm800, %v798
        %802 = vst.msk [vmem:[#allocation2 + $0x8] sm:$0xff] %vm800, %v799
      $region44: #{lraspp_forward.2} parent=35 // pred_fallthru
        _
      // Predicated region
      $region45: #{lraspp_forward.2} parent=35 // pred_check
        %p803 = pneg %p248
      $region46: #{lraspp_forward.2} parent=35 // pred_check_branch
        %805 = sbr.rel (%p803) target = $region48
      $region47: #{lraspp_forward.2} parent=35 // pred_region
        %v806 = vld [vmem:[%s235] sm:$0xff]
        %v807 = vld [vmem:[%s235 + $0x8] sm:$0xff]
        %v808 = vld [vmem:[%s235 + $0x10] sm:$0xff]
        %v809 = vld [vmem:[%s235 + $0x18] sm:$0xff]
        %v810 = vld [vmem:[%s235 + $0x20] sm:$0xff]
        %v811 = vld [vmem:[%s235 + $0x28] sm:$0xff]
        %v812 = vld [vmem:[%s235 + $0x30] sm:$0xff]
        %v813 = vld [vmem:[%s235 + $0x38] sm:$0xff]
        %v814 = vld [vmem:[%s235 + $0x40] sm:$0xff]
        %v815 = vld [vmem:[%s235 + $0x48] sm:$0xff]
        %v816 = vld [vmem:[%s235 + $0x50] sm:$0xff]
        %v817 = vld [vmem:[%s235 + $0x58] sm:$0xff]
        %v818 = vld [vmem:[%s235 + $0x60] sm:$0xff]
        %v819 = vld [vmem:[%s235 + $0x68] sm:$0xff]
        %v820 = vld [vmem:[%s235 + $0x70] sm:$0xff]
        %v821 = vld [vmem:[%s235 + $0x78] sm:$0xff]
        %v822 = vld [vmem:[%s235 + $0x80] sm:$0xff]
        %v823 = vld [vmem:[%s235 + $0x88] sm:$0xff]
        %v824 = vlaneseq
        %v825 = vand.u32 %v824, 127
        %v826 = vadd.s32 %v825, 128
        %v827 = vadd.s32 %v825, 256
        %v828 = vadd.s32 %v825, 384
        %v829 = vadd.s32 %v825, 512
        %v830 = vadd.s32 %v825, 640
        %v831 = vadd.s32 %v825, 768
        %v832 = vadd.s32 %v825, 896
        %v833 = vadd.s32 %v825, 1024
        %s834 = smul.u32 %s20, 1152
        %v835 = vstv %s834
        %v836 = vadd.s32 %v825, %v835
        %v837 = vadd.s32 %v826, %v835
        %v838 = vadd.s32 %v827, %v835
        %v839 = vadd.s32 %v828, %v835
        %v840 = vadd.s32 %v829, %v835
        %v841 = vadd.s32 %v830, %v835
        %v842 = vadd.s32 %v831, %v835
        %v843 = vadd.s32 %v832, %v835
        %v844 = vadd.s32 %v833, %v835
        %vm845 = vcmp.lt.s32.totalorder %v836, 1089
        %vm846 = vcmp.lt.s32.totalorder %v837, 1089
        %vm847 = vcmp.lt.s32.totalorder %v838, 1089
        %vm848 = vcmp.lt.s32.totalorder %v839, 1089
        %vm849 = vcmp.lt.s32.totalorder %v840, 1089
        %vm850 = vcmp.lt.s32.totalorder %v841, 1089
        %vm851 = vcmp.lt.s32.totalorder %v842, 1089
        %vm852 = vcmp.lt.s32.totalorder %v843, 1089
        %vm853 = vcmp.lt.s32.totalorder %v844, 1089
        %v854 = vsel %vm845, 1, 0
        %v855 = vsel %vm846, 1, 0
        %v856 = vsel %vm847, 1, 0
        %v857 = vsel %vm848, 1, 0
        %v858 = vsel %vm849, 1, 0
        %v859 = vsel %vm850, 1, 0
        %v860 = vsel %vm851, 1, 0
        %v861 = vsel %vm852, 1, 0
        %v862 = vsel %vm853, 1, 0
        %vm863 = vcmp.eq.s32.totalorder %v854, 1
        %vm864 = vcmp.eq.s32.totalorder %v855, 1
        %vm865 = vcmp.eq.s32.totalorder %v856, 1
        %vm866 = vcmp.eq.s32.totalorder %v857, 1
        %vm867 = vcmp.eq.s32.totalorder %v858, 1
        %vm868 = vcmp.eq.s32.totalorder %v859, 1
        %vm869 = vcmp.eq.s32.totalorder %v860, 1
        %vm870 = vcmp.eq.s32.totalorder %v861, 1
        %vm871 = vcmp.eq.s32.totalorder %v862, 1
        %v872 = vsel %vm863, %v806, 0.0
        %v873 = vsel %vm864, %v807, 0.0
        %v874 = vsel %vm865, %v808, 0.0
        %v875 = vsel %vm866, %v809, 0.0
        %v876 = vsel %vm867, %v810, 0.0
        %v877 = vsel %vm868, %v811, 0.0
        %v878 = vsel %vm869, %v812, 0.0
        %v879 = vsel %vm870, %v813, 0.0
        %v880 = vsel %vm871, %v814, 0.0
        %v881 = vsel %vm863, %v815, 0.0
        %v882 = vsel %vm864, %v816, 0.0
        %v883 = vsel %vm865, %v817, 0.0
        %v884 = vsel %vm866, %v818, 0.0
        %v885 = vsel %vm867, %v819, 0.0
        %v886 = vsel %vm868, %v820, 0.0
        %v887 = vsel %vm869, %v821, 0.0
        %v888 = vsel %vm870, %v822, 0.0
        %v889 = vsel %vm871, %v823, 0.0
        %v890 = vld [vmem:[#allocation2] sm:$0xff]
        %v891 = vld [vmem:[#allocation2 + $0x8] sm:$0xff]
        %v892 = vld [vmem:[%s241] sm:$0xff]
        %v893 = vld [vmem:[%s241 + $0x8] sm:$0xff]
        %v894 = vld [vmem:[%s241 + $0x10] sm:$0xff]
        %v895 = vld [vmem:[%s241 + $0x18] sm:$0xff]
        %v896 = vld [vmem:[%s241 + $0x20] sm:$0xff]
        %v897 = vld [vmem:[%s241 + $0x28] sm:$0xff]
        %v898 = vld [vmem:[%s241 + $0x30] sm:$0xff]
        %v899 = vld [vmem:[%s241 + $0x38] sm:$0xff]
        %v900 = vld [vmem:[%s241 + $0x40] sm:$0xff]
        %v901 = vld [vmem:[%s241 + $0x48] sm:$0xff]
        %v902 = vld [vmem:[%s241 + $0x50] sm:$0xff]
        %v903 = vld [vmem:[%s241 + $0x58] sm:$0xff]
        %v904 = vld [vmem:[%s241 + $0x60] sm:$0xff]
        %v905 = vld [vmem:[%s241 + $0x68] sm:$0xff]
        %v906 = vld [vmem:[%s241 + $0x70] sm:$0xff]
        %v907 = vld [vmem:[%s241 + $0x78] sm:$0xff]
        %v908 = vld [vmem:[%s241 + $0x80] sm:$0xff]
        %v909 = vld [vmem:[%s241 + $0x88] sm:$0xff]
        %v910 = vld [vmem:[%s241 + $0x90] sm:$0xff]
        %v911 = vld [vmem:[%s241 + $0x98] sm:$0xff]
        %v912 = vld [vmem:[%s241 + $0xa0] sm:$0xff]
        %v913 = vld [vmem:[%s241 + $0xa8] sm:$0xff]
        %v914 = vld [vmem:[%s241 + $0xb0] sm:$0xff]
        %v915 = vld [vmem:[%s241 + $0xb8] sm:$0xff]
        %v916 = vld [vmem:[%s241 + $0xc0] sm:$0xff]
        %v917 = vld [vmem:[%s241 + $0xc8] sm:$0xff]
        %v918 = vld [vmem:[%s241 + $0xd0] sm:$0xff]
        %v919 = vld [vmem:[%s241 + $0xd8] sm:$0xff]
        %v920 = vld [vmem:[%s241 + $0xe0] sm:$0xff]
        %v921 = vld [vmem:[%s241 + $0xe8] sm:$0xff]
        %v922 = vld [vmem:[%s241 + $0xf0] sm:$0xff]
        %v923 = vld [vmem:[%s241 + $0xf8] sm:$0xff]
        %v924 = vld [vmem:[%s241 + $0x100] sm:$0xff]
        %v925 = vld [vmem:[%s241 + $0x108] sm:$0xff]
        %v926 = vld [vmem:[%s241 + $0x110] sm:$0xff]
        %v927 = vld [vmem:[%s241 + $0x118] sm:$0xff]
        %v928 = vld [vmem:[%s241 + $0x120] sm:$0xff]
        %v929 = vld [vmem:[%s241 + $0x128] sm:$0xff]
        %v930 = vld [vmem:[%s241 + $0x130] sm:$0xff]
        %v931 = vld [vmem:[%s241 + $0x138] sm:$0xff]
        %v932 = vld [vmem:[%s241 + $0x140] sm:$0xff]
        %v933 = vld [vmem:[%s241 + $0x148] sm:$0xff]
        %v934 = vld [vmem:[%s241 + $0x150] sm:$0xff]
        %v935 = vld [vmem:[%s241 + $0x158] sm:$0xff]
        %v936 = vld [vmem:[%s241 + $0x160] sm:$0xff]
        %v937 = vld [vmem:[%s241 + $0x168] sm:$0xff]
        %v938 = vld [vmem:[%s241 + $0x170] sm:$0xff]
        %v939 = vld [vmem:[%s241 + $0x178] sm:$0xff]
        %v940 = vld [vmem:[%s241 + $0x180] sm:$0xff]
        %v941 = vld [vmem:[%s241 + $0x188] sm:$0xff]
        %v942 = vld [vmem:[%s241 + $0x190] sm:$0xff]
        %v943 = vld [vmem:[%s241 + $0x198] sm:$0xff]
        %v944 = vld [vmem:[%s241 + $0x1a0] sm:$0xff]
        %v945 = vld [vmem:[%s241 + $0x1a8] sm:$0xff]
        %v946 = vld [vmem:[%s241 + $0x1b0] sm:$0xff]
        %v947 = vld [vmem:[%s241 + $0x1b8] sm:$0xff]
        %v948 = vld [vmem:[%s241 + $0x1c0] sm:$0xff]
        %v949 = vld [vmem:[%s241 + $0x1c8] sm:$0xff]
        %v950 = vld [vmem:[%s241 + $0x1d0] sm:$0xff]
        %v951 = vld [vmem:[%s241 + $0x1d8] sm:$0xff]
        %v952 = vld [vmem:[%s241 + $0x1e0] sm:$0xff]
        %v953 = vld [vmem:[%s241 + $0x1e8] sm:$0xff]
        %v954 = vld [vmem:[%s241 + $0x1f0] sm:$0xff]
        %v955 = vld [vmem:[%s241 + $0x1f8] sm:$0xff]
        %v956 = vld [vmem:[%s241 + $0x200] sm:$0xff]
        %v957 = vld [vmem:[%s241 + $0x208] sm:$0xff]
        %v958 = vld [vmem:[%s241 + $0x210] sm:$0xff]
        %v959 = vld [vmem:[%s241 + $0x218] sm:$0xff]
        %v960 = vld [vmem:[%s241 + $0x220] sm:$0xff]
        %v961 = vld [vmem:[%s241 + $0x228] sm:$0xff]
        %v962 = vld [vmem:[%s241 + $0x230] sm:$0xff]
        %v963 = vld [vmem:[%s241 + $0x238] sm:$0xff]
        %v964 = vld [vmem:[%s241 + $0x240] sm:$0xff]
        %v965 = vld [vmem:[%s241 + $0x248] sm:$0xff]
        %v966 = vld [vmem:[%s241 + $0x250] sm:$0xff]
        %v967 = vld [vmem:[%s241 + $0x258] sm:$0xff]
        %v968 = vld [vmem:[%s241 + $0x260] sm:$0xff]
        %v969 = vld [vmem:[%s241 + $0x268] sm:$0xff]
        %v970 = vld [vmem:[%s241 + $0x270] sm:$0xff]
        %v971 = vld [vmem:[%s241 + $0x278] sm:$0xff]
        %v972 = vld [vmem:[%s241 + $0x280] sm:$0xff]
        %v973 = vld [vmem:[%s241 + $0x288] sm:$0xff]
        %v974 = vld [vmem:[%s241 + $0x290] sm:$0xff]
        %v975 = vld [vmem:[%s241 + $0x298] sm:$0xff]
        %v976 = vld [vmem:[%s241 + $0x2a0] sm:$0xff]
        %v977 = vld [vmem:[%s241 + $0x2a8] sm:$0xff]
        %v978 = vld [vmem:[%s241 + $0x2b0] sm:$0xff]
        %v979 = vld [vmem:[%s241 + $0x2b8] sm:$0xff]
        %v980 = vld [vmem:[%s241 + $0x2c0] sm:$0xff]
        %v981 = vld [vmem:[%s241 + $0x2c8] sm:$0xff]
        %v982 = vld [vmem:[%s241 + $0x2d0] sm:$0xff]
        %v983 = vld [vmem:[%s241 + $0x2d8] sm:$0xff]
        %v984 = vld [vmem:[%s241 + $0x2e0] sm:$0xff]
        %v985 = vld [vmem:[%s241 + $0x2e8] sm:$0xff]
        %v986 = vld [vmem:[%s241 + $0x2f0] sm:$0xff]
        %v987 = vld [vmem:[%s241 + $0x2f8] sm:$0xff]
        %v988 = vld [vmem:[%s241 + $0x300] sm:$0xff]
        %v989 = vld [vmem:[%s241 + $0x308] sm:$0xff]
        %v990 = vld [vmem:[%s241 + $0x310] sm:$0xff]
        %v991 = vld [vmem:[%s241 + $0x318] sm:$0xff]
        %v992 = vld [vmem:[%s241 + $0x320] sm:$0xff]
        %v993 = vld [vmem:[%s241 + $0x328] sm:$0xff]
        %v994 = vld [vmem:[%s241 + $0x330] sm:$0xff]
        %v995 = vld [vmem:[%s241 + $0x338] sm:$0xff]
        %v996 = vld [vmem:[%s241 + $0x340] sm:$0xff]
        %v997 = vld [vmem:[%s241 + $0x348] sm:$0xff]
        %v998 = vld [vmem:[%s241 + $0x350] sm:$0xff]
        %v999 = vld [vmem:[%s241 + $0x358] sm:$0xff]
        %v1000 = vld [vmem:[%s241 + $0x360] sm:$0xff]
        %v1001 = vld [vmem:[%s241 + $0x368] sm:$0xff]
        %v1002 = vld [vmem:[%s241 + $0x370] sm:$0xff]
        %v1003 = vld [vmem:[%s241 + $0x378] sm:$0xff]
        %v1004 = vld [vmem:[%s241 + $0x380] sm:$0xff]
        %v1005 = vld [vmem:[%s241 + $0x388] sm:$0xff]
        %v1006 = vld [vmem:[%s241 + $0x390] sm:$0xff]
        %v1007 = vld [vmem:[%s241 + $0x398] sm:$0xff]
        %v1008 = vld [vmem:[%s241 + $0x3a0] sm:$0xff]
        %v1009 = vld [vmem:[%s241 + $0x3a8] sm:$0xff]
        %v1010 = vld [vmem:[%s241 + $0x3b0] sm:$0xff]
        %v1011 = vld [vmem:[%s241 + $0x3b8] sm:$0xff]
        %v1012 = vld [vmem:[%s241 + $0x3c0] sm:$0xff]
        %v1013 = vld [vmem:[%s241 + $0x3c8] sm:$0xff]
        %v1014 = vld [vmem:[%s241 + $0x3d0] sm:$0xff]
        %v1015 = vld [vmem:[%s241 + $0x3d8] sm:$0xff]
        %v1016 = vld [vmem:[%s241 + $0x3e0] sm:$0xff]
        %v1017 = vld [vmem:[%s241 + $0x3e8] sm:$0xff]
        %v1018 = vld [vmem:[%s241 + $0x3f0] sm:$0xff]
        %v1019 = vld [vmem:[%s241 + $0x3f8] sm:$0xff]
        %v1020 = vld [vmem:[%s241 + $0x400] sm:$0xff]
        %v1021 = vld [vmem:[%s241 + $0x408] sm:$0xff]
        %v1022 = vld [vmem:[%s241 + $0x410] sm:$0xff]
        %v1023 = vld [vmem:[%s241 + $0x418] sm:$0xff]
        %v1024 = vld [vmem:[%s241 + $0x420] sm:$0xff]
        %v1025 = vld [vmem:[%s241 + $0x428] sm:$0xff]
        %v1026 = vld [vmem:[%s241 + $0x430] sm:$0xff]
        %v1027 = vld [vmem:[%s241 + $0x438] sm:$0xff]
        %v1028 = vld [vmem:[%s241 + $0x440] sm:$0xff]
        %v1029 = vld [vmem:[%s241 + $0x448] sm:$0xff]
        %v1030 = vld [vmem:[%s241 + $0x450] sm:$0xff]
        %v1031 = vld [vmem:[%s241 + $0x458] sm:$0xff]
        %v1032 = vld [vmem:[%s241 + $0x460] sm:$0xff]
        %v1033 = vld [vmem:[%s241 + $0x468] sm:$0xff]
        %v1034 = vld [vmem:[%s241 + $0x470] sm:$0xff]
        %v1035 = vld [vmem:[%s241 + $0x478] sm:$0xff]
        %1036 = vmatprep.subr.mxu0 0.0
        %1037 = vmatpush1.msra.mxu0 %v892
        %1038 = vmatprep.subr.mxu0 0.0
        %1039 = vmatpush1.msra.mxu0 %v893
        %1040 = vmatprep.subr.mxu0 0.0
        %1041 = vmatpush1.msra.mxu0 %v894
        %1042 = vmatprep.subr.mxu0 0.0
        %1043 = vmatpush1.msra.mxu0 %v895
        %1044 = vmatprep.subr.mxu0 0.0
        %1045 = vmatpush1.msra.mxu0 %v896
        %1046 = vmatprep.subr.mxu0 0.0
        %1047 = vmatpush1.msra.mxu0 %v897
        %1048 = vmatprep.subr.mxu0 0.0
        %1049 = vmatpush1.msra.mxu0 %v898
        %1050 = vmatprep.subr.mxu0 0.0
        %1051 = vmatpush1.msra.mxu0 %v899
        %1052 = vmatprep.subr.mxu0 0.0
        %1053 = vmatpush1.msra.mxu0 %v900
        %1054 = vmatprep.subr.mxu0 0.0
        %1055 = vmatpush1.msra.mxu0 %v901
        %1056 = vmatprep.subr.mxu0 0.0
        %1057 = vmatpush1.msra.mxu0 %v902
        %1058 = vmatprep.subr.mxu0 0.0
        %1059 = vmatpush1.msra.mxu0 %v903
        %1060 = vmatprep.subr.mxu0 0.0
        %1061 = vmatpush1.msra.mxu0 %v904
        %1062 = vmatprep.subr.mxu0 0.0
        %1063 = vmatpush1.msra.mxu0 %v905
        %1064 = vmatprep.subr.mxu0 0.0
        %1065 = vmatpush1.msra.mxu0 %v906
        %1066 = vmatprep.subr.mxu0 0.0
        %1067 = vmatpush1.msra.mxu0 %v907
        %1068 = vmatprep.subr.mxu0 0.0
        %1069 = vmatpush1.msra.mxu0 %v908
        %1070 = vmatprep.subr.mxu0 0.0
        %1071 = vmatpush1.msra.mxu0 %v909
        %1072 = vmatprep.subr.mxu0 0.0
        %1073 = vmatpush1.msra.mxu0 %v910
        %1074 = vmatprep.subr.mxu0 0.0
        %1075 = vmatpush1.msra.mxu0 %v911
        %1076 = vmatprep.subr.mxu0 0.0
        %1077 = vmatpush1.msra.mxu0 %v912
        %1078 = vmatprep.subr.mxu0 0.0
        %1079 = vmatpush1.msra.mxu0 %v913
        %1080 = vmatprep.subr.mxu0 0.0
        %1081 = vmatpush1.msra.mxu0 %v914
        %1082 = vmatprep.subr.mxu0 0.0
        %1083 = vmatpush1.msra.mxu0 %v915
        %1084 = vmatprep.subr.mxu0 0.0
        %1085 = vmatpush1.msra.mxu0 %v916
        %1086 = vmatprep.subr.mxu0 0.0
        %1087 = vmatpush1.msra.mxu0 %v917
        %1088 = vmatprep.subr.mxu0 0.0
        %1089 = vmatpush1.msra.mxu0 %v918
        %1090 = vmatprep.subr.mxu0 0.0
        %1091 = vmatpush1.msra.mxu0 %v919
        %1092 = vmatprep.subr.mxu0 0.0
        %1093 = vmatpush1.msra.mxu0 %v920
        %1094 = vmatprep.subr.mxu0 0.0
        %1095 = vmatpush1.msra.mxu0 %v921
        %1096 = vmatprep.subr.mxu0 0.0
        %1097 = vmatpush1.msra.mxu0 %v922
        %1098 = vmatprep.subr.mxu0 0.0
        %1099 = vmatpush1.msra.mxu0 %v923
        %1100 = vmatprep.mubr.f32.mxu0 %v873
        %1101 = vmatmul.mubr.f32.gmra.mrb[0].mxu0 %v872
        %v1102 = vpop.f32.mrb[0].mxu0
        %v1103 = vadd.f32 0.0, %v1102
        %v1104 = vpop.f32.mrb[0].mxu0
        %1105 = vmatprep.mubr.f32.mxu0 %v882
        %1106 = vmatmul.mubr.f32.gmra.mrb[0].mxu0 %v881
        %v1107 = vpop.f32.mrb[0].mxu0
        %v1108 = vadd.f32 0.0, %v1107
        %v1109 = vpop.f32.mrb[0].mxu0
        %1110 = vdwg.mxu0
        %1111 = vmatprep.subr.mxu0 0.0
        %1112 = vmatpush1.msra.mxu0 %v924
        %1113 = vmatprep.subr.mxu0 0.0
        %1114 = vmatpush1.msra.mxu0 %v925
        %1115 = vmatprep.subr.mxu0 0.0
        %1116 = vmatpush1.msra.mxu0 %v926
        %1117 = vmatprep.subr.mxu0 0.0
        %1118 = vmatpush1.msra.mxu0 %v927
        %1119 = vmatprep.subr.mxu0 0.0
        %1120 = vmatpush1.msra.mxu0 %v928
        %1121 = vmatprep.subr.mxu0 0.0
        %1122 = vmatpush1.msra.mxu0 %v929
        %1123 = vmatprep.subr.mxu0 0.0
        %1124 = vmatpush1.msra.mxu0 %v930
        %1125 = vmatprep.subr.mxu0 0.0
        %1126 = vmatpush1.msra.mxu0 %v931
        %1127 = vmatprep.subr.mxu0 0.0
        %1128 = vmatpush1.msra.mxu0 %v932
        %1129 = vmatprep.subr.mxu0 0.0
        %1130 = vmatpush1.msra.mxu0 %v933
        %1131 = vmatprep.subr.mxu0 0.0
        %1132 = vmatpush1.msra.mxu0 %v934
        %1133 = vmatprep.subr.mxu0 0.0
        %1134 = vmatpush1.msra.mxu0 %v935
        %1135 = vmatprep.subr.mxu0 0.0
        %1136 = vmatpush1.msra.mxu0 %v936
        %1137 = vmatprep.subr.mxu0 0.0
        %1138 = vmatpush1.msra.mxu0 %v937
        %1139 = vmatprep.subr.mxu0 0.0
        %1140 = vmatpush1.msra.mxu0 %v938
        %1141 = vmatprep.subr.mxu0 0.0
        %1142 = vmatpush1.msra.mxu0 %v939
        %1143 = vmatprep.subr.mxu0 0.0
        %1144 = vmatpush1.msra.mxu0 %v940
        %1145 = vmatprep.subr.mxu0 0.0
        %1146 = vmatpush1.msra.mxu0 %v941
        %1147 = vmatprep.subr.mxu0 0.0
        %1148 = vmatpush1.msra.mxu0 %v942
        %1149 = vmatprep.subr.mxu0 0.0
        %1150 = vmatpush1.msra.mxu0 %v943
        %1151 = vmatprep.subr.mxu0 0.0
        %1152 = vmatpush1.msra.mxu0 %v944
        %1153 = vmatprep.subr.mxu0 0.0
        %1154 = vmatpush1.msra.mxu0 %v945
        %1155 = vmatprep.subr.mxu0 0.0
        %1156 = vmatpush1.msra.mxu0 %v946
        %1157 = vmatprep.subr.mxu0 0.0
        %1158 = vmatpush1.msra.mxu0 %v947
        %1159 = vmatprep.subr.mxu0 0.0
        %1160 = vmatpush1.msra.mxu0 %v948
        %1161 = vmatprep.subr.mxu0 0.0
        %1162 = vmatpush1.msra.mxu0 %v949
        %1163 = vmatprep.subr.mxu0 0.0
        %1164 = vmatpush1.msra.mxu0 %v950
        %1165 = vmatprep.subr.mxu0 0.0
        %1166 = vmatpush1.msra.mxu0 %v951
        %1167 = vmatprep.subr.mxu0 0.0
        %1168 = vmatpush1.msra.mxu0 %v952
        %1169 = vmatprep.subr.mxu0 0.0
        %1170 = vmatpush1.msra.mxu0 %v953
        %1171 = vmatprep.subr.mxu0 0.0
        %1172 = vmatpush1.msra.mxu0 %v954
        %1173 = vmatprep.subr.mxu0 0.0
        %1174 = vmatpush1.msra.mxu0 %v955
        %1175 = vmatprep.mubr.f32.mxu0 %v875
        %1176 = vmatmul.mubr.f32.gmra.mrb[0].mxu0 %v874
        %v1177 = vpop.f32.mrb[0].mxu0
        %v1178 = vadd.f32 %v1103, %v1177
        %v1179 = vpop.f32.mrb[0].mxu0
        %1180 = vmatprep.mubr.f32.mxu0 %v884
        %1181 = vmatmul.mubr.f32.gmra.mrb[0].mxu0 %v883
        %v1182 = vpop.f32.mrb[0].mxu0
        %v1183 = vadd.f32 %v1108, %v1182
        %v1184 = vpop.f32.mrb[0].mxu0
        %1185 = vdwg.mxu0
        %1186 = vmatprep.subr.mxu0 0.0
        %1187 = vmatpush1.msra.mxu0 %v956
        %1188 = vmatprep.subr.mxu0 0.0
        %1189 = vmatpush1.msra.mxu0 %v957
        %1190 = vmatprep.subr.mxu0 0.0
        %1191 = vmatpush1.msra.mxu0 %v958
        %1192 = vmatprep.subr.mxu0 0.0
        %1193 = vmatpush1.msra.mxu0 %v959
        %1194 = vmatprep.subr.mxu0 0.0
        %1195 = vmatpush1.msra.mxu0 %v960
        %1196 = vmatprep.subr.mxu0 0.0
        %1197 = vmatpush1.msra.mxu0 %v961
        %1198 = vmatprep.subr.mxu0 0.0
        %1199 = vmatpush1.msra.mxu0 %v962
        %1200 = vmatprep.subr.mxu0 0.0
        %1201 = vmatpush1.msra.mxu0 %v963
        %1202 = vmatprep.subr.mxu0 0.0
        %1203 = vmatpush1.msra.mxu0 %v964
        %1204 = vmatprep.subr.mxu0 0.0
        %1205 = vmatpush1.msra.mxu0 %v965
        %1206 = vmatprep.subr.mxu0 0.0
        %1207 = vmatpush1.msra.mxu0 %v966
        %1208 = vmatprep.subr.mxu0 0.0
        %1209 = vmatpush1.msra.mxu0 %v967
        %1210 = vmatprep.subr.mxu0 0.0
        %1211 = vmatpush1.msra.mxu0 %v968
        %1212 = vmatprep.subr.mxu0 0.0
        %1213 = vmatpush1.msra.mxu0 %v969
        %1214 = vmatprep.subr.mxu0 0.0
        %1215 = vmatpush1.msra.mxu0 %v970
        %1216 = vmatprep.subr.mxu0 0.0
        %1217 = vmatpush1.msra.mxu0 %v971
        %1218 = vmatprep.subr.mxu0 0.0
        %1219 = vmatpush1.msra.mxu0 %v972
        %1220 = vmatprep.subr.mxu0 0.0
        %1221 = vmatpush1.msra.mxu0 %v973
        %1222 = vmatprep.subr.mxu0 0.0
        %1223 = vmatpush1.msra.mxu0 %v974
        %1224 = vmatprep.subr.mxu0 0.0
        %1225 = vmatpush1.msra.mxu0 %v975
        %1226 = vmatprep.subr.mxu0 0.0
        %1227 = vmatpush1.msra.mxu0 %v976
        %1228 = vmatprep.subr.mxu0 0.0
        %1229 = vmatpush1.msra.mxu0 %v977
        %1230 = vmatprep.subr.mxu0 0.0
        %1231 = vmatpush1.msra.mxu0 %v978
        %1232 = vmatprep.subr.mxu0 0.0
        %1233 = vmatpush1.msra.mxu0 %v979
        %1234 = vmatprep.subr.mxu0 0.0
        %1235 = vmatpush1.msra.mxu0 %v980
        %1236 = vmatprep.subr.mxu0 0.0
        %1237 = vmatpush1.msra.mxu0 %v981
        %1238 = vmatprep.subr.mxu0 0.0
        %1239 = vmatpush1.msra.mxu0 %v982
        %1240 = vmatprep.subr.mxu0 0.0
        %1241 = vmatpush1.msra.mxu0 %v983
        %1242 = vmatprep.subr.mxu0 0.0
        %1243 = vmatpush1.msra.mxu0 %v984
        %1244 = vmatprep.subr.mxu0 0.0
        %1245 = vmatpush1.msra.mxu0 %v985
        %1246 = vmatprep.subr.mxu0 0.0
        %1247 = vmatpush1.msra.mxu0 %v986
        %1248 = vmatprep.subr.mxu0 0.0
        %1249 = vmatpush1.msra.mxu0 %v987
        %1250 = vmatprep.mubr.f32.mxu0 %v877
        %1251 = vmatmul.mubr.f32.gmra.mrb[0].mxu0 %v876
        %v1252 = vpop.f32.mrb[0].mxu0
        %v1253 = vadd.f32 %v1178, %v1252
        %v1254 = vpop.f32.mrb[0].mxu0
        %1255 = vmatprep.mubr.f32.mxu0 %v886
        %1256 = vmatmul.mubr.f32.gmra.mrb[0].mxu0 %v885
        %v1257 = vpop.f32.mrb[0].mxu0
        %v1258 = vadd.f32 %v1183, %v1257
        %v1259 = vpop.f32.mrb[0].mxu0
        %1260 = vdwg.mxu0
        %1261 = vmatprep.subr.mxu0 0.0
        %1262 = vmatpush1.msra.mxu0 %v988
        %1263 = vmatprep.subr.mxu0 0.0
        %1264 = vmatpush1.msra.mxu0 %v989
        %1265 = vmatprep.subr.mxu0 0.0
        %1266 = vmatpush1.msra.mxu0 %v990
        %1267 = vmatprep.subr.mxu0 0.0
        %1268 = vmatpush1.msra.mxu0 %v991
        %1269 = vmatprep.subr.mxu0 0.0
        %1270 = vmatpush1.msra.mxu0 %v992
        %1271 = vmatprep.subr.mxu0 0.0
        %1272 = vmatpush1.msra.mxu0 %v993
        %1273 = vmatprep.subr.mxu0 0.0
        %1274 = vmatpush1.msra.mxu0 %v994
        %1275 = vmatprep.subr.mxu0 0.0
        %1276 = vmatpush1.msra.mxu0 %v995
        %1277 = vmatprep.subr.mxu0 0.0
        %1278 = vmatpush1.msra.mxu0 %v996
        %1279 = vmatprep.subr.mxu0 0.0
        %1280 = vmatpush1.msra.mxu0 %v997
        %1281 = vmatprep.subr.mxu0 0.0
        %1282 = vmatpush1.msra.mxu0 %v998
        %1283 = vmatprep.subr.mxu0 0.0
        %1284 = vmatpush1.msra.mxu0 %v999
        %1285 = vmatprep.subr.mxu0 0.0
        %1286 = vmatpush1.msra.mxu0 %v1000
        %1287 = vmatprep.subr.mxu0 0.0
        %1288 = vmatpush1.msra.mxu0 %v1001
        %1289 = vmatprep.subr.mxu0 0.0
        %1290 = vmatpush1.msra.mxu0 %v1002
        %1291 = vmatprep.subr.mxu0 0.0
        %1292 = vmatpush1.msra.mxu0 %v1003
        %1293 = vmatprep.subr.mxu0 0.0
        %1294 = vmatpush1.msra.mxu0 %v1004
        %1295 = vmatprep.subr.mxu0 0.0
        %1296 = vmatpush1.msra.mxu0 %v1005
        %1297 = vmatprep.subr.mxu0 0.0
        %1298 = vmatpush1.msra.mxu0 %v1006
        %1299 = vmatprep.subr.mxu0 0.0
        %1300 = vmatpush1.msra.mxu0 %v1007
        %1301 = vmatprep.subr.mxu0 0.0
        %1302 = vmatpush1.msra.mxu0 %v1008
        %1303 = vmatprep.subr.mxu0 0.0
        %1304 = vmatpush1.msra.mxu0 %v1009
        %1305 = vmatprep.subr.mxu0 0.0
        %1306 = vmatpush1.msra.mxu0 %v1010
        %1307 = vmatprep.subr.mxu0 0.0
        %1308 = vmatpush1.msra.mxu0 %v1011
        %1309 = vmatprep.subr.mxu0 0.0
        %1310 = vmatpush1.msra.mxu0 %v1012
        %1311 = vmatprep.subr.mxu0 0.0
        %1312 = vmatpush1.msra.mxu0 %v1013
        %1313 = vmatprep.subr.mxu0 0.0
        %1314 = vmatpush1.msra.mxu0 %v1014
        %1315 = vmatprep.subr.mxu0 0.0
        %1316 = vmatpush1.msra.mxu0 %v1015
        %1317 = vmatprep.subr.mxu0 0.0
        %1318 = vmatpush1.msra.mxu0 %v1016
        %1319 = vmatprep.subr.mxu0 0.0
        %1320 = vmatpush1.msra.mxu0 %v1017
        %1321 = vmatprep.subr.mxu0 0.0
        %1322 = vmatpush1.msra.mxu0 %v1018
        %1323 = vmatprep.subr.mxu0 0.0
        %1324 = vmatpush1.msra.mxu0 %v1019
        %1325 = vmatprep.mubr.f32.mxu0 %v879
        %1326 = vmatmul.mubr.f32.gmra.mrb[0].mxu0 %v878
        %v1327 = vpop.f32.mrb[0].mxu0
        %v1328 = vadd.f32 %v1253, %v1327
        %v1329 = vpop.f32.mrb[0].mxu0
        %1330 = vmatprep.mubr.f32.mxu0 %v888
        %1331 = vmatmul.mubr.f32.gmra.mrb[0].mxu0 %v887
        %v1332 = vpop.f32.mrb[0].mxu0
        %v1333 = vadd.f32 %v1258, %v1332
        %v1334 = vpop.f32.mrb[0].mxu0
        %1335 = vdwg.mxu0
        %1336 = vmatprep.subr.mxu0 0.0
        %1337 = vmatpush1.msra.mxu0 %v1020
        %1338 = vmatprep.subr.mxu0 0.0
        %1339 = vmatpush1.msra.mxu0 %v1021
        %1340 = vmatprep.subr.mxu0 0.0
        %1341 = vmatpush1.msra.mxu0 %v1022
        %1342 = vmatprep.subr.mxu0 0.0
        %1343 = vmatpush1.msra.mxu0 %v1023
        %1344 = vmatprep.subr.mxu0 0.0
        %1345 = vmatpush1.msra.mxu0 %v1024
        %1346 = vmatprep.subr.mxu0 0.0
        %1347 = vmatpush1.msra.mxu0 %v1025
        %1348 = vmatprep.subr.mxu0 0.0
        %1349 = vmatpush1.msra.mxu0 %v1026
        %1350 = vmatprep.subr.mxu0 0.0
        %1351 = vmatpush1.msra.mxu0 %v1027
        %1352 = vmatprep.subr.mxu0 0.0
        %1353 = vmatpush1.msra.mxu0 %v1028
        %1354 = vmatprep.subr.mxu0 0.0
        %1355 = vmatpush1.msra.mxu0 %v1029
        %1356 = vmatprep.subr.mxu0 0.0
        %1357 = vmatpush1.msra.mxu0 %v1030
        %1358 = vmatprep.subr.mxu0 0.0
        %1359 = vmatpush1.msra.mxu0 %v1031
        %1360 = vmatprep.subr.mxu0 0.0
        %1361 = vmatpush1.msra.mxu0 %v1032
        %1362 = vmatprep.subr.mxu0 0.0
        %1363 = vmatpush1.msra.mxu0 %v1033
        %1364 = vmatprep.subr.mxu0 0.0
        %1365 = vmatpush1.msra.mxu0 %v1034
        %1366 = vmatprep.subr.mxu0 0.0
        %1367 = vmatpush1.msra.mxu0 %v1035
        %1368 = vmatprep.subr.mxu0 0.0
        %1369 = vmatpush1.msra.mxu0 0.0
        %1370 = vmatprep.subr.mxu0 0.0
        %1371 = vmatpush1.msra.mxu0 0.0
        %1372 = vmatprep.subr.mxu0 0.0
        %1373 = vmatpush1.msra.mxu0 0.0
        %1374 = vmatprep.subr.mxu0 0.0
        %1375 = vmatpush1.msra.mxu0 0.0
        %1376 = vmatprep.subr.mxu0 0.0
        %1377 = vmatpush1.msra.mxu0 0.0
        %1378 = vmatprep.subr.mxu0 0.0
        %1379 = vmatpush1.msra.mxu0 0.0
        %1380 = vmatprep.subr.mxu0 0.0
        %1381 = vmatpush1.msra.mxu0 0.0
        %1382 = vmatprep.subr.mxu0 0.0
        %1383 = vmatpush1.msra.mxu0 0.0
        %1384 = vmatprep.subr.mxu0 0.0
        %1385 = vmatpush1.msra.mxu0 0.0
        %1386 = vmatprep.subr.mxu0 0.0
        %1387 = vmatpush1.msra.mxu0 0.0
        %1388 = vmatprep.subr.mxu0 0.0
        %1389 = vmatpush1.msra.mxu0 0.0
        %1390 = vmatprep.subr.mxu0 0.0
        %1391 = vmatpush1.msra.mxu0 0.0
        %1392 = vmatprep.subr.mxu0 0.0
        %1393 = vmatpush1.msra.mxu0 0.0
        %1394 = vmatprep.subr.mxu0 0.0
        %1395 = vmatpush1.msra.mxu0 0.0
        %1396 = vmatprep.subr.mxu0 0.0
        %1397 = vmatpush1.msra.mxu0 0.0
        %1398 = vmatprep.subr.mxu0 0.0
        %1399 = vmatpush1.msra.mxu0 0.0
        %1400 = vmatprep.mubr.f32.mxu0 0.0
        %1401 = vmatmul.mubr.f32.gmra.mrb[0].mxu0 %v880
        %v1402 = vpop.f32.mrb[0].mxu0
        %v1403 = vadd.f32 %v1328, %v1402
        %v1404 = vpop.f32.mrb[0].mxu0
        %1405 = vmatprep.mubr.f32.mxu0 0.0
        %1406 = vmatmul.mubr.f32.gmra.mrb[0].mxu0 %v889
        %v1407 = vpop.f32.mrb[0].mxu0
        %v1408 = vadd.f32 %v1333, %v1407
        %v1409 = vpop.f32.mrb[0].mxu0
        %1410 = vdwg.mxu0
        %v1411 = vadd.f32 %v890, %v1403
        %v1412 = vadd.f32 %v891, %v1408
        %vm1413 = vcmask 31744
        %1414 = vst.msk [vmem:[#allocation2] sm:$0xff] %vm1413, %v1411
        %1415 = vst.msk [vmem:[#allocation2 + $0x8] sm:$0xff] %vm1413, %v1412
        %v1416 = vld [vmem:[%s2] sm:$0xff]
        %v1417 = vld [vmem:[%s2 + $0x8] sm:$0xff]
        %v1418 = vld [vmem:[%s2 + $0x10] sm:$0xff]
        %v1419 = vld [vmem:[%s2 + $0x18] sm:$0xff]
        %v1420 = vld [vmem:[%s2 + $0x20] sm:$0xff]
        %v1421 = vld [vmem:[%s2 + $0x28] sm:$0xff]
        %v1422 = vld [vmem:[%s2 + $0x30] sm:$0xff]
        %v1423 = vld [vmem:[%s2 + $0x38] sm:$0xff]
        %v1424 = vld [vmem:[%s2 + $0x40] sm:$0xff]
        %v1425 = vld [vmem:[%s2 + $0x48] sm:$0xff]
        %v1426 = vld [vmem:[%s2 + $0x50] sm:$0xff]
        %v1427 = vld [vmem:[%s2 + $0x58] sm:$0xff]
        %v1428 = vld [vmem:[%s2 + $0x60] sm:$0xff]
        %v1429 = vld [vmem:[%s2 + $0x68] sm:$0xff]
        %v1430 = vld [vmem:[%s2 + $0x70] sm:$0xff]
        %v1431 = vld [vmem:[%s2 + $0x78] sm:$0xff]
        %v1432 = vld [vmem:[#allocation2] sm:$0xff]
        %v1433 = vld [vmem:[#allocation2 + $0x8] sm:$0xff]
        %v1434 = vld [vmem:[%s3] sm:$0xff]
        %v1435 = vld [vmem:[%s3 + $0x8] sm:$0xff]
        %v1436 = vld [vmem:[%s3 + $0x10] sm:$0xff]
        %v1437 = vld [vmem:[%s3 + $0x18] sm:$0xff]
        %v1438 = vld [vmem:[%s3 + $0x20] sm:$0xff]
        %v1439 = vld [vmem:[%s3 + $0x28] sm:$0xff]
        %v1440 = vld [vmem:[%s3 + $0x30] sm:$0xff]
        %v1441 = vld [vmem:[%s3 + $0x38] sm:$0xff]
        %v1442 = vld [vmem:[%s3 + $0x40] sm:$0xff]
        %v1443 = vld [vmem:[%s3 + $0x48] sm:$0xff]
        %v1444 = vld [vmem:[%s3 + $0x50] sm:$0xff]
        %v1445 = vld [vmem:[%s3 + $0x58] sm:$0xff]
        %v1446 = vld [vmem:[%s3 + $0x60] sm:$0xff]
        %v1447 = vld [vmem:[%s3 + $0x68] sm:$0xff]
        %v1448 = vld [vmem:[%s3 + $0x70] sm:$0xff]
        %v1449 = vld [vmem:[%s3 + $0x78] sm:$0xff]
        %1451 = vset.pattern.permute.xlu0 0
        %1452 = vperm.xlu0 %1451, %v1434
        %v1453 = vpop.permute.xlu0 %1452
        %1456 = vset.pattern.permute.xlu0 0
        %1457 = vperm.xlu0 %1456, %v1435
        %v1458 = vpop.permute.xlu0 %1457
        %1461 = vset.pattern.permute.xlu0 0
        %1462 = vperm.xlu0 %1461, %v1436
        %v1463 = vpop.permute.xlu0 %1462
        %1466 = vset.pattern.permute.xlu0 0
        %1467 = vperm.xlu0 %1466, %v1437
        %v1468 = vpop.permute.xlu0 %1467
        %1471 = vset.pattern.permute.xlu0 0
        %1472 = vperm.xlu0 %1471, %v1438
        %v1473 = vpop.permute.xlu0 %1472
        %1476 = vset.pattern.permute.xlu0 0
        %1477 = vperm.xlu0 %1476, %v1439
        %v1478 = vpop.permute.xlu0 %1477
        %1481 = vset.pattern.permute.xlu0 0
        %1482 = vperm.xlu0 %1481, %v1440
        %v1483 = vpop.permute.xlu0 %1482
        %1486 = vset.pattern.permute.xlu0 0
        %1487 = vperm.xlu0 %1486, %v1441
        %v1488 = vpop.permute.xlu0 %1487
        %1491 = vset.pattern.permute.xlu0 0
        %1492 = vperm.xlu0 %1491, %v1442
        %v1493 = vpop.permute.xlu0 %1492
        %1496 = vset.pattern.permute.xlu0 0
        %1497 = vperm.xlu0 %1496, %v1443
        %v1498 = vpop.permute.xlu0 %1497
        %1501 = vset.pattern.permute.xlu0 0
        %1502 = vperm.xlu0 %1501, %v1444
        %v1503 = vpop.permute.xlu0 %1502
        %1506 = vset.pattern.permute.xlu0 0
        %1507 = vperm.xlu0 %1506, %v1445
        %v1508 = vpop.permute.xlu0 %1507
        %1511 = vset.pattern.permute.xlu0 0
        %1512 = vperm.xlu0 %1511, %v1446
        %v1513 = vpop.permute.xlu0 %1512
        %1516 = vset.pattern.permute.xlu0 0
        %1517 = vperm.xlu0 %1516, %v1447
        %v1518 = vpop.permute.xlu0 %1517
        %1521 = vset.pattern.permute.xlu0 0
        %1522 = vperm.xlu0 %1521, %v1448
        %v1523 = vpop.permute.xlu0 %1522
        %1526 = vset.pattern.permute.xlu0 0
        %1527 = vperm.xlu0 %1526, %v1449
        %v1528 = vpop.permute.xlu0 %1527
        %vm1530 = vcmask 130048
        %v1532 = vsel %vm1530, %v1416, 0
        %v1535 = vsel %vm1530, %v1417, 0
        %v1538 = vsel %vm1530, %v1418, 0
        %v1541 = vsel %vm1530, %v1419, 0
        %v1544 = vsel %vm1530, %v1420, 0
        %v1547 = vsel %vm1530, %v1421, 0
        %v1550 = vsel %vm1530, %v1422, 0
        %v1553 = vsel %vm1530, %v1423, 0
        %v1556 = vsel %vm1530, %v1424, 0
        %v1559 = vsel %vm1530, %v1425, 0
        %v1562 = vsel %vm1530, %v1426, 0
        %v1565 = vsel %vm1530, %v1427, 0
        %v1568 = vsel %vm1530, %v1428, 0
        %v1571 = vsel %vm1530, %v1429, 0
        %v1574 = vsel %vm1530, %v1430, 0
        %v1577 = vsel %vm1530, %v1431, 0
        %1579 = vmatprep.subr.mxu0 0.0
        %1580 = vmatpush1.msra.mxu0 %v1432
        %1581 = vmatprep.subr.mxu0 0.0
        %1582 = vmatpush1.msra.mxu0 %v1433
        %1583 = vmatprep.subr.mxu0 0.0
        %1584 = vmatpush1.msra.mxu0 0.0
        %1585 = vmatprep.subr.mxu0 0.0
        %1586 = vmatpush1.msra.mxu0 0.0
        %1587 = vmatprep.subr.mxu0 0.0
        %1588 = vmatpush1.msra.mxu0 0.0
        %1589 = vmatprep.subr.mxu0 0.0
        %1590 = vmatpush1.msra.mxu0 0.0
        %1591 = vmatprep.subr.mxu0 0.0
        %1592 = vmatpush1.msra.mxu0 0.0
        %1593 = vmatprep.subr.mxu0 0.0
        %1594 = vmatpush1.msra.mxu0 0.0
        %1595 = vmatprep.subr.mxu0 0.0
        %1596 = vmatpush1.msra.mxu0 0.0
        %1597 = vmatprep.subr.mxu0 0.0
        %1598 = vmatpush1.msra.mxu0 0.0
        %1599 = vmatprep.subr.mxu0 0.0
        %1600 = vmatpush1.msra.mxu0 0.0
        %1601 = vmatprep.subr.mxu0 0.0
        %1602 = vmatpush1.msra.mxu0 0.0
        %1603 = vmatprep.subr.mxu0 0.0
        %1604 = vmatpush1.msra.mxu0 0.0
        %1605 = vmatprep.subr.mxu0 0.0
        %1606 = vmatpush1.msra.mxu0 0.0
        %1607 = vmatprep.subr.mxu0 0.0
        %1608 = vmatpush1.msra.mxu0 0.0
        %1609 = vmatprep.subr.mxu0 0.0
        %1610 = vmatpush1.msra.mxu0 0.0
        %1611 = vmatprep.subr.mxu0 0.0
        %1612 = vmatpush1.msra.mxu0 0.0
        %1613 = vmatprep.subr.mxu0 0.0
        %1614 = vmatpush1.msra.mxu0 0.0
        %1615 = vmatprep.subr.mxu0 0.0
        %1616 = vmatpush1.msra.mxu0 0.0
        %1617 = vmatprep.subr.mxu0 0.0
        %1618 = vmatpush1.msra.mxu0 0.0
        %1619 = vmatprep.subr.mxu0 0.0
        %1620 = vmatpush1.msra.mxu0 0.0
        %1621 = vmatprep.subr.mxu0 0.0
        %1622 = vmatpush1.msra.mxu0 0.0
        %1623 = vmatprep.subr.mxu0 0.0
        %1624 = vmatpush1.msra.mxu0 0.0
        %1625 = vmatprep.subr.mxu0 0.0
        %1626 = vmatpush1.msra.mxu0 0.0
        %1627 = vmatprep.subr.mxu0 0.0
        %1628 = vmatpush1.msra.mxu0 0.0
        %1629 = vmatprep.subr.mxu0 0.0
        %1630 = vmatpush1.msra.mxu0 0.0
        %1631 = vmatprep.subr.mxu0 0.0
        %1632 = vmatpush1.msra.mxu0 0.0
        %1633 = vmatprep.subr.mxu0 0.0
        %1634 = vmatpush1.msra.mxu0 0.0
        %1635 = vmatprep.subr.mxu0 0.0
        %1636 = vmatpush1.msra.mxu0 0.0
        %1637 = vmatprep.subr.mxu0 0.0
        %1638 = vmatpush1.msra.mxu0 0.0
        %1639 = vmatprep.subr.mxu0 0.0
        %1640 = vmatpush1.msra.mxu0 0.0
        %1641 = vmatprep.subr.mxu0 0.0
        %1642 = vmatpush1.msra.mxu0 0.0
        %1643 = vmatprep.mubr.f32.mxu0 0.0
        %1644 = vmatmul.mubr.f32.gmra.mrb[0].mxu0 %v1532
        %v1645 = vpop.f32.mrb[0].mxu0
        %v1646 = vadd.f32 %v1453, %v1645
        %v1647 = vpop.f32.mrb[0].mxu0
        %1648 = vmatprep.mubr.f32.mxu0 0.0
        %1649 = vmatmul.mubr.f32.gmra.mrb[0].mxu0 %v1535
        %v1650 = vpop.f32.mrb[0].mxu0
        %v1651 = vadd.f32 %v1458, %v1650
        %v1652 = vpop.f32.mrb[0].mxu0
        %1653 = vmatprep.mubr.f32.mxu0 0.0
        %1654 = vmatmul.mubr.f32.gmra.mrb[0].mxu0 %v1538
        %v1655 = vpop.f32.mrb[0].mxu0
        %v1656 = vadd.f32 %v1463, %v1655
        %v1657 = vpop.f32.mrb[0].mxu0
        %1658 = vmatprep.mubr.f32.mxu0 0.0
        %1659 = vmatmul.mubr.f32.gmra.mrb[0].mxu0 %v1541
        %v1660 = vpop.f32.mrb[0].mxu0
        %v1661 = vadd.f32 %v1468, %v1660
        %v1662 = vpop.f32.mrb[0].mxu0
        %1663 = vmatprep.mubr.f32.mxu0 0.0
        %1664 = vmatmul.mubr.f32.gmra.mrb[0].mxu0 %v1544
        %v1665 = vpop.f32.mrb[0].mxu0
        %v1666 = vadd.f32 %v1473, %v1665
        %v1667 = vpop.f32.mrb[0].mxu0
        %1668 = vmatprep.mubr.f32.mxu0 0.0
        %1669 = vmatmul.mubr.f32.gmra.mrb[0].mxu0 %v1547
        %v1670 = vpop.f32.mrb[0].mxu0
        %v1671 = vadd.f32 %v1478, %v1670
        %v1672 = vpop.f32.mrb[0].mxu0
        %1673 = vmatprep.mubr.f32.mxu0 0.0
        %1674 = vmatmul.mubr.f32.gmra.mrb[0].mxu0 %v1550
        %v1675 = vpop.f32.mrb[0].mxu0
        %v1676 = vadd.f32 %v1483, %v1675
        %v1677 = vpop.f32.mrb[0].mxu0
        %1678 = vmatprep.mubr.f32.mxu0 0.0
        %1679 = vmatmul.mubr.f32.gmra.mrb[0].mxu0 %v1553
        %v1680 = vpop.f32.mrb[0].mxu0
        %v1681 = vadd.f32 %v1488, %v1680
        %v1682 = vpop.f32.mrb[0].mxu0
        %1683 = vmatprep.mubr.f32.mxu0 0.0
        %1684 = vmatmul.mubr.f32.gmra.mrb[0].mxu0 %v1556
        %v1685 = vpop.f32.mrb[0].mxu0
        %v1686 = vadd.f32 %v1493, %v1685
        %v1687 = vpop.f32.mrb[0].mxu0
        %1688 = vmatprep.mubr.f32.mxu0 0.0
        %1689 = vmatmul.mubr.f32.gmra.mrb[0].mxu0 %v1559
        %v1690 = vpop.f32.mrb[0].mxu0
        %v1691 = vadd.f32 %v1498, %v1690
        %v1692 = vpop.f32.mrb[0].mxu0
        %1693 = vmatprep.mubr.f32.mxu0 0.0
        %1694 = vmatmul.mubr.f32.gmra.mrb[0].mxu0 %v1562
        %v1695 = vpop.f32.mrb[0].mxu0
        %v1696 = vadd.f32 %v1503, %v1695
        %v1697 = vpop.f32.mrb[0].mxu0
        %1698 = vmatprep.mubr.f32.mxu0 0.0
        %1699 = vmatmul.mubr.f32.gmra.mrb[0].mxu0 %v1565
        %v1700 = vpop.f32.mrb[0].mxu0
        %v1701 = vadd.f32 %v1508, %v1700
        %v1702 = vpop.f32.mrb[0].mxu0
        %1703 = vmatprep.mubr.f32.mxu0 0.0
        %1704 = vmatmul.mubr.f32.gmra.mrb[0].mxu0 %v1568
        %v1705 = vpop.f32.mrb[0].mxu0
        %v1706 = vadd.f32 %v1513, %v1705
        %v1707 = vpop.f32.mrb[0].mxu0
        %1708 = vmatprep.mubr.f32.mxu0 0.0
        %1709 = vmatmul.mubr.f32.gmra.mrb[0].mxu0 %v1571
        %v1710 = vpop.f32.mrb[0].mxu0
        %v1711 = vadd.f32 %v1518, %v1710
        %v1712 = vpop.f32.mrb[0].mxu0
        %1713 = vmatprep.mubr.f32.mxu0 0.0
        %1714 = vmatmul.mubr.f32.gmra.mrb[0].mxu0 %v1574
        %v1715 = vpop.f32.mrb[0].mxu0
        %v1716 = vadd.f32 %v1523, %v1715
        %v1717 = vpop.f32.mrb[0].mxu0
        %1718 = vmatprep.mubr.f32.mxu0 0.0
        %1719 = vmatmul.mubr.f32.gmra.mrb[0].mxu0 %v1577
        %v1720 = vpop.f32.mrb[0].mxu0
        %v1721 = vadd.f32 %v1528, %v1720
        %v1722 = vpop.f32.mrb[0].mxu0
        %1723 = vdwg.mxu0
        %v1724 = vadd.f32 %v1646, 3.0
        %v1725 = vadd.f32 %v1651, 3.0
        %v1726 = vadd.f32 %v1656, 3.0
        %v1727 = vadd.f32 %v1661, 3.0
        %v1728 = vadd.f32 %v1666, 3.0
        %v1729 = vadd.f32 %v1671, 3.0
        %v1730 = vadd.f32 %v1676, 3.0
        %v1731 = vadd.f32 %v1681, 3.0
        %v1732 = vadd.f32 %v1686, 3.0
        %v1733 = vadd.f32 %v1691, 3.0
        %v1734 = vadd.f32 %v1696, 3.0
        %v1735 = vadd.f32 %v1701, 3.0
        %v1736 = vadd.f32 %v1706, 3.0
        %v1737 = vadd.f32 %v1711, 3.0
        %v1738 = vadd.f32 %v1716, 3.0
        %v1739 = vadd.f32 %v1721, 3.0
        %v1740 = vmax.f32 %v1724, 0.0
        %v1741 = vmax.f32 %v1725, 0.0
        %v1742 = vmax.f32 %v1726, 0.0
        %v1743 = vmax.f32 %v1727, 0.0
        %v1744 = vmax.f32 %v1728, 0.0
        %v1745 = vmax.f32 %v1729, 0.0
        %v1746 = vmax.f32 %v1730, 0.0
        %v1747 = vmax.f32 %v1731, 0.0
        %v1748 = vmax.f32 %v1732, 0.0
        %v1749 = vmax.f32 %v1733, 0.0
        %v1750 = vmax.f32 %v1734, 0.0
        %v1751 = vmax.f32 %v1735, 0.0
        %v1752 = vmax.f32 %v1736, 0.0
        %v1753 = vmax.f32 %v1737, 0.0
        %v1754 = vmax.f32 %v1738, 0.0
        %v1755 = vmax.f32 %v1739, 0.0
        %v1756 = vmin.f32 %v1740, 6.0
        %v1757 = vmin.f32 %v1741, 6.0
        %v1758 = vmin.f32 %v1742, 6.0
        %v1759 = vmin.f32 %v1743, 6.0
        %v1760 = vmin.f32 %v1744, 6.0
        %v1761 = vmin.f32 %v1745, 6.0
        %v1762 = vmin.f32 %v1746, 6.0
        %v1763 = vmin.f32 %v1747, 6.0
        %v1764 = vmin.f32 %v1748, 6.0
        %v1765 = vmin.f32 %v1749, 6.0
        %v1766 = vmin.f32 %v1750, 6.0
        %v1767 = vmin.f32 %v1751, 6.0
        %v1768 = vmin.f32 %v1752, 6.0
        %v1769 = vmin.f32 %v1753, 6.0
        %v1770 = vmin.f32 %v1754, 6.0
        %v1771 = vmin.f32 %v1755, 6.0
        %v1772 = vmul.f32 %v1756, 0.16666667
        %v1773 = vmul.f32 %v1757, 0.16666667
        %v1774 = vmul.f32 %v1758, 0.16666667
        %v1775 = vmul.f32 %v1759, 0.16666667
        %v1776 = vmul.f32 %v1760, 0.16666667
        %v1777 = vmul.f32 %v1761, 0.16666667
        %v1778 = vmul.f32 %v1762, 0.16666667
        %v1779 = vmul.f32 %v1763, 0.16666667
        %v1780 = vmul.f32 %v1764, 0.16666667
        %v1781 = vmul.f32 %v1765, 0.16666667
        %v1782 = vmul.f32 %v1766, 0.16666667
        %v1783 = vmul.f32 %v1767, 0.16666667
        %v1784 = vmul.f32 %v1768, 0.16666667
        %v1785 = vmul.f32 %v1769, 0.16666667
        %v1786 = vmul.f32 %v1770, 0.16666667
        %v1787 = vmul.f32 %v1771, 0.16666667
        %1788 = vst.msk [vmem:[%s247] sm:$0xff] %vm1413, %v1772
        %1789 = vst.msk [vmem:[%s247 + $0x8] sm:$0xff] %vm1413, %v1773
        %1790 = vst.msk [vmem:[%s247 + $0x10] sm:$0xff] %vm1413, %v1774
        %1791 = vst.msk [vmem:[%s247 + $0x18] sm:$0xff] %vm1413, %v1775
        %1792 = vst.msk [vmem:[%s247 + $0x20] sm:$0xff] %vm1413, %v1776
        %1793 = vst.msk [vmem:[%s247 + $0x28] sm:$0xff] %vm1413, %v1777
        %1794 = vst.msk [vmem:[%s247 + $0x30] sm:$0xff] %vm1413, %v1778
        %1795 = vst.msk [vmem:[%s247 + $0x38] sm:$0xff] %vm1413, %v1779
        %1796 = vst.msk [vmem:[%s247 + $0x40] sm:$0xff] %vm1413, %v1780
        %1797 = vst.msk [vmem:[%s247 + $0x48] sm:$0xff] %vm1413, %v1781
        %1798 = vst.msk [vmem:[%s247 + $0x50] sm:$0xff] %vm1413, %v1782
        %1799 = vst.msk [vmem:[%s247 + $0x58] sm:$0xff] %vm1413, %v1783
        %1800 = vst.msk [vmem:[%s247 + $0x60] sm:$0xff] %vm1413, %v1784
        %1801 = vst.msk [vmem:[%s247 + $0x68] sm:$0xff] %vm1413, %v1785
        %1802 = vst.msk [vmem:[%s247 + $0x70] sm:$0xff] %vm1413, %v1786
        %1803 = vst.msk [vmem:[%s247 + $0x78] sm:$0xff] %vm1413, %v1787
      $region48: #{lraspp_forward.2} parent=35 // pred_fallthru
        _
      %p1804 = scmp.lt.s32.totalorder %s19, 1
      %s1805 = scalar_select %p1804, %s19, 1
      %s1806 = smul.addr %s1805, 16
      %s1807 = smul.addr %s1806, 8
      %s1808 = scalar_lea.vmem %s4, %s1807
      // Predicated region
      $region49: #{lraspp_forward.2} parent=35 // pred_check
        %p1809 = pneg %p141
      $region50: #{lraspp_forward.2} parent=35 // pred_check_branch
        %1811 = sbr.rel (%p1809) target = $region52
      $region51: #{lraspp_forward.2} parent=35 // pred_region
        _
      $region52: #{lraspp_forward.2} parent=35 // pred_fallthru
        _
    $region36: #{lraspp_forward.2} parent=5 // pred_fallthru
      _
    %p1812 = scmp.le.s32.totalorder 2, %s10
    // Predicated region
    $region53: #{lraspp_forward.2} parent=5 // pred_check
      %p1813 = pneg %p1812
    $region54: #{lraspp_forward.2} parent=5 // pred_check_branch
      %1815 = sbr.rel (%p1813) target = $region56
    $region55: #{lraspp_forward.2} parent=5 // pred_region
      %s1816 = ssub.s32 %s10, 2
      // Predicated region
      $region57: #{lraspp_forward.2} parent=55 // pred_check
        %p1817 = pneg %p147
      $region58: #{lraspp_forward.2} parent=55 // pred_check_branch
        %1819 = sbr.rel (%p1817) target = $region60
      $region59: #{lraspp_forward.2} parent=55 // pred_region
        %p1820 = scmp.lt.s32.totalorder %s21, 1
        %s1821 = scalar_select %p1820, %s21, 1
        %s1822 = smul.addr %s1821, 16
        %s1823 = smul.addr %s1822, 8
        %s1824 = scalar_lea.vmem %s4, %s1823
      $region60: #{lraspp_forward.2} parent=55 // pred_fallthru
        _
    $region56: #{lraspp_forward.2} parent=5 // pred_fallthru
      _
  $region6: #{lraspp_forward.2} parent=0 // loop_footer
    %s14 = sadd.s32 1, %s10
  $region7: #{lraspp_forward.2} parent=0 // loop_footer_branch
    %9 = sbr.rel target = $region3
  $region8: #{lraspp_forward.2} parent=0 // loop_exit
    _

// kernel: lraspp_forward.3
$region0: #{lraspp_forward.3}
  #allocation0 [shape = 'u32[]', space=smem, size = 0x4, offset = 0x4, fixed_abs, tag = 'smem constant byte address 0x4 - core index']
  #allocation1 [shape = 'u32[144,128]{1,0:T(1,128)}', space=vmem, size = 0x12000, scoped, tag = 'internal scratch']
  %s0 = inlined_call_operand.vmem [shape: f32[2,16,1089], index: 0, kind: input, shape index: {}]
  %s1 = inlined_call_operand.vmem [shape: f32[128,16], index: 1, kind: input, shape index: {}]
  %s2 = inlined_call_operand.vmem [shape: f32[128,1], index: 2, kind: input, shape index: {}]
  %s3 = inlined_call_operand.vmem [shape: f32[2,128,4], index: 3, kind: input, shape index: {}]
  %s4 = inlined_call_operand.vmem [shape: f32[4,1152], index: 4, kind: input, shape index: {}]
  %s5 = inlined_call_operand.vmem [shape: f32[2,128,1089], index: 5, kind: output, shape index: {}]
  %s6 = sld [smem:[#allocation0]]
  $region53: #{lraspp_forward.3} parent=0
    _
  %s8 = ssub.s32 1, %s6
  %s9 = scalar_select 0, %s8, %s6
  loop: start=0, step=1, limit=4
  $region2: #{lraspp_forward.3} parent=0 // loop_pre_header
    _
  $region3: #{lraspp_forward.3} parent=0 // loop_header
    %s11 = sphi 0, %s15
    %p12 = scmp.ge.s32.totalorder %s11, 4
    %s18 = sphi 0, %s30
    %s19 = sphi 0, %s26
    %s20 = sphi 0, %s18
    %s21 = sphi 0, %s19
    %s22 = sphi 0, %s20
    %s23 = sphi 0, %s21
    %s35 = sphi 0, %s37
    %s38 = sphi 0, %s35
    %s39 = sphi 0, %s38
    %s55 = sphi 0, %s39
    %s59 = sphi 0, %s59
    %s61 = sphi 0, %s59
    %s62 = sphi 0, %s61
    %s76 = sphi 0, %s62
    %s80 = sphi 0, %s80
    %s82 = sphi 0, %s80
    %s83 = sphi 0, %s82
    %s97 = sphi 0, %s83
    %s103 = sphi 0, %s105
    %s106 = sphi 0, %s103
    %s107 = sphi 0, %s106
    %s123 = sphi 0, %s107
    %s129 = sphi 0, %s131
    %s132 = sphi 0, %s129
    %s133 = sphi 0, %s132
    %s149 = sphi 0, %s133
    %s157 = sphi 0, %s159
    %s160 = sphi 0, %s157
    %s161 = sphi 0, %s160
    %s177 = sphi 0, %s161
  $region4: #{lraspp_forward.3} parent=0 // loop_header_branch
    %14 = sbr.rel (%p12) target = $region8
  $region5: #{lraspp_forward.3} parent=0 // loop_body
    %s16 = ssub.s32 %s11, 1
    %s17 = ssub.s32 %s11, 2
    %s24 = sadd.s32 1, %s19
    %p25 = scmp.ge.s32.totalorder %s24, 2
    %s26 = scalar_select %p25, 0, %s24
    %s27 = sadd.s32 1, %s18
    %s28 = scalar_select %p25, %s27, %s18
    %p29 = scmp.ge.s32.totalorder %s28, 1
    %s30 = scalar_select %p29, 0, %s28
    %s31 = ssub.s32 %s19, %s26
    %s32 = ssub.s32 %s18, %s30
    %s33 = sor.u32 %s31, %s32
    %p34 = scmp.eq.s32.totalorder %s33, 0
    %s36 = sadd.s32 %s35, 1
    %s37 = scalar_select %p34, %s35, %s36
    %p40 = pneg %p34
    %p41 = scmp.eq.s32.totalorder %s11, 1
    %p42 = por %p40, %p41
    %p43 = scmp.ne.s32.totalorder %s35, %s38
    %p44 = scmp.eq.s32.totalorder %s11, 0
    %p45 = por %p43, %p44
    %p46 = scmp.ne.s32.totalorder %s35, %s38
    %p47 = scmp.eq.s32.totalorder %s16, 1
    %p48 = por %p46, %p47
    %p49 = scmp.ne.s32.totalorder %s38, %s39
    %p50 = scmp.eq.s32.totalorder %s16, 0
    %p51 = por %p49, %p50
    %p52 = scmp.ne.s32.totalorder %s38, %s39
    %p53 = scmp.eq.s32.totalorder %s17, 1
    %p54 = por %p52, %p53
    %p56 = scmp.ne.s32.totalorder %s39, %s55
    %p57 = scmp.eq.s32.totalorder %s17, 0
    %p58 = por %p56, %p57
    %s60 = sadd.s32 %s59, 1
    %p63 = scmp.eq.s32.totalorder %s11, 1
    %p64 = scmp.ne.s32.totalorder %s59, %s61
    %p65 = scmp.eq.s32.totalorder %s11, 0
    %p66 = por %p64, %p65
    %p67 = scmp.ne.s32.totalorder %s59, %s61
    %p68 = scmp.eq.s32.totalorder %s16, 1
    %p69 = por %p67, %p68
    %p70 = scmp.ne.s32.totalorder %s61, %s62
    %p71 = scmp.eq.s32.totalorder %s16, 0
    %p72 = por %p70, %p71
    %p73 = scmp.ne.s32.totalorder %s61, %s62
    %p74 = scmp.eq.s32.totalorder %s17, 1
    %p75 = por %p73, %p74
    %p77 = scmp.ne.s32.totalorder %s62, %s76
    %p78 = scmp.eq.s32.totalorder %s17, 0
    %p79 = por %p77, %p78
    %s81 = sadd.s32 %s80, 1
    %p84 = scmp.eq.s32.totalorder %s11, 1
    %p85 = scmp.ne.s32.totalorder %s80, %s82
    %p86 = scmp.eq.s32.totalorder %s11, 0
    %p87 = por %p85, %p86
    %p88 = scmp.ne.s32.totalorder %s80, %s82
    %p89 = scmp.eq.s32.totalorder %s16, 1
    %p90 = por %p88, %p89
    %p91 = scmp.ne.s32.totalorder %s82, %s83
    %p92 = scmp.eq.s32.totalorder %s16, 0
    %p93 = por %p91, %p92
    %p94 = scmp.ne.s32.totalorder %s82, %s83
    %p95 = scmp.eq.s32.totalorder %s17, 1
    %p96 = por %p94, %p95
    %p98 = scmp.ne.s32.totalorder %s83, %s97
    %p99 = scmp.eq.s32.totalorder %s17, 0
    %p100 = por %p98, %p99
    %s101 = ssub.s32 %s19, %s26
    %p102 = scmp.eq.s32.totalorder %s101, 0
    %s104 = sadd.s32 %s103, 1
    %s105 = scalar_select %p102, %s103, %s104
    %p108 = pneg %p102
    %p109 = scmp.eq.s32.totalorder %s11, 1
    %p110 = por %p108, %p109
    %p111 = scmp.ne.s32.totalorder %s103, %s106
    %p112 = scmp.eq.s32.totalorder %s11, 0
    %p113 = por %p111, %p112
    %p114 = scmp.ne.s32.totalorder %s103, %s106
    %p115 = scmp.eq.s32.totalorder %s16, 1
    %p116 = por %p114, %p115
    %p117 = scmp.ne.s32.totalorder %s106, %s107
    %p118 = scmp.eq.s32.totalorder %s16, 0
    %p119 = por %p117, %p118
    %p120 = scmp.ne.s32.totalorder %s106, %s107
    %p121 = scmp.eq.s32.totalorder %s17, 1
    %p122 = por %p120, %p121
    %p124 = scmp.ne.s32.totalorder %s107, %s123
    %p125 = scmp.eq.s32.totalorder %s17, 0
    %p126 = por %p124, %p125
    %s127 = ssub.s32 %s18, %s30
    %p128 = scmp.eq.s32.totalorder %s127, 0
    %s130 = sadd.s32 %s129, 1
    %s131 = scalar_select %p128, %s129, %s130
    %p134 = pneg %p128
    %p135 = scmp.eq.s32.totalorder %s11, 1
    %p136 = por %p134, %p135
    %p137 = scmp.ne.s32.totalorder %s129, %s132
    %p138 = scmp.eq.s32.totalorder %s11, 0
    %p139 = por %p137, %p138
    %p140 = scmp.ne.s32.totalorder %s129, %s132
    %p141 = scmp.eq.s32.totalorder %s16, 1
    %p142 = por %p140, %p141
    %p143 = scmp.ne.s32.totalorder %s132, %s133
    %p144 = scmp.eq.s32.totalorder %s16, 0
    %p145 = por %p143, %p144
    %p146 = scmp.ne.s32.totalorder %s132, %s133
    %p147 = scmp.eq.s32.totalorder %s17, 1
    %p148 = por %p146, %p147
    %p150 = scmp.ne.s32.totalorder %s133, %s149
    %p151 = scmp.eq.s32.totalorder %s17, 0
    %p152 = por %p150, %p151
    %s153 = ssub.s32 %s19, %s26
    %s154 = ssub.s32 %s18, %s30
    %s155 = sor.u32 %s153, %s154
    %p156 = scmp.eq.s32.totalorder %s155, 0
    %s158 = sadd.s32 %s157, 1
    %s159 = scalar_select %p156, %s157, %s158
    %p162 = pneg %p156
    %p163 = scmp.eq.s32.totalorder %s11, 1
    %p164 = por %p162, %p163
    %p165 = scmp.ne.s32.totalorder %s157, %s160
    %p166 = scmp.eq.s32.totalorder %s11, 0
    %p167 = por %p165, %p166
    %p168 = scmp.ne.s32.totalorder %s157, %s160
    %p169 = scmp.eq.s32.totalorder %s16, 1
    %p170 = por %p168, %p169
    %p171 = scmp.ne.s32.totalorder %s160, %s161
    %p172 = scmp.eq.s32.totalorder %s16, 0
    %p173 = por %p171, %p172
    %p174 = scmp.ne.s32.totalorder %s160, %s161
    %p175 = scmp.eq.s32.totalorder %s17, 1
    %p176 = por %p174, %p175
    %p178 = scmp.ne.s32.totalorder %s161, %s177
    %p179 = scmp.eq.s32.totalorder %s17, 0
    %p180 = por %p178, %p179
    %p181 = scmp.le.s32.totalorder 1, %s11
    %p182 = scmp.lt.s32.totalorder %s11, 3
    %p183 = pnand %p181, %p182
    %p184 = pneg %p183
    // Predicated region
    $region9: #{lraspp_forward.3} parent=5 // pred_check
      _
    $region10: #{lraspp_forward.3} parent=5 // pred_check_branch
      %186 = sbr.rel (%p183) target = $region12
    $region11: #{lraspp_forward.3} parent=5 // pred_region
      %s187 = ssub.s32 %s11, 1
      // Predicated region
      $region13: #{lraspp_forward.3} parent=11 // pred_check
        %p188 = pneg %p72
      $region14: #{lraspp_forward.3} parent=11 // pred_check_branch
        %190 = sbr.rel (%p188) target = $region16
      $region15: #{lraspp_forward.3} parent=11 // pred_region
        _
      $region16: #{lraspp_forward.3} parent=11 // pred_fallthru
        _
      // Predicated region
      $region17: #{lraspp_forward.3} parent=11 // pred_check
        %p191 = pneg %p93
      $region18: #{lraspp_forward.3} parent=11 // pred_check_branch
        %193 = sbr.rel (%p191) target = $region20
      $region19: #{lraspp_forward.3} parent=11 // pred_region
        _
      $region20: #{lraspp_forward.3} parent=11 // pred_fallthru
        _
      // Predicated region
      $region21: #{lraspp_forward.3} parent=11 // pred_check
        %p194 = pneg %p145
      $region22: #{lraspp_forward.3} parent=11 // pred_check_branch
        %196 = sbr.rel (%p194) target = $region24
      $region23: #{lraspp_forward.3} parent=11 // pred_region
        %s197 = smul.u32 9, %s20
        %p198 = scmp.lt.s32.totalorder %s197, 8
        %s199 = scalar_select %p198, %s197, 8
        %s200 = smul.addr %s199, 4
        %s201 = scalar_lea.vmem %s4, %s200
        %s202 = smul.u32 9, %s20
      $region24: #{lraspp_forward.3} parent=11 // pred_fallthru
        _
    $region12: #{lraspp_forward.3} parent=5 // pred_fallthru
      _
    %p203 = scmp.lt.s32.totalorder %s11, 2
    // Predicated region
    $region25: #{lraspp_forward.3} parent=5 // pred_check
      %p204 = pneg %p203
    $region26: #{lraspp_forward.3} parent=5 // pred_check_branch
      %206 = sbr.rel (%p204) target = $region28
    $region27: #{lraspp_forward.3} parent=5 // pred_region
      // Predicated region
      $region29: #{lraspp_forward.3} parent=27 // pred_check
        %p207 = pneg %p45
      $region30: #{lraspp_forward.3} parent=27 // pred_check_branch
        %209 = sbr.rel (%p207) target = $region32
      $region31: #{lraspp_forward.3} parent=27 // pred_region
        %s210 = smul.u32 9, %s18
        %p211 = scmp.lt.s32.totalorder %s19, 1
        %s212 = scalar_select %p211, %s19, 1
        %p213 = scmp.lt.s32.totalorder %s210, 8
        %s214 = scalar_select %p213, %s210, 8
        %s215 = smul.addr %s212, 18
        %s216 = sadd.s32 %s214, %s215
        %s217 = smul.addr %s216, 8
        %s218 = scalar_lea.vmem %s0, %s217
        %s219 = smul.u32 9, %s18
      $region32: #{lraspp_forward.3} parent=27 // pred_fallthru
        _
      // Predicated region
      $region33: #{lraspp_forward.3} parent=27 // pred_check
        %p220 = pneg %p113
      $region34: #{lraspp_forward.3} parent=27 // pred_check_branch
        %222 = sbr.rel (%p220) target = $region36
      $region35: #{lraspp_forward.3} parent=27 // pred_region
        %p223 = scmp.lt.s32.totalorder %s19, 1
        %s224 = scalar_select %p223, %s19, 1
        %s225 = smul.addr %s224, 16
        %s226 = smul.addr %s225, 8
        %s227 = scalar_lea.vmem %s3, %s226
      $region36: #{lraspp_forward.3} parent=27 // pred_fallthru
        _
    $region28: #{lraspp_forward.3} parent=5 // pred_fallthru
      _
    %p228 = scmp.le.s32.totalorder 1, %s11
    %p229 = scmp.lt.s32.totalorder %s11, 3
    %p230 = pnand %p228, %p229
    %p231 = pneg %p230
    // Predicated region
    $region37: #{lraspp_forward.3} parent=5 // pred_check
      _
    $region38: #{lraspp_forward.3} parent=5 // pred_check_branch
      %233 = sbr.rel (%p230) target = $region40
    $region39: #{lraspp_forward.3} parent=5 // pred_region
      %s234 = ssub.s32 %s11, 1
      %s235 = smul.u32 9, %s20
      %p236 = scmp.lt.s32.totalorder %s21, 1
      %s237 = scalar_select %p236, %s21, 1
      %p238 = scmp.lt.s32.totalorder %s235, 8
      %s239 = scalar_select %p238, %s235, 8
      %s240 = smul.addr %s237, 18
      %s241 = sadd.s32 %s239, %s240
      %s242 = smul.addr %s241, 8
      %s243 = scalar_lea.vmem %s0, %s242
      %p244 = pneg %p51
      %p245 = pneg %p48
      %p246 = pneg %p72
      %p247 = pneg %p69
      %p248 = pneg %p93
      %p249 = pneg %p90
      %p250 = scmp.lt.s32.totalorder %s21, 1
      %s251 = scalar_select %p250, %s21, 1
      %s252 = smul.addr %s251, 16
      %s253 = smul.addr %s252, 8
      %s254 = scalar_lea.vmem %s3, %s253
      %p255 = pneg %p119
      %p256 = pneg %p116
      %s257 = smul.u32 9, %s20
      %p258 = scmp.lt.s32.totalorder %s257, 8
      %s259 = scalar_select %p258, %s257, 8
      %s260 = smul.addr %s259, 4
      %s261 = scalar_lea.vmem %s4, %s260
      %p262 = pneg %p145
      %p263 = pneg %p142
      %p264 = pneg %p173
      %p265 = pneg %p170
      %s266 = smul.u32 9, %s20
      %p267 = scmp.lt.s32.totalorder %s21, 1
      %s268 = scalar_select %p267, %s21, 1
      %p269 = scmp.lt.s32.totalorder %s266, 8
      %s270 = scalar_select %p269, %s266, 8
      %s271 = smul.addr %s268, 144
      %s272 = sadd.s32 %s270, %s271
      %s273 = smul.addr %s272, 8
      %s274 = scalar_lea.vmem %s5, %s273
      %s275 = smul.u32 9, %s20
      %p276 = scmp.lt.s32.totalorder %s21, 1
      %s277 = scalar_select %p276, %s21, 1
      %p278 = scmp.lt.s32.totalorder %s275, 8
      %s279 = scalar_select %p278, %s275, 8
      %s280 = smul.addr %s277, 18
      %s281 = sadd.s32 %s279, %s280
      %s282 = smul.addr %s281, 8
      %s283 = scalar_lea.vmem %s0, %s282
      %s284 = smul.u32 9, %s20
      %p285 = scmp.lt.s32.totalorder %s21, 1
      %s286 = scalar_select %p285, %s21, 1
      %s287 = smul.addr %s286, 16
      %s288 = smul.addr %s287, 8
      %s289 = scalar_lea.vmem %s3, %s288
      %s290 = smul.u32 9, %s20
      %p291 = scmp.lt.s32.totalorder %s290, 8
      %s292 = scalar_select %p291, %s290, 8
      %s293 = smul.addr %s292, 4
      %s294 = scalar_lea.vmem %s4, %s293
      %s295 = smul.u32 9, %s20
      %s296 = smul.u32 9, %s20
      %p297 = scmp.lt.s32.totalorder %s21, 1
      %s298 = scalar_select %p297, %s21, 1
      %p299 = scmp.lt.s32.totalorder %s296, 8
      %s300 = scalar_select %p299, %s296, 8
      %s301 = smul.addr %s298, 144
      %s302 = sadd.s32 %s300, %s301
      %s303 = smul.addr %s302, 8
      %s304 = scalar_lea.vmem %s5, %s303
      %s305 = smul.u32 9, %s20
      %v306 = vld [vmem:[%s283] sm:$0xff]
      %v307 = vld [vmem:[%s283 + $0x8] sm:$0xff]
      %v308 = vld [vmem:[%s283 + $0x10] sm:$0xff]
      %v309 = vld [vmem:[%s283 + $0x18] sm:$0xff]
      %v310 = vld [vmem:[%s283 + $0x20] sm:$0xff]
      %v311 = vld [vmem:[%s283 + $0x28] sm:$0xff]
      %v312 = vld [vmem:[%s283 + $0x30] sm:$0xff]
      %v313 = vld [vmem:[%s283 + $0x38] sm:$0xff]
      %v314 = vld [vmem:[%s283 + $0x40] sm:$0xff]
      %v315 = vld [vmem:[%s283 + $0x48] sm:$0xff]
      %v316 = vld [vmem:[%s283 + $0x50] sm:$0xff]
      %v317 = vld [vmem:[%s283 + $0x58] sm:$0xff]
      %v318 = vld [vmem:[%s283 + $0x60] sm:$0xff]
      %v319 = vld [vmem:[%s283 + $0x68] sm:$0xff]
      %v320 = vld [vmem:[%s283 + $0x70] sm:$0xff]
      %v321 = vld [vmem:[%s283 + $0x78] sm:$0xff]
      %v322 = vld [vmem:[%s283 + $0x80] sm:$0xff]
      %v323 = vld [vmem:[%s283 + $0x88] sm:$0xff]
      %v324 = vld [vmem:[%s1] sm:$0xff]
      %v325 = vld [vmem:[%s1 + $0x8] sm:$0xff]
      %v326 = vld [vmem:[%s1 + $0x10] sm:$0xff]
      %v327 = vld [vmem:[%s1 + $0x18] sm:$0xff]
      %v328 = vld [vmem:[%s1 + $0x20] sm:$0xff]
      %v329 = vld [vmem:[%s1 + $0x28] sm:$0xff]
      %v330 = vld [vmem:[%s1 + $0x30] sm:$0xff]
      %v331 = vld [vmem:[%s1 + $0x38] sm:$0xff]
      %v332 = vld [vmem:[%s1 + $0x40] sm:$0xff]
      %v333 = vld [vmem:[%s1 + $0x48] sm:$0xff]
      %v334 = vld [vmem:[%s1 + $0x50] sm:$0xff]
      %v335 = vld [vmem:[%s1 + $0x58] sm:$0xff]
      %v336 = vld [vmem:[%s1 + $0x60] sm:$0xff]
      %v337 = vld [vmem:[%s1 + $0x68] sm:$0xff]
      %v338 = vld [vmem:[%s1 + $0x70] sm:$0xff]
      %v339 = vld [vmem:[%s1 + $0x78] sm:$0xff]
      %v340 = vld [vmem:[%s2] sm:$0xff]
      %v341 = vld [vmem:[%s2 + $0x8] sm:$0xff]
      %v342 = vld [vmem:[%s2 + $0x10] sm:$0xff]
      %v343 = vld [vmem:[%s2 + $0x18] sm:$0xff]
      %v344 = vld [vmem:[%s2 + $0x20] sm:$0xff]
      %v345 = vld [vmem:[%s2 + $0x28] sm:$0xff]
      %v346 = vld [vmem:[%s2 + $0x30] sm:$0xff]
      %v347 = vld [vmem:[%s2 + $0x38] sm:$0xff]
      %v348 = vld [vmem:[%s2 + $0x40] sm:$0xff]
      %v349 = vld [vmem:[%s2 + $0x48] sm:$0xff]
      %v350 = vld [vmem:[%s2 + $0x50] sm:$0xff]
      %v351 = vld [vmem:[%s2 + $0x58] sm:$0xff]
      %v352 = vld [vmem:[%s2 + $0x60] sm:$0xff]
      %v353 = vld [vmem:[%s2 + $0x68] sm:$0xff]
      %v354 = vld [vmem:[%s2 + $0x70] sm:$0xff]
      %v355 = vld [vmem:[%s2 + $0x78] sm:$0xff]
      %357 = vset.pattern.permute.xlu0 0
      %358 = vperm.xlu0 %357, %v340
      %v359 = vpop.permute.xlu0 %358
      %362 = vset.pattern.permute.xlu0 0
      %363 = vperm.xlu0 %362, %v341
      %v364 = vpop.permute.xlu0 %363
      %367 = vset.pattern.permute.xlu0 0
      %368 = vperm.xlu0 %367, %v342
      %v369 = vpop.permute.xlu0 %368
      %372 = vset.pattern.permute.xlu0 0
      %373 = vperm.xlu0 %372, %v343
      %v374 = vpop.permute.xlu0 %373
      %377 = vset.pattern.permute.xlu0 0
      %378 = vperm.xlu0 %377, %v344
      %v379 = vpop.permute.xlu0 %378
      %382 = vset.pattern.permute.xlu0 0
      %383 = vperm.xlu0 %382, %v345
      %v384 = vpop.permute.xlu0 %383
      %387 = vset.pattern.permute.xlu0 0
      %388 = vperm.xlu0 %387, %v346
      %v389 = vpop.permute.xlu0 %388
      %392 = vset.pattern.permute.xlu0 0
      %393 = vperm.xlu0 %392, %v347
      %v394 = vpop.permute.xlu0 %393
      %397 = vset.pattern.permute.xlu0 0
      %398 = vperm.xlu0 %397, %v348
      %v399 = vpop.permute.xlu0 %398
      %402 = vset.pattern.permute.xlu0 0
      %403 = vperm.xlu0 %402, %v349
      %v404 = vpop.permute.xlu0 %403
      %407 = vset.pattern.permute.xlu0 0
      %408 = vperm.xlu0 %407, %v350
      %v409 = vpop.permute.xlu0 %408
      %412 = vset.pattern.permute.xlu0 0
      %413 = vperm.xlu0 %412, %v351
      %v414 = vpop.permute.xlu0 %413
      %417 = vset.pattern.permute.xlu0 0
      %418 = vperm.xlu0 %417, %v352
      %v419 = vpop.permute.xlu0 %418
      %422 = vset.pattern.permute.xlu0 0
      %423 = vperm.xlu0 %422, %v353
      %v424 = vpop.permute.xlu0 %423
      %427 = vset.pattern.permute.xlu0 0
      %428 = vperm.xlu0 %427, %v354
      %v429 = vpop.permute.xlu0 %428
      %432 = vset.pattern.permute.xlu0 0
      %433 = vperm.xlu0 %432, %v355
      %v434 = vpop.permute.xlu0 %433
      %vm436 = vcmask 130048
      %v438 = vsel %vm436, %v324, 0
      %v441 = vsel %vm436, %v325, 0
      %v444 = vsel %vm436, %v326, 0
      %v447 = vsel %vm436, %v327, 0
      %v450 = vsel %vm436, %v328, 0
      %v453 = vsel %vm436, %v329, 0
      %v456 = vsel %vm436, %v330, 0
      %v459 = vsel %vm436, %v331, 0
      %v462 = vsel %vm436, %v332, 0
      %v465 = vsel %vm436, %v333, 0
      %v468 = vsel %vm436, %v334, 0
      %v471 = vsel %vm436, %v335, 0
      %v474 = vsel %vm436, %v336, 0
      %v477 = vsel %vm436, %v337, 0
      %v480 = vsel %vm436, %v338, 0
      %v483 = vsel %vm436, %v339, 0
      %485 = vmatprep.subr.mxu0 %v307
      %486 = vmatpush1.msra.mxu0 %v306
      %487 = vmatprep.subr.mxu0 %v316
      %488 = vmatpush1.msra.mxu0 %v315
      %489 = vmatprep.subr.mxu0 0.0
      %490 = vmatpush1.msra.mxu0 0.0
      %491 = vmatprep.subr.mxu0 0.0
      %492 = vmatpush1.msra.mxu0 0.0
      %493 = vmatprep.subr.mxu0 0.0
      %494 = vmatpush1.msra.mxu0 0.0
      %495 = vmatprep.subr.mxu0 0.0
      %496 = vmatpush1.msra.mxu0 0.0
      %497 = vmatprep.subr.mxu0 0.0
      %498 = vmatpush1.msra.mxu0 0.0
      %499 = vmatprep.subr.mxu0 0.0
      %500 = vmatpush1.msra.mxu0 0.0
      %501 = vmatprep.subr.mxu0 0.0
      %502 = vmatpush1.msra.mxu0 0.0
      %503 = vmatprep.subr.mxu0 0.0
      %504 = vmatpush1.msra.mxu0 0.0
      %505 = vmatprep.subr.mxu0 0.0
      %506 = vmatpush1.msra.mxu0 0.0
      %507 = vmatprep.subr.mxu0 0.0
      %508 = vmatpush1.msra.mxu0 0.0
      %509 = vmatprep.subr.mxu0 0.0
      %510 = vmatpush1.msra.mxu0 0.0
      %511 = vmatprep.subr.mxu0 0.0
      %512 = vmatpush1.msra.mxu0 0.0
      %513 = vmatprep.subr.mxu0 0.0
      %514 = vmatpush1.msra.mxu0 0.0
      %515 = vmatprep.subr.mxu0 0.0
      %516 = vmatpush1.msra.mxu0 0.0
      %517 = vmatprep.subr.mxu0 0.0
      %518 = vmatpush1.msra.mxu0 0.0
      %519 = vmatprep.subr.mxu0 0.0
      %520 = vmatpush1.msra.mxu0 0.0
      %521 = vmatprep.subr.mxu0 0.0
      %522 = vmatpush1.msra.mxu0 0.0
      %523 = vmatprep.subr.mxu0 0.0
      %524 = vmatpush1.msra.mxu0 0.0
      %525 = vmatprep.subr.mxu0 0.0
      %526 = vmatpush1.msra.mxu0 0.0
      %527 = vmatprep.subr.mxu0 0.0
      %528 = vmatpush1.msra.mxu0 0.0
      %529 = vmatprep.subr.mxu0 0.0
      %530 = vmatpush1.msra.mxu0 0.0
      %531 = vmatprep.subr.mxu0 0.0
      %532 = vmatpush1.msra.mxu0 0.0
      %533 = vmatprep.subr.mxu0 0.0
      %534 = vmatpush1.msra.mxu0 0.0
      %535 = vmatprep.subr.mxu0 0.0
      %536 = vmatpush1.msra.mxu0 0.0
      %537 = vmatprep.subr.mxu0 0.0
      %538 = vmatpush1.msra.mxu0 0.0
      %539 = vmatprep.subr.mxu0 0.0
      %540 = vmatpush1.msra.mxu0 0.0
      %541 = vmatprep.subr.mxu0 0.0
      %542 = vmatpush1.msra.mxu0 0.0
      %543 = vmatprep.subr.mxu0 0.0
      %544 = vmatpush1.msra.mxu0 0.0
      %545 = vmatprep.subr.mxu0 0.0
      %546 = vmatpush1.msra.mxu0 0.0
      %547 = vmatprep.subr.mxu0 0.0
      %548 = vmatpush1.msra.mxu0 0.0
      %549 = vmatprep.mubr.f32.mxu0 0.0
      %550 = vmatmul.mubr.f32.gmra.mrb[0].mxu0 %v438
      %v551 = vpop.f32.mrb[0].mxu0
      %v552 = vadd.f32 %v359, %v551
      %v553 = vpop.f32.mrb[0].mxu0
      %v554 = vadd.f32 %v359, %v553
      %555 = vmatprep.mubr.f32.mxu0 0.0
      %556 = vmatmul.mubr.f32.gmra.mrb[0].mxu0 %v441
      %v557 = vpop.f32.mrb[0].mxu0
      %v558 = vadd.f32 %v364, %v557
      %v559 = vpop.f32.mrb[0].mxu0
      %v560 = vadd.f32 %v364, %v559
      %561 = vmatprep.mubr.f32.mxu0 0.0
      %562 = vmatmul.mubr.f32.gmra.mrb[0].mxu0 %v444
      %v563 = vpop.f32.mrb[0].mxu0
      %v564 = vadd.f32 %v369, %v563
      %v565 = vpop.f32.mrb[0].mxu0
      %v566 = vadd.f32 %v369, %v565
      %567 = vmatprep.mubr.f32.mxu0 0.0
      %568 = vmatmul.mubr.f32.gmra.mrb[0].mxu0 %v447
      %v569 = vpop.f32.mrb[0].mxu0
      %v570 = vadd.f32 %v374, %v569
      %v571 = vpop.f32.mrb[0].mxu0
      %v572 = vadd.f32 %v374, %v571
      %573 = vmatprep.mubr.f32.mxu0 0.0
      %574 = vmatmul.mubr.f32.gmra.mrb[0].mxu0 %v450
      %v575 = vpop.f32.mrb[0].mxu0
      %v576 = vadd.f32 %v379, %v575
      %v577 = vpop.f32.mrb[0].mxu0
      %v578 = vadd.f32 %v379, %v577
      %579 = vmatprep.mubr.f32.mxu0 0.0
      %580 = vmatmul.mubr.f32.gmra.mrb[0].mxu0 %v453
      %v581 = vpop.f32.mrb[0].mxu0
      %v582 = vadd.f32 %v384, %v581
      %v583 = vpop.f32.mrb[0].mxu0
      %v584 = vadd.f32 %v384, %v583
      %585 = vmatprep.mubr.f32.mxu0 0.0
      %586 = vmatmul.mubr.f32.gmra.mrb[0].mxu0 %v456
      %v587 = vpop.f32.mrb[0].mxu0
      %v588 = vadd.f32 %v389, %v587
      %v589 = vpop.f32.mrb[0].mxu0
      %v590 = vadd.f32 %v389, %v589
      %591 = vmatprep.mubr.f32.mxu0 0.0
      %592 = vmatmul.mubr.f32.gmra.mrb[0].mxu0 %v459
      %v593 = vpop.f32.mrb[0].mxu0
      %v594 = vadd.f32 %v394, %v593
      %v595 = vpop.f32.mrb[0].mxu0
      %v596 = vadd.f32 %v394, %v595
      %597 = vmatprep.mubr.f32.mxu0 0.0
      %598 = vmatmul.mubr.f32.gmra.mrb[0].mxu0 %v462
      %v599 = vpop.f32.mrb[0].mxu0
      %v600 = vadd.f32 %v399, %v599
      %v601 = vpop.f32.mrb[0].mxu0
      %v602 = vadd.f32 %v399, %v601
      %603 = vmatprep.mubr.f32.mxu0 0.0
      %604 = vmatmul.mubr.f32.gmra.mrb[0].mxu0 %v465
      %v605 = vpop.f32.mrb[0].mxu0
      %v606 = vadd.f32 %v404, %v605
      %v607 = vpop.f32.mrb[0].mxu0
      %v608 = vadd.f32 %v404, %v607
      %609 = vmatprep.mubr.f32.mxu0 0.0
      %610 = vmatmul.mubr.f32.gmra.mrb[0].mxu0 %v468
      %v611 = vpop.f32.mrb[0].mxu0
      %v612 = vadd.f32 %v409, %v611
      %v613 = vpop.f32.mrb[0].mxu0
      %v614 = vadd.f32 %v409, %v613
      %615 = vmatprep.mubr.f32.mxu0 0.0
      %616 = vmatmul.mubr.f32.gmra.mrb[0].mxu0 %v471
      %v617 = vpop.f32.mrb[0].mxu0
      %v618 = vadd.f32 %v414, %v617
      %v619 = vpop.f32.mrb[0].mxu0
      %v620 = vadd.f32 %v414, %v619
      %621 = vmatprep.mubr.f32.mxu0 0.0
      %622 = vmatmul.mubr.f32.gmra.mrb[0].mxu0 %v474
      %v623 = vpop.f32.mrb[0].mxu0
      %v624 = vadd.f32 %v419, %v623
      %v625 = vpop.f32.mrb[0].mxu0
      %v626 = vadd.f32 %v419, %v625
      %627 = vmatprep.mubr.f32.mxu0 0.0
      %628 = vmatmul.mubr.f32.gmra.mrb[0].mxu0 %v477
      %v629 = vpop.f32.mrb[0].mxu0
      %v630 = vadd.f32 %v424, %v629
      %v631 = vpop.f32.mrb[0].mxu0
      %v632 = vadd.f32 %v424, %v631
      %633 = vmatprep.mubr.f32.mxu0 0.0
      %634 = vmatmul.mubr.f32.gmra.mrb[0].mxu0 %v480
      %v635 = vpop.f32.mrb[0].mxu0
      %v636 = vadd.f32 %v429, %v635
      %v637 = vpop.f32.mrb[0].mxu0
      %v638 = vadd.f32 %v429, %v637
      %639 = vmatprep.mubr.f32.mxu0 0.0
      %640 = vmatmul.mubr.f32.gmra.mrb[0].mxu0 %v483
      %v641 = vpop.f32.mrb[0].mxu0
      %v642 = vadd.f32 %v434, %v641
      %v643 = vpop.f32.mrb[0].mxu0
      %v644 = vadd.f32 %v434, %v643
      %645 = vdwg.mxu0
      %646 = vmatprep.subr.mxu0 %v309
      %647 = vmatpush1.msra.mxu0 %v308
      %648 = vmatprep.subr.mxu0 %v318
      %649 = vmatpush1.msra.mxu0 %v317
      %650 = vmatprep.subr.mxu0 0.0
      %651 = vmatpush1.msra.mxu0 0.0
      %652 = vmatprep.subr.mxu0 0.0
      %653 = vmatpush1.msra.mxu0 0.0
      %654 = vmatprep.subr.mxu0 0.0
      %655 = vmatpush1.msra.mxu0 0.0
      %656 = vmatprep.subr.mxu0 0.0
      %657 = vmatpush1.msra.mxu0 0.0
      %658 = vmatprep.subr.mxu0 0.0
      %659 = vmatpush1.msra.mxu0 0.0
      %660 = vmatprep.subr.mxu0 0.0
      %661 = vmatpush1.msra.mxu0 0.0
      %662 = vmatprep.subr.mxu0 0.0
      %663 = vmatpush1.msra.mxu0 0.0
      %664 = vmatprep.subr.mxu0 0.0
      %665 = vmatpush1.msra.mxu0 0.0
      %666 = vmatprep.subr.mxu0 0.0
      %667 = vmatpush1.msra.mxu0 0.0
      %668 = vmatprep.subr.mxu0 0.0
      %669 = vmatpush1.msra.mxu0 0.0
      %670 = vmatprep.subr.mxu0 0.0
      %671 = vmatpush1.msra.mxu0 0.0
      %672 = vmatprep.subr.mxu0 0.0
      %673 = vmatpush1.msra.mxu0 0.0
      %674 = vmatprep.subr.mxu0 0.0
      %675 = vmatpush1.msra.mxu0 0.0
      %676 = vmatprep.subr.mxu0 0.0
      %677 = vmatpush1.msra.mxu0 0.0
      %678 = vmatprep.subr.mxu0 0.0
      %679 = vmatpush1.msra.mxu0 0.0
      %680 = vmatprep.subr.mxu0 0.0
      %681 = vmatpush1.msra.mxu0 0.0
      %682 = vmatprep.subr.mxu0 0.0
      %683 = vmatpush1.msra.mxu0 0.0
      %684 = vmatprep.subr.mxu0 0.0
      %685 = vmatpush1.msra.mxu0 0.0
      %686 = vmatprep.subr.mxu0 0.0
      %687 = vmatpush1.msra.mxu0 0.0
      %688 = vmatprep.subr.mxu0 0.0
      %689 = vmatpush1.msra.mxu0 0.0
      %690 = vmatprep.subr.mxu0 0.0
      %691 = vmatpush1.msra.mxu0 0.0
      %692 = vmatprep.subr.mxu0 0.0
      %693 = vmatpush1.msra.mxu0 0.0
      %694 = vmatprep.subr.mxu0 0.0
      %695 = vmatpush1.msra.mxu0 0.0
      %696 = vmatprep.subr.mxu0 0.0
      %697 = vmatpush1.msra.mxu0 0.0
      %698 = vmatprep.subr.mxu0 0.0
      %699 = vmatpush1.msra.mxu0 0.0
      %700 = vmatprep.subr.mxu0 0.0
      %701 = vmatpush1.msra.mxu0 0.0
      %702 = vmatprep.subr.mxu0 0.0
      %703 = vmatpush1.msra.mxu0 0.0
      %704 = vmatprep.subr.mxu0 0.0
      %705 = vmatpush1.msra.mxu0 0.0
      %706 = vmatprep.subr.mxu0 0.0
      %707 = vmatpush1.msra.mxu0 0.0
      %708 = vmatprep.subr.mxu0 0.0
      %709 = vmatpush1.msra.mxu0 0.0
      %710 = vmatprep.mubr.f32.mxu0 0.0
      %711 = vmatmul.mubr.f32.gmra.mrb[0].mxu0 %v438
      %v712 = vpop.f32.mrb[0].mxu0
      %v713 = vadd.f32 %v359, %v712
      %v714 = vpop.f32.mrb[0].mxu0
      %v715 = vadd.f32 %v359, %v714
      %716 = vmatprep.mubr.f32.mxu0 0.0
      %717 = vmatmul.mubr.f32.gmra.mrb[0].mxu0 %v441
      %v718 = vpop.f32.mrb[0].mxu0
      %v719 = vadd.f32 %v364, %v718
      %v720 = vpop.f32.mrb[0].mxu0
      %v721 = vadd.f32 %v364, %v720
      %722 = vmatprep.mubr.f32.mxu0 0.0
      %723 = vmatmul.mubr.f32.gmra.mrb[0].mxu0 %v444
      %v724 = vpop.f32.mrb[0].mxu0
      %v725 = vadd.f32 %v369, %v724
      %v726 = vpop.f32.mrb[0].mxu0
      %v727 = vadd.f32 %v369, %v726
      %728 = vmatprep.mubr.f32.mxu0 0.0
      %729 = vmatmul.mubr.f32.gmra.mrb[0].mxu0 %v447
      %v730 = vpop.f32.mrb[0].mxu0
      %v731 = vadd.f32 %v374, %v730
      %v732 = vpop.f32.mrb[0].mxu0
      %v733 = vadd.f32 %v374, %v732
      %734 = vmatprep.mubr.f32.mxu0 0.0
      %735 = vmatmul.mubr.f32.gmra.mrb[0].mxu0 %v450
      %v736 = vpop.f32.mrb[0].mxu0
      %v737 = vadd.f32 %v379, %v736
      %v738 = vpop.f32.mrb[0].mxu0
      %v739 = vadd.f32 %v379, %v738
      %740 = vmatprep.mubr.f32.mxu0 0.0
      %741 = vmatmul.mubr.f32.gmra.mrb[0].mxu0 %v453
      %v742 = vpop.f32.mrb[0].mxu0
      %v743 = vadd.f32 %v384, %v742
      %v744 = vpop.f32.mrb[0].mxu0
      %v745 = vadd.f32 %v384, %v744
      %746 = vmatprep.mubr.f32.mxu0 0.0
      %747 = vmatmul.mubr.f32.gmra.mrb[0].mxu0 %v456
      %v748 = vpop.f32.mrb[0].mxu0
      %v749 = vadd.f32 %v389, %v748
      %v750 = vpop.f32.mrb[0].mxu0
      %v751 = vadd.f32 %v389, %v750
      %752 = vmatprep.mubr.f32.mxu0 0.0
      %753 = vmatmul.mubr.f32.gmra.mrb[0].mxu0 %v459
      %v754 = vpop.f32.mrb[0].mxu0
      %v755 = vadd.f32 %v394, %v754
      %v756 = vpop.f32.mrb[0].mxu0
      %v757 = vadd.f32 %v394, %v756
      %758 = vmatprep.mubr.f32.mxu0 0.0
      %759 = vmatmul.mubr.f32.gmra.mrb[0].mxu0 %v462
      %v760 = vpop.f32.mrb[0].mxu0
      %v761 = vadd.f32 %v399, %v760
      %v762 = vpop.f32.mrb[0].mxu0
      %v763 = vadd.f32 %v399, %v762
      %764 = vmatprep.mubr.f32.mxu0 0.0
      %765 = vmatmul.mubr.f32.gmra.mrb[0].mxu0 %v465
      %v766 = vpop.f32.mrb[0].mxu0
      %v767 = vadd.f32 %v404, %v766
      %v768 = vpop.f32.mrb[0].mxu0
      %v769 = vadd.f32 %v404, %v768
      %770 = vmatprep.mubr.f32.mxu0 0.0
      %771 = vmatmul.mubr.f32.gmra.mrb[0].mxu0 %v468
      %v772 = vpop.f32.mrb[0].mxu0
      %v773 = vadd.f32 %v409, %v772
      %v774 = vpop.f32.mrb[0].mxu0
      %v775 = vadd.f32 %v409, %v774
      %776 = vmatprep.mubr.f32.mxu0 0.0
      %777 = vmatmul.mubr.f32.gmra.mrb[0].mxu0 %v471
      %v778 = vpop.f32.mrb[0].mxu0
      %v779 = vadd.f32 %v414, %v778
      %v780 = vpop.f32.mrb[0].mxu0
      %v781 = vadd.f32 %v414, %v780
      %782 = vmatprep.mubr.f32.mxu0 0.0
      %783 = vmatmul.mubr.f32.gmra.mrb[0].mxu0 %v474
      %v784 = vpop.f32.mrb[0].mxu0
      %v785 = vadd.f32 %v419, %v784
      %v786 = vpop.f32.mrb[0].mxu0
      %v787 = vadd.f32 %v419, %v786
      %788 = vmatprep.mubr.f32.mxu0 0.0
      %789 = vmatmul.mubr.f32.gmra.mrb[0].mxu0 %v477
      %v790 = vpop.f32.mrb[0].mxu0
      %v791 = vadd.f32 %v424, %v790
      %v792 = vpop.f32.mrb[0].mxu0
      %v793 = vadd.f32 %v424, %v792
      %794 = vmatprep.mubr.f32.mxu0 0.0
      %795 = vmatmul.mubr.f32.gmra.mrb[0].mxu0 %v480
      %v796 = vpop.f32.mrb[0].mxu0
      %v797 = vadd.f32 %v429, %v796
      %v798 = vpop.f32.mrb[0].mxu0
      %v799 = vadd.f32 %v429, %v798
      %800 = vmatprep.mubr.f32.mxu0 0.0
      %801 = vmatmul.mubr.f32.gmra.mrb[0].mxu0 %v483
      %v802 = vpop.f32.mrb[0].mxu0
      %v803 = vadd.f32 %v434, %v802
      %v804 = vpop.f32.mrb[0].mxu0
      %v805 = vadd.f32 %v434, %v804
      %806 = vdwg.mxu0
      %807 = vmatprep.subr.mxu0 %v311
      %808 = vmatpush1.msra.mxu0 %v310
      %809 = vmatprep.subr.mxu0 %v320
      %810 = vmatpush1.msra.mxu0 %v319
      %811 = vmatprep.subr.mxu0 0.0
      %812 = vmatpush1.msra.mxu0 0.0
      %813 = vmatprep.subr.mxu0 0.0
      %814 = vmatpush1.msra.mxu0 0.0
      %815 = vmatprep.subr.mxu0 0.0
      %816 = vmatpush1.msra.mxu0 0.0
      %817 = vmatprep.subr.mxu0 0.0
      %818 = vmatpush1.msra.mxu0 0.0
      %819 = vmatprep.subr.mxu0 0.0
      %820 = vmatpush1.msra.mxu0 0.0
      %821 = vmatprep.subr.mxu0 0.0
      %822 = vmatpush1.msra.mxu0 0.0
      %823 = vmatprep.subr.mxu0 0.0
      %824 = vmatpush1.msra.mxu0 0.0
      %825 = vmatprep.subr.mxu0 0.0
      %826 = vmatpush1.msra.mxu0 0.0
      %827 = vmatprep.subr.mxu0 0.0
      %828 = vmatpush1.msra.mxu0 0.0
      %829 = vmatprep.subr.mxu0 0.0
      %830 = vmatpush1.msra.mxu0 0.0
      %831 = vmatprep.subr.mxu0 0.0
      %832 = vmatpush1.msra.mxu0 0.0
      %833 = vmatprep.subr.mxu0 0.0
      %834 = vmatpush1.msra.mxu0 0.0
      %835 = vmatprep.subr.mxu0 0.0
      %836 = vmatpush1.msra.mxu0 0.0
      %837 = vmatprep.subr.mxu0 0.0
      %838 = vmatpush1.msra.mxu0 0.0
      %839 = vmatprep.subr.mxu0 0.0
      %840 = vmatpush1.msra.mxu0 0.0
      %841 = vmatprep.subr.mxu0 0.0
      %842 = vmatpush1.msra.mxu0 0.0
      %843 = vmatprep.subr.mxu0 0.0
      %844 = vmatpush1.msra.mxu0 0.0
      %845 = vmatprep.subr.mxu0 0.0
      %846 = vmatpush1.msra.mxu0 0.0
      %847 = vmatprep.subr.mxu0 0.0
      %848 = vmatpush1.msra.mxu0 0.0
      %849 = vmatprep.subr.mxu0 0.0
      %850 = vmatpush1.msra.mxu0 0.0
      %851 = vmatprep.subr.mxu0 0.0
      %852 = vmatpush1.msra.mxu0 0.0
      %853 = vmatprep.subr.mxu0 0.0
      %854 = vmatpush1.msra.mxu0 0.0
      %855 = vmatprep.subr.mxu0 0.0
      %856 = vmatpush1.msra.mxu0 0.0
      %857 = vmatprep.subr.mxu0 0.0
      %858 = vmatpush1.msra.mxu0 0.0
      %859 = vmatprep.subr.mxu0 0.0
      %860 = vmatpush1.msra.mxu0 0.0
      %861 = vmatprep.subr.mxu0 0.0
      %862 = vmatpush1.msra.mxu0 0.0
      %863 = vmatprep.subr.mxu0 0.0
      %864 = vmatpush1.msra.mxu0 0.0
      %865 = vmatprep.subr.mxu0 0.0
      %866 = vmatpush1.msra.mxu0 0.0
      %867 = vmatprep.subr.mxu0 0.0
      %868 = vmatpush1.msra.mxu0 0.0
      %869 = vmatprep.subr.mxu0 0.0
      %870 = vmatpush1.msra.mxu0 0.0
      %871 = vmatprep.mubr.f32.mxu0 0.0
      %872 = vmatmul.mubr.f32.gmra.mrb[0].mxu0 %v438
      %v873 = vpop.f32.mrb[0].mxu0
      %v874 = vadd.f32 %v359, %v873
      %v875 = vpop.f32.mrb[0].mxu0
      %v876 = vadd.f32 %v359, %v875
      %877 = vmatprep.mubr.f32.mxu0 0.0
      %878 = vmatmul.mubr.f32.gmra.mrb[0].mxu0 %v441
      %v879 = vpop.f32.mrb[0].mxu0
      %v880 = vadd.f32 %v364, %v879
      %v881 = vpop.f32.mrb[0].mxu0
      %v882 = vadd.f32 %v364, %v881
      %883 = vmatprep.mubr.f32.mxu0 0.0
      %884 = vmatmul.mubr.f32.gmra.mrb[0].mxu0 %v444
      %v885 = vpop.f32.mrb[0].mxu0
      %v886 = vadd.f32 %v369, %v885
      %v887 = vpop.f32.mrb[0].mxu0
      %v888 = vadd.f32 %v369, %v887
      %889 = vmatprep.mubr.f32.mxu0 0.0
      %890 = vmatmul.mubr.f32.gmra.mrb[0].mxu0 %v447
      %v891 = vpop.f32.mrb[0].mxu0
      %v892 = vadd.f32 %v374, %v891
      %v893 = vpop.f32.mrb[0].mxu0
      %v894 = vadd.f32 %v374, %v893
      %895 = vmatprep.mubr.f32.mxu0 0.0
      %896 = vmatmul.mubr.f32.gmra.mrb[0].mxu0 %v450
      %v897 = vpop.f32.mrb[0].mxu0
      %v898 = vadd.f32 %v379, %v897
      %v899 = vpop.f32.mrb[0].mxu0
      %v900 = vadd.f32 %v379, %v899
      %901 = vmatprep.mubr.f32.mxu0 0.0
      %902 = vmatmul.mubr.f32.gmra.mrb[0].mxu0 %v453
      %v903 = vpop.f32.mrb[0].mxu0
      %v904 = vadd.f32 %v384, %v903
      %v905 = vpop.f32.mrb[0].mxu0
      %v906 = vadd.f32 %v384, %v905
      %907 = vmatprep.mubr.f32.mxu0 0.0
      %908 = vmatmul.mubr.f32.gmra.mrb[0].mxu0 %v456
      %v909 = vpop.f32.mrb[0].mxu0
      %v910 = vadd.f32 %v389, %v909
      %v911 = vpop.f32.mrb[0].mxu0
      %v912 = vadd.f32 %v389, %v911
      %913 = vmatprep.mubr.f32.mxu0 0.0
      %914 = vmatmul.mubr.f32.gmra.mrb[0].mxu0 %v459
      %v915 = vpop.f32.mrb[0].mxu0
      %v916 = vadd.f32 %v394, %v915
      %v917 = vpop.f32.mrb[0].mxu0
      %v918 = vadd.f32 %v394, %v917
      %919 = vmatprep.mubr.f32.mxu0 0.0
      %920 = vmatmul.mubr.f32.gmra.mrb[0].mxu0 %v462
      %v921 = vpop.f32.mrb[0].mxu0
      %v922 = vadd.f32 %v399, %v921
      %v923 = vpop.f32.mrb[0].mxu0
      %v924 = vadd.f32 %v399, %v923
      %925 = vmatprep.mubr.f32.mxu0 0.0
      %926 = vmatmul.mubr.f32.gmra.mrb[0].mxu0 %v465
      %v927 = vpop.f32.mrb[0].mxu0
      %v928 = vadd.f32 %v404, %v927
      %v929 = vpop.f32.mrb[0].mxu0
      %v930 = vadd.f32 %v404, %v929
      %931 = vmatprep.mubr.f32.mxu0 0.0
      %932 = vmatmul.mubr.f32.gmra.mrb[0].mxu0 %v468
      %v933 = vpop.f32.mrb[0].mxu0
      %v934 = vadd.f32 %v409, %v933
      %v935 = vpop.f32.mrb[0].mxu0
      %v936 = vadd.f32 %v409, %v935
      %937 = vmatprep.mubr.f32.mxu0 0.0
      %938 = vmatmul.mubr.f32.gmra.mrb[0].mxu0 %v471
      %v939 = vpop.f32.mrb[0].mxu0
      %v940 = vadd.f32 %v414, %v939
      %v941 = vpop.f32.mrb[0].mxu0
      %v942 = vadd.f32 %v414, %v941
      %943 = vmatprep.mubr.f32.mxu0 0.0
      %944 = vmatmul.mubr.f32.gmra.mrb[0].mxu0 %v474
      %v945 = vpop.f32.mrb[0].mxu0
      %v946 = vadd.f32 %v419, %v945
      %v947 = vpop.f32.mrb[0].mxu0
      %v948 = vadd.f32 %v419, %v947
      %949 = vmatprep.mubr.f32.mxu0 0.0
      %950 = vmatmul.mubr.f32.gmra.mrb[0].mxu0 %v477
      %v951 = vpop.f32.mrb[0].mxu0
      %v952 = vadd.f32 %v424, %v951
      %v953 = vpop.f32.mrb[0].mxu0
      %v954 = vadd.f32 %v424, %v953
      %955 = vmatprep.mubr.f32.mxu0 0.0
      %956 = vmatmul.mubr.f32.gmra.mrb[0].mxu0 %v480
      %v957 = vpop.f32.mrb[0].mxu0
      %v958 = vadd.f32 %v429, %v957
      %v959 = vpop.f32.mrb[0].mxu0
      %v960 = vadd.f32 %v429, %v959
      %961 = vmatprep.mubr.f32.mxu0 0.0
      %962 = vmatmul.mubr.f32.gmra.mrb[0].mxu0 %v483
      %v963 = vpop.f32.mrb[0].mxu0
      %v964 = vadd.f32 %v434, %v963
      %v965 = vpop.f32.mrb[0].mxu0
      %v966 = vadd.f32 %v434, %v965
      %967 = vdwg.mxu0
      %968 = vmatprep.subr.mxu0 %v313
      %969 = vmatpush1.msra.mxu0 %v312
      %970 = vmatprep.subr.mxu0 %v322
      %971 = vmatpush1.msra.mxu0 %v321
      %972 = vmatprep.subr.mxu0 0.0
      %973 = vmatpush1.msra.mxu0 0.0
      %974 = vmatprep.subr.mxu0 0.0
      %975 = vmatpush1.msra.mxu0 0.0
      %976 = vmatprep.subr.mxu0 0.0
      %977 = vmatpush1.msra.mxu0 0.0
      %978 = vmatprep.subr.mxu0 0.0
      %979 = vmatpush1.msra.mxu0 0.0
      %980 = vmatprep.subr.mxu0 0.0
      %981 = vmatpush1.msra.mxu0 0.0
      %982 = vmatprep.subr.mxu0 0.0
      %983 = vmatpush1.msra.mxu0 0.0
      %984 = vmatprep.subr.mxu0 0.0
      %985 = vmatpush1.msra.mxu0 0.0
      %986 = vmatprep.subr.mxu0 0.0
      %987 = vmatpush1.msra.mxu0 0.0
      %988 = vmatprep.subr.mxu0 0.0
      %989 = vmatpush1.msra.mxu0 0.0
      %990 = vmatprep.subr.mxu0 0.0
      %991 = vmatpush1.msra.mxu0 0.0
      %992 = vmatprep.subr.mxu0 0.0
      %993 = vmatpush1.msra.mxu0 0.0
      %994 = vmatprep.subr.mxu0 0.0
      %995 = vmatpush1.msra.mxu0 0.0
      %996 = vmatprep.subr.mxu0 0.0
      %997 = vmatpush1.msra.mxu0 0.0
      %998 = vmatprep.subr.mxu0 0.0
      %999 = vmatpush1.msra.mxu0 0.0
      %1000 = vmatprep.subr.mxu0 0.0
      %1001 = vmatpush1.msra.mxu0 0.0
      %1002 = vmatprep.subr.mxu0 0.0
      %1003 = vmatpush1.msra.mxu0 0.0
      %1004 = vmatprep.subr.mxu0 0.0
      %1005 = vmatpush1.msra.mxu0 0.0
      %1006 = vmatprep.subr.mxu0 0.0
      %1007 = vmatpush1.msra.mxu0 0.0
      %1008 = vmatprep.subr.mxu0 0.0
      %1009 = vmatpush1.msra.mxu0 0.0
      %1010 = vmatprep.subr.mxu0 0.0
      %1011 = vmatpush1.msra.mxu0 0.0
      %1012 = vmatprep.subr.mxu0 0.0
      %1013 = vmatpush1.msra.mxu0 0.0
      %1014 = vmatprep.subr.mxu0 0.0
      %1015 = vmatpush1.msra.mxu0 0.0
      %1016 = vmatprep.subr.mxu0 0.0
      %1017 = vmatpush1.msra.mxu0 0.0
      %1018 = vmatprep.subr.mxu0 0.0
      %1019 = vmatpush1.msra.mxu0 0.0
      %1020 = vmatprep.subr.mxu0 0.0
      %1021 = vmatpush1.msra.mxu0 0.0
      %1022 = vmatprep.subr.mxu0 0.0
      %1023 = vmatpush1.msra.mxu0 0.0
      %1024 = vmatprep.subr.mxu0 0.0
      %1025 = vmatpush1.msra.mxu0 0.0
      %1026 = vmatprep.subr.mxu0 0.0
      %1027 = vmatpush1.msra.mxu0 0.0
      %1028 = vmatprep.subr.mxu0 0.0
      %1029 = vmatpush1.msra.mxu0 0.0
      %1030 = vmatprep.subr.mxu0 0.0
      %1031 = vmatpush1.msra.mxu0 0.0
      %1032 = vmatprep.mubr.f32.mxu0 0.0
      %1033 = vmatmul.mubr.f32.gmra.mrb[0].mxu0 %v438
      %v1034 = vpop.f32.mrb[0].mxu0
      %v1035 = vadd.f32 %v359, %v1034
      %v1036 = vpop.f32.mrb[0].mxu0
      %v1037 = vadd.f32 %v359, %v1036
      %1038 = vmatprep.mubr.f32.mxu0 0.0
      %1039 = vmatmul.mubr.f32.gmra.mrb[0].mxu0 %v441
      %v1040 = vpop.f32.mrb[0].mxu0
      %v1041 = vadd.f32 %v364, %v1040
      %v1042 = vpop.f32.mrb[0].mxu0
      %v1043 = vadd.f32 %v364, %v1042
      %1044 = vmatprep.mubr.f32.mxu0 0.0
      %1045 = vmatmul.mubr.f32.gmra.mrb[0].mxu0 %v444
      %v1046 = vpop.f32.mrb[0].mxu0
      %v1047 = vadd.f32 %v369, %v1046
      %v1048 = vpop.f32.mrb[0].mxu0
      %v1049 = vadd.f32 %v369, %v1048
      %1050 = vmatprep.mubr.f32.mxu0 0.0
      %1051 = vmatmul.mubr.f32.gmra.mrb[0].mxu0 %v447
      %v1052 = vpop.f32.mrb[0].mxu0
      %v1053 = vadd.f32 %v374, %v1052
      %v1054 = vpop.f32.mrb[0].mxu0
      %v1055 = vadd.f32 %v374, %v1054
      %1056 = vmatprep.mubr.f32.mxu0 0.0
      %1057 = vmatmul.mubr.f32.gmra.mrb[0].mxu0 %v450
      %v1058 = vpop.f32.mrb[0].mxu0
      %v1059 = vadd.f32 %v379, %v1058
      %v1060 = vpop.f32.mrb[0].mxu0
      %v1061 = vadd.f32 %v379, %v1060
      %1062 = vmatprep.mubr.f32.mxu0 0.0
      %1063 = vmatmul.mubr.f32.gmra.mrb[0].mxu0 %v453
      %v1064 = vpop.f32.mrb[0].mxu0
      %v1065 = vadd.f32 %v384, %v1064
      %v1066 = vpop.f32.mrb[0].mxu0
      %v1067 = vadd.f32 %v384, %v1066
      %1068 = vmatprep.mubr.f32.mxu0 0.0
      %1069 = vmatmul.mubr.f32.gmra.mrb[0].mxu0 %v456
      %v1070 = vpop.f32.mrb[0].mxu0
      %v1071 = vadd.f32 %v389, %v1070
      %v1072 = vpop.f32.mrb[0].mxu0
      %v1073 = vadd.f32 %v389, %v1072
      %1074 = vmatprep.mubr.f32.mxu0 0.0
      %1075 = vmatmul.mubr.f32.gmra.mrb[0].mxu0 %v459
      %v1076 = vpop.f32.mrb[0].mxu0
      %v1077 = vadd.f32 %v394, %v1076
      %v1078 = vpop.f32.mrb[0].mxu0
      %v1079 = vadd.f32 %v394, %v1078
      %1080 = vmatprep.mubr.f32.mxu0 0.0
      %1081 = vmatmul.mubr.f32.gmra.mrb[0].mxu0 %v462
      %v1082 = vpop.f32.mrb[0].mxu0
      %v1083 = vadd.f32 %v399, %v1082
      %v1084 = vpop.f32.mrb[0].mxu0
      %v1085 = vadd.f32 %v399, %v1084
      %1086 = vmatprep.mubr.f32.mxu0 0.0
      %1087 = vmatmul.mubr.f32.gmra.mrb[0].mxu0 %v465
      %v1088 = vpop.f32.mrb[0].mxu0
      %v1089 = vadd.f32 %v404, %v1088
      %v1090 = vpop.f32.mrb[0].mxu0
      %v1091 = vadd.f32 %v404, %v1090
      %1092 = vmatprep.mubr.f32.mxu0 0.0
      %1093 = vmatmul.mubr.f32.gmra.mrb[0].mxu0 %v468
      %v1094 = vpop.f32.mrb[0].mxu0
      %v1095 = vadd.f32 %v409, %v1094
      %v1096 = vpop.f32.mrb[0].mxu0
      %v1097 = vadd.f32 %v409, %v1096
      %1098 = vmatprep.mubr.f32.mxu0 0.0
      %1099 = vmatmul.mubr.f32.gmra.mrb[0].mxu0 %v471
      %v1100 = vpop.f32.mrb[0].mxu0
      %v1101 = vadd.f32 %v414, %v1100
      %v1102 = vpop.f32.mrb[0].mxu0
      %v1103 = vadd.f32 %v414, %v1102
      %1104 = vmatprep.mubr.f32.mxu0 0.0
      %1105 = vmatmul.mubr.f32.gmra.mrb[0].mxu0 %v474
      %v1106 = vpop.f32.mrb[0].mxu0
      %v1107 = vadd.f32 %v419, %v1106
      %v1108 = vpop.f32.mrb[0].mxu0
      %v1109 = vadd.f32 %v419, %v1108
      %1110 = vmatprep.mubr.f32.mxu0 0.0
      %1111 = vmatmul.mubr.f32.gmra.mrb[0].mxu0 %v477
      %v1112 = vpop.f32.mrb[0].mxu0
      %v1113 = vadd.f32 %v424, %v1112
      %v1114 = vpop.f32.mrb[0].mxu0
      %v1115 = vadd.f32 %v424, %v1114
      %1116 = vmatprep.mubr.f32.mxu0 0.0
      %1117 = vmatmul.mubr.f32.gmra.mrb[0].mxu0 %v480
      %v1118 = vpop.f32.mrb[0].mxu0
      %v1119 = vadd.f32 %v429, %v1118
      %v1120 = vpop.f32.mrb[0].mxu0
      %v1121 = vadd.f32 %v429, %v1120
      %1122 = vmatprep.mubr.f32.mxu0 0.0
      %1123 = vmatmul.mubr.f32.gmra.mrb[0].mxu0 %v483
      %v1124 = vpop.f32.mrb[0].mxu0
      %v1125 = vadd.f32 %v434, %v1124
      %v1126 = vpop.f32.mrb[0].mxu0
      %v1127 = vadd.f32 %v434, %v1126
      %1128 = vdwg.mxu0
      %1129 = vmatprep.subr.mxu0 0.0
      %1130 = vmatpush1.msra.mxu0 %v314
      %1131 = vmatprep.subr.mxu0 0.0
      %1132 = vmatpush1.msra.mxu0 %v323
      %1133 = vmatprep.subr.mxu0 0.0
      %1134 = vmatpush1.msra.mxu0 0.0
      %1135 = vmatprep.subr.mxu0 0.0
      %1136 = vmatpush1.msra.mxu0 0.0
      %1137 = vmatprep.subr.mxu0 0.0
      %1138 = vmatpush1.msra.mxu0 0.0
      %1139 = vmatprep.subr.mxu0 0.0
      %1140 = vmatpush1.msra.mxu0 0.0
      %1141 = vmatprep.subr.mxu0 0.0
      %1142 = vmatpush1.msra.mxu0 0.0
      %1143 = vmatprep.subr.mxu0 0.0
      %1144 = vmatpush1.msra.mxu0 0.0
      %1145 = vmatprep.subr.mxu0 0.0
      %1146 = vmatpush1.msra.mxu0 0.0
      %1147 = vmatprep.subr.mxu0 0.0
      %1148 = vmatpush1.msra.mxu0 0.0
      %1149 = vmatprep.subr.mxu0 0.0
      %1150 = vmatpush1.msra.mxu0 0.0
      %1151 = vmatprep.subr.mxu0 0.0
      %1152 = vmatpush1.msra.mxu0 0.0
      %1153 = vmatprep.subr.mxu0 0.0
      %1154 = vmatpush1.msra.mxu0 0.0
      %1155 = vmatprep.subr.mxu0 0.0
      %1156 = vmatpush1.msra.mxu0 0.0
      %1157 = vmatprep.subr.mxu0 0.0
      %1158 = vmatpush1.msra.mxu0 0.0
      %1159 = vmatprep.subr.mxu0 0.0
      %1160 = vmatpush1.msra.mxu0 0.0
      %1161 = vmatprep.subr.mxu0 0.0
      %1162 = vmatpush1.msra.mxu0 0.0
      %1163 = vmatprep.subr.mxu0 0.0
      %1164 = vmatpush1.msra.mxu0 0.0
      %1165 = vmatprep.subr.mxu0 0.0
      %1166 = vmatpush1.msra.mxu0 0.0
      %1167 = vmatprep.subr.mxu0 0.0
      %1168 = vmatpush1.msra.mxu0 0.0
      %1169 = vmatprep.subr.mxu0 0.0
      %1170 = vmatpush1.msra.mxu0 0.0
      %1171 = vmatprep.subr.mxu0 0.0
      %1172 = vmatpush1.msra.mxu0 0.0
      %1173 = vmatprep.subr.mxu0 0.0
      %1174 = vmatpush1.msra.mxu0 0.0
      %1175 = vmatprep.subr.mxu0 0.0
      %1176 = vmatpush1.msra.mxu0 0.0
      %1177 = vmatprep.subr.mxu0 0.0
      %1178 = vmatpush1.msra.mxu0 0.0
      %1179 = vmatprep.subr.mxu0 0.0
      %1180 = vmatpush1.msra.mxu0 0.0
      %1181 = vmatprep.subr.mxu0 0.0
      %1182 = vmatpush1.msra.mxu0 0.0
      %1183 = vmatprep.subr.mxu0 0.0
      %1184 = vmatpush1.msra.mxu0 0.0
      %1185 = vmatprep.subr.mxu0 0.0
      %1186 = vmatpush1.msra.mxu0 0.0
      %1187 = vmatprep.subr.mxu0 0.0
      %1188 = vmatpush1.msra.mxu0 0.0
      %1189 = vmatprep.subr.mxu0 0.0
      %1190 = vmatpush1.msra.mxu0 0.0
      %1191 = vmatprep.subr.mxu0 0.0
      %1192 = vmatpush1.msra.mxu0 0.0
      %1193 = vmatprep.mubr.f32.mxu0 0.0
      %1194 = vmatmul.mubr.f32.gmra.mrb[0].mxu0 %v438
      %v1195 = vpop.f32.mrb[0].mxu0
      %v1196 = vadd.f32 %v359, %v1195
      %v1197 = vpop.f32.mrb[0].mxu0
      %1198 = vmatprep.mubr.f32.mxu0 0.0
      %1199 = vmatmul.mubr.f32.gmra.mrb[0].mxu0 %v441
      %v1200 = vpop.f32.mrb[0].mxu0
      %v1201 = vadd.f32 %v364, %v1200
      %v1202 = vpop.f32.mrb[0].mxu0
      %1203 = vmatprep.mubr.f32.mxu0 0.0
      %1204 = vmatmul.mubr.f32.gmra.mrb[0].mxu0 %v444
      %v1205 = vpop.f32.mrb[0].mxu0
      %v1206 = vadd.f32 %v369, %v1205
      %v1207 = vpop.f32.mrb[0].mxu0
      %1208 = vmatprep.mubr.f32.mxu0 0.0
      %1209 = vmatmul.mubr.f32.gmra.mrb[0].mxu0 %v447
      %v1210 = vpop.f32.mrb[0].mxu0
      %v1211 = vadd.f32 %v374, %v1210
      %v1212 = vpop.f32.mrb[0].mxu0
      %1213 = vmatprep.mubr.f32.mxu0 0.0
      %1214 = vmatmul.mubr.f32.gmra.mrb[0].mxu0 %v450
      %v1215 = vpop.f32.mrb[0].mxu0
      %v1216 = vadd.f32 %v379, %v1215
      %v1217 = vpop.f32.mrb[0].mxu0
      %1218 = vmatprep.mubr.f32.mxu0 0.0
      %1219 = vmatmul.mubr.f32.gmra.mrb[0].mxu0 %v453
      %v1220 = vpop.f32.mrb[0].mxu0
      %v1221 = vadd.f32 %v384, %v1220
      %v1222 = vpop.f32.mrb[0].mxu0
      %1223 = vmatprep.mubr.f32.mxu0 0.0
      %1224 = vmatmul.mubr.f32.gmra.mrb[0].mxu0 %v456
      %v1225 = vpop.f32.mrb[0].mxu0
      %v1226 = vadd.f32 %v389, %v1225
      %v1227 = vpop.f32.mrb[0].mxu0
      %1228 = vmatprep.mubr.f32.mxu0 0.0
      %1229 = vmatmul.mubr.f32.gmra.mrb[0].mxu0 %v459
      %v1230 = vpop.f32.mrb[0].mxu0
      %v1231 = vadd.f32 %v394, %v1230
      %v1232 = vpop.f32.mrb[0].mxu0
      %1233 = vmatprep.mubr.f32.mxu0 0.0
      %1234 = vmatmul.mubr.f32.gmra.mrb[0].mxu0 %v462
      %v1235 = vpop.f32.mrb[0].mxu0
      %v1236 = vadd.f32 %v399, %v1235
      %v1237 = vpop.f32.mrb[0].mxu0
      %1238 = vmatprep.mubr.f32.mxu0 0.0
      %1239 = vmatmul.mubr.f32.gmra.mrb[0].mxu0 %v465
      %v1240 = vpop.f32.mrb[0].mxu0
      %v1241 = vadd.f32 %v404, %v1240
      %v1242 = vpop.f32.mrb[0].mxu0
      %1243 = vmatprep.mubr.f32.mxu0 0.0
      %1244 = vmatmul.mubr.f32.gmra.mrb[0].mxu0 %v468
      %v1245 = vpop.f32.mrb[0].mxu0
      %v1246 = vadd.f32 %v409, %v1245
      %v1247 = vpop.f32.mrb[0].mxu0
      %1248 = vmatprep.mubr.f32.mxu0 0.0
      %1249 = vmatmul.mubr.f32.gmra.mrb[0].mxu0 %v471
      %v1250 = vpop.f32.mrb[0].mxu0
      %v1251 = vadd.f32 %v414, %v1250
      %v1252 = vpop.f32.mrb[0].mxu0
      %1253 = vmatprep.mubr.f32.mxu0 0.0
      %1254 = vmatmul.mubr.f32.gmra.mrb[0].mxu0 %v474
      %v1255 = vpop.f32.mrb[0].mxu0
      %v1256 = vadd.f32 %v419, %v1255
      %v1257 = vpop.f32.mrb[0].mxu0
      %1258 = vmatprep.mubr.f32.mxu0 0.0
      %1259 = vmatmul.mubr.f32.gmra.mrb[0].mxu0 %v477
      %v1260 = vpop.f32.mrb[0].mxu0
      %v1261 = vadd.f32 %v424, %v1260
      %v1262 = vpop.f32.mrb[0].mxu0
      %1263 = vmatprep.mubr.f32.mxu0 0.0
      %1264 = vmatmul.mubr.f32.gmra.mrb[0].mxu0 %v480
      %v1265 = vpop.f32.mrb[0].mxu0
      %v1266 = vadd.f32 %v429, %v1265
      %v1267 = vpop.f32.mrb[0].mxu0
      %1268 = vmatprep.mubr.f32.mxu0 0.0
      %1269 = vmatmul.mubr.f32.gmra.mrb[0].mxu0 %v483
      %v1270 = vpop.f32.mrb[0].mxu0
      %v1271 = vadd.f32 %v434, %v1270
      %v1272 = vpop.f32.mrb[0].mxu0
      %1273 = vdwg.mxu0
      %v1274 = vmax.f32 %v552, 0.0
      %v1275 = vmax.f32 %v554, 0.0
      %v1276 = vmax.f32 %v713, 0.0
      %v1277 = vmax.f32 %v715, 0.0
      %v1278 = vmax.f32 %v874, 0.0
      %v1279 = vmax.f32 %v876, 0.0
      %v1280 = vmax.f32 %v1035, 0.0
      %v1281 = vmax.f32 %v1037, 0.0
      %v1282 = vmax.f32 %v1196, 0.0
      %v1283 = vmax.f32 %v558, 0.0
      %v1284 = vmax.f32 %v560, 0.0
      %v1285 = vmax.f32 %v719, 0.0
      %v1286 = vmax.f32 %v721, 0.0
      %v1287 = vmax.f32 %v880, 0.0
      %v1288 = vmax.f32 %v882, 0.0
      %v1289 = vmax.f32 %v1041, 0.0
      %v1290 = vmax.f32 %v1043, 0.0
      %v1291 = vmax.f32 %v1201, 0.0
      %v1292 = vmax.f32 %v564, 0.0
      %v1293 = vmax.f32 %v566, 0.0
      %v1294 = vmax.f32 %v725, 0.0
      %v1295 = vmax.f32 %v727, 0.0
      %v1296 = vmax.f32 %v886, 0.0
      %v1297 = vmax.f32 %v888, 0.0
      %v1298 = vmax.f32 %v1047, 0.0
      %v1299 = vmax.f32 %v1049, 0.0
      %v1300 = vmax.f32 %v1206, 0.0
      %v1301 = vmax.f32 %v570, 0.0
      %v1302 = vmax.f32 %v572, 0.0
      %v1303 = vmax.f32 %v731, 0.0
      %v1304 = vmax.f32 %v733, 0.0
      %v1305 = vmax.f32 %v892, 0.0
      %v1306 = vmax.f32 %v894, 0.0
      %v1307 = vmax.f32 %v1053, 0.0
      %v1308 = vmax.f32 %v1055, 0.0
      %v1309 = vmax.f32 %v1211, 0.0
      %v1310 = vmax.f32 %v576, 0.0
      %v1311 = vmax.f32 %v578, 0.0
      %v1312 = vmax.f32 %v737, 0.0
      %v1313 = vmax.f32 %v739, 0.0
      %v1314 = vmax.f32 %v898, 0.0
      %v1315 = vmax.f32 %v900, 0.0
      %v1316 = vmax.f32 %v1059, 0.0
      %v1317 = vmax.f32 %v1061, 0.0
      %v1318 = vmax.f32 %v1216, 0.0
      %v1319 = vmax.f32 %v582, 0.0
      %v1320 = vmax.f32 %v584, 0.0
      %v1321 = vmax.f32 %v743, 0.0
      %v1322 = vmax.f32 %v745, 0.0
      %v1323 = vmax.f32 %v904, 0.0
      %v1324 = vmax.f32 %v906, 0.0
      %v1325 = vmax.f32 %v1065, 0.0
      %v1326 = vmax.f32 %v1067, 0.0
      %v1327 = vmax.f32 %v1221, 0.0
      %v1328 = vmax.f32 %v588, 0.0
      %v1329 = vmax.f32 %v590, 0.0
      %v1330 = vmax.f32 %v749, 0.0
      %v1331 = vmax.f32 %v751, 0.0
      %v1332 = vmax.f32 %v910, 0.0
      %v1333 = vmax.f32 %v912, 0.0
      %v1334 = vmax.f32 %v1071, 0.0
      %v1335 = vmax.f32 %v1073, 0.0
      %v1336 = vmax.f32 %v1226, 0.0
      %v1337 = vmax.f32 %v594, 0.0
      %v1338 = vmax.f32 %v596, 0.0
      %v1339 = vmax.f32 %v755, 0.0
      %v1340 = vmax.f32 %v757, 0.0
      %v1341 = vmax.f32 %v916, 0.0
      %v1342 = vmax.f32 %v918, 0.0
      %v1343 = vmax.f32 %v1077, 0.0
      %v1344 = vmax.f32 %v1079, 0.0
      %v1345 = vmax.f32 %v1231, 0.0
      %v1346 = vmax.f32 %v600, 0.0
      %v1347 = vmax.f32 %v602, 0.0
      %v1348 = vmax.f32 %v761, 0.0
      %v1349 = vmax.f32 %v763, 0.0
      %v1350 = vmax.f32 %v922, 0.0
      %v1351 = vmax.f32 %v924, 0.0
      %v1352 = vmax.f32 %v1083, 0.0
      %v1353 = vmax.f32 %v1085, 0.0
      %v1354 = vmax.f32 %v1236, 0.0
      %v1355 = vmax.f32 %v606, 0.0
      %v1356 = vmax.f32 %v608, 0.0
      %v1357 = vmax.f32 %v767, 0.0
      %v1358 = vmax.f32 %v769, 0.0
      %v1359 = vmax.f32 %v928, 0.0
      %v1360 = vmax.f32 %v930, 0.0
      %v1361 = vmax.f32 %v1089, 0.0
      %v1362 = vmax.f32 %v1091, 0.0
      %v1363 = vmax.f32 %v1241, 0.0
      %v1364 = vmax.f32 %v612, 0.0
      %v1365 = vmax.f32 %v614, 0.0
      %v1366 = vmax.f32 %v773, 0.0
      %v1367 = vmax.f32 %v775, 0.0
      %v1368 = vmax.f32 %v934, 0.0
      %v1369 = vmax.f32 %v936, 0.0
      %v1370 = vmax.f32 %v1095, 0.0
      %v1371 = vmax.f32 %v1097, 0.0
      %v1372 = vmax.f32 %v1246, 0.0
      %v1373 = vmax.f32 %v618, 0.0
      %v1374 = vmax.f32 %v620, 0.0
      %v1375 = vmax.f32 %v779, 0.0
      %v1376 = vmax.f32 %v781, 0.0
      %v1377 = vmax.f32 %v940, 0.0
      %v1378 = vmax.f32 %v942, 0.0
      %v1379 = vmax.f32 %v1101, 0.0
      %v1380 = vmax.f32 %v1103, 0.0
      %v1381 = vmax.f32 %v1251, 0.0
      %v1382 = vmax.f32 %v624, 0.0
      %v1383 = vmax.f32 %v626, 0.0
      %v1384 = vmax.f32 %v785, 0.0
      %v1385 = vmax.f32 %v787, 0.0
      %v1386 = vmax.f32 %v946, 0.0
      %v1387 = vmax.f32 %v948, 0.0
      %v1388 = vmax.f32 %v1107, 0.0
      %v1389 = vmax.f32 %v1109, 0.0
      %v1390 = vmax.f32 %v1256, 0.0
      %v1391 = vmax.f32 %v630, 0.0
      %v1392 = vmax.f32 %v632, 0.0
      %v1393 = vmax.f32 %v791, 0.0
      %v1394 = vmax.f32 %v793, 0.0
      %v1395 = vmax.f32 %v952, 0.0
      %v1396 = vmax.f32 %v954, 0.0
      %v1397 = vmax.f32 %v1113, 0.0
      %v1398 = vmax.f32 %v1115, 0.0
      %v1399 = vmax.f32 %v1261, 0.0
      %v1400 = vmax.f32 %v636, 0.0
      %v1401 = vmax.f32 %v638, 0.0
      %v1402 = vmax.f32 %v797, 0.0
      %v1403 = vmax.f32 %v799, 0.0
      %v1404 = vmax.f32 %v958, 0.0
      %v1405 = vmax.f32 %v960, 0.0
      %v1406 = vmax.f32 %v1119, 0.0
      %v1407 = vmax.f32 %v1121, 0.0
      %v1408 = vmax.f32 %v1266, 0.0
      %v1409 = vmax.f32 %v642, 0.0
      %v1410 = vmax.f32 %v644, 0.0
      %v1411 = vmax.f32 %v803, 0.0
      %v1412 = vmax.f32 %v805, 0.0
      %v1413 = vmax.f32 %v964, 0.0
      %v1414 = vmax.f32 %v966, 0.0
      %v1415 = vmax.f32 %v1125, 0.0
      %v1416 = vmax.f32 %v1127, 0.0
      %v1417 = vmax.f32 %v1271, 0.0
      %v1418 = vld [vmem:[%s289] sm:$0xff]
      %v1419 = vld [vmem:[%s289 + $0x8] sm:$0xff]
      %v1420 = vld [vmem:[%s289 + $0x10] sm:$0xff]
      %v1421 = vld [vmem:[%s289 + $0x18] sm:$0xff]
      %v1422 = vld [vmem:[%s289 + $0x20] sm:$0xff]
      %v1423 = vld [vmem:[%s289 + $0x28] sm:$0xff]
      %v1424 = vld [vmem:[%s289 + $0x30] sm:$0xff]
      %v1425 = vld [vmem:[%s289 + $0x38] sm:$0xff]
      %v1426 = vld [vmem:[%s289 + $0x40] sm:$0xff]
      %v1427 = vld [vmem:[%s289 + $0x48] sm:$0xff]
      %v1428 = vld [vmem:[%s289 + $0x50] sm:$0xff]
      %v1429 = vld [vmem:[%s289 + $0x58] sm:$0xff]
      %v1430 = vld [vmem:[%s289 + $0x60] sm:$0xff]
      %v1431 = vld [vmem:[%s289 + $0x68] sm:$0xff]
      %v1432 = vld [vmem:[%s289 + $0x70] sm:$0xff]
      %v1433 = vld [vmem:[%s289 + $0x78] sm:$0xff]
      %v1434 = vld [vmem:[%s294] sm:$0xff]
      %v1435 = vld [vmem:[%s294 + $0x8] sm:$0xff]
      %v1436 = vld [vmem:[%s294 + $0x10] sm:$0xff]
      %v1437 = vld [vmem:[%s294 + $0x18] sm:$0xff]
      %v1438 = vld [vmem:[%s294 + $0x20] sm:$0xf]
      %v1444 = vcombine.high %v1434, %v1434
      %v1445 = vcombine.high %v1435, %v1435
      %v1446 = vcombine.high %v1436, %v1436
      %v1447 = vcombine.high %v1437, %v1437
      %vm1448 = vcmask 31744
      %v1450 = vsel %vm1448, %v1418, 0
      %v1453 = vsel %vm1448, %v1419, 0
      %v1456 = vsel %vm1448, %v1420, 0
      %v1459 = vsel %vm1448, %v1421, 0
      %v1462 = vsel %vm1448, %v1422, 0
      %v1465 = vsel %vm1448, %v1423, 0
      %v1468 = vsel %vm1448, %v1424, 0
      %v1471 = vsel %vm1448, %v1425, 0
      %v1474 = vsel %vm1448, %v1426, 0
      %v1477 = vsel %vm1448, %v1427, 0
      %v1480 = vsel %vm1448, %v1428, 0
      %v1483 = vsel %vm1448, %v1429, 0
      %v1486 = vsel %vm1448, %v1430, 0
      %v1489 = vsel %vm1448, %v1431, 0
      %v1492 = vsel %vm1448, %v1432, 0
      %v1495 = vsel %vm1448, %v1433, 0
      %vm1497 = vcmask 1043456
      %v1498 = vsel %vm1497, %v1434, 0
      %v1500 = vsel %vm1497, %v1444, 0
      %v1502 = vsel %vm1497, %v1435, 0
      %v1504 = vsel %vm1497, %v1445, 0
      %v1506 = vsel %vm1497, %v1436, 0
      %v1508 = vsel %vm1497, %v1446, 0
      %v1510 = vsel %vm1497, %v1437, 0
      %v1512 = vsel %vm1497, %v1447, 0
      %v1514 = vsel %vm1497, %v1438, 0
      %1516 = vmatprep.subr.mxu0 %v1500
      %1517 = vmatpush1.msra.mxu0 %v1498
      %1518 = vmatprep.subr.mxu0 0.0
      %1519 = vmatpush1.msra.mxu0 0.0
      %1520 = vmatprep.subr.mxu0 0.0
      %1521 = vmatpush1.msra.mxu0 0.0
      %1522 = vmatprep.subr.mxu0 0.0
      %1523 = vmatpush1.msra.mxu0 0.0
      %1524 = vmatprep.subr.mxu0 0.0
      %1525 = vmatpush1.msra.mxu0 0.0
      %1526 = vmatprep.subr.mxu0 0.0
      %1527 = vmatpush1.msra.mxu0 0.0
      %1528 = vmatprep.subr.mxu0 0.0
      %1529 = vmatpush1.msra.mxu0 0.0
      %1530 = vmatprep.subr.mxu0 0.0
      %1531 = vmatpush1.msra.mxu0 0.0
      %1532 = vmatprep.subr.mxu0 0.0
      %1533 = vmatpush1.msra.mxu0 0.0
      %1534 = vmatprep.subr.mxu0 0.0
      %1535 = vmatpush1.msra.mxu0 0.0
      %1536 = vmatprep.subr.mxu0 0.0
      %1537 = vmatpush1.msra.mxu0 0.0
      %1538 = vmatprep.subr.mxu0 0.0
      %1539 = vmatpush1.msra.mxu0 0.0
      %1540 = vmatprep.subr.mxu0 0.0
      %1541 = vmatpush1.msra.mxu0 0.0
      %1542 = vmatprep.subr.mxu0 0.0
      %1543 = vmatpush1.msra.mxu0 0.0
      %1544 = vmatprep.subr.mxu0 0.0
      %1545 = vmatpush1.msra.mxu0 0.0
      %1546 = vmatprep.subr.mxu0 0.0
      %1547 = vmatpush1.msra.mxu0 0.0
      %1548 = vmatprep.subr.mxu0 0.0
      %1549 = vmatpush1.msra.mxu0 0.0
      %1550 = vmatprep.subr.mxu0 0.0
      %1551 = vmatpush1.msra.mxu0 0.0
      %1552 = vmatprep.subr.mxu0 0.0
      %1553 = vmatpush1.msra.mxu0 0.0
      %1554 = vmatprep.subr.mxu0 0.0
      %1555 = vmatpush1.msra.mxu0 0.0
      %1556 = vmatprep.subr.mxu0 0.0
      %1557 = vmatpush1.msra.mxu0 0.0
      %1558 = vmatprep.subr.mxu0 0.0
      %1559 = vmatpush1.msra.mxu0 0.0
      %1560 = vmatprep.subr.mxu0 0.0
      %1561 = vmatpush1.msra.mxu0 0.0
      %1562 = vmatprep.subr.mxu0 0.0
      %1563 = vmatpush1.msra.mxu0 0.0
      %1564 = vmatprep.subr.mxu0 0.0
      %1565 = vmatpush1.msra.mxu0 0.0
      %1566 = vmatprep.subr.mxu0 0.0
      %1567 = vmatpush1.msra.mxu0 0.0
      %1568 = vmatprep.subr.mxu0 0.0
      %1569 = vmatpush1.msra.mxu0 0.0
      %1570 = vmatprep.subr.mxu0 0.0
      %1571 = vmatpush1.msra.mxu0 0.0
      %1572 = vmatprep.subr.mxu0 0.0
      %1573 = vmatpush1.msra.mxu0 0.0
      %1574 = vmatprep.subr.mxu0 0.0
      %1575 = vmatpush1.msra.mxu0 0.0
      %1576 = vmatprep.subr.mxu0 0.0
      %1577 = vmatpush1.msra.mxu0 0.0
      %1578 = vmatprep.subr.mxu0 0.0
      %1579 = vmatpush1.msra.mxu0 0.0
      %1580 = vmatprep.mubr.f32.mxu0 0.0
      %1581 = vmatmul.mubr.f32.gmra.mrb[0].mxu0 %v1450
      %v1582 = vpop.f32.mrb[0].mxu0
      %v1583 = vadd.f32 0.0, %v1582
      %v1584 = vpop.f32.mrb[0].mxu0
      %v1585 = vadd.f32 0.0, %v1584
      %1586 = vmatprep.mubr.f32.mxu0 0.0
      %1587 = vmatmul.mubr.f32.gmra.mrb[0].mxu0 %v1453
      %v1588 = vpop.f32.mrb[0].mxu0
      %v1589 = vadd.f32 0.0, %v1588
      %v1590 = vpop.f32.mrb[0].mxu0
      %v1591 = vadd.f32 0.0, %v1590
      %1592 = vmatprep.mubr.f32.mxu0 0.0
      %1593 = vmatmul.mubr.f32.gmra.mrb[0].mxu0 %v1456
      %v1594 = vpop.f32.mrb[0].mxu0
      %v1595 = vadd.f32 0.0, %v1594
      %v1596 = vpop.f32.mrb[0].mxu0
      %v1597 = vadd.f32 0.0, %v1596
      %1598 = vmatprep.mubr.f32.mxu0 0.0
      %1599 = vmatmul.mubr.f32.gmra.mrb[0].mxu0 %v1459
      %v1600 = vpop.f32.mrb[0].mxu0
      %v1601 = vadd.f32 0.0, %v1600
      %v1602 = vpop.f32.mrb[0].mxu0
      %v1603 = vadd.f32 0.0, %v1602
      %1604 = vmatprep.mubr.f32.mxu0 0.0
      %1605 = vmatmul.mubr.f32.gmra.mrb[0].mxu0 %v1462
      %v1606 = vpop.f32.mrb[0].mxu0
      %v1607 = vadd.f32 0.0, %v1606
      %v1608 = vpop.f32.mrb[0].mxu0
      %v1609 = vadd.f32 0.0, %v1608
      %1610 = vmatprep.mubr.f32.mxu0 0.0
      %1611 = vmatmul.mubr.f32.gmra.mrb[0].mxu0 %v1465
      %v1612 = vpop.f32.mrb[0].mxu0
      %v1613 = vadd.f32 0.0, %v1612
      %v1614 = vpop.f32.mrb[0].mxu0
      %v1615 = vadd.f32 0.0, %v1614
      %1616 = vmatprep.mubr.f32.mxu0 0.0
      %1617 = vmatmul.mubr.f32.gmra.mrb[0].mxu0 %v1468
      %v1618 = vpop.f32.mrb[0].mxu0
      %v1619 = vadd.f32 0.0, %v1618
      %v1620 = vpop.f32.mrb[0].mxu0
      %v1621 = vadd.f32 0.0, %v1620
      %1622 = vmatprep.mubr.f32.mxu0 0.0
      %1623 = vmatmul.mubr.f32.gmra.mrb[0].mxu0 %v1471
      %v1624 = vpop.f32.mrb[0].mxu0
      %v1625 = vadd.f32 0.0, %v1624
      %v1626 = vpop.f32.mrb[0].mxu0
      %v1627 = vadd.f32 0.0, %v1626
      %1628 = vmatprep.mubr.f32.mxu0 0.0
      %1629 = vmatmul.mubr.f32.gmra.mrb[0].mxu0 %v1474
      %v1630 = vpop.f32.mrb[0].mxu0
      %v1631 = vadd.f32 0.0, %v1630
      %v1632 = vpop.f32.mrb[0].mxu0
      %v1633 = vadd.f32 0.0, %v1632
      %1634 = vmatprep.mubr.f32.mxu0 0.0
      %1635 = vmatmul.mubr.f32.gmra.mrb[0].mxu0 %v1477
      %v1636 = vpop.f32.mrb[0].mxu0
      %v1637 = vadd.f32 0.0, %v1636
      %v1638 = vpop.f32.mrb[0].mxu0
      %v1639 = vadd.f32 0.0, %v1638
      %1640 = vmatprep.mubr.f32.mxu0 0.0
      %1641 = vmatmul.mubr.f32.gmra.mrb[0].mxu0 %v1480
      %v1642 = vpop.f32.mrb[0].mxu0
      %v1643 = vadd.f32 0.0, %v1642
      %v1644 = vpop.f32.mrb[0].mxu0
      %v1645 = vadd.f32 0.0, %v1644
      %1646 = vmatprep.mubr.f32.mxu0 0.0
      %1647 = vmatmul.mubr.f32.gmra.mrb[0].mxu0 %v1483
      %v1648 = vpop.f32.mrb[0].mxu0
      %v1649 = vadd.f32 0.0, %v1648
      %v1650 = vpop.f32.mrb[0].mxu0
      %v1651 = vadd.f32 0.0, %v1650
      %1652 = vmatprep.mubr.f32.mxu0 0.0
      %1653 = vmatmul.mubr.f32.gmra.mrb[0].mxu0 %v1486
      %v1654 = vpop.f32.mrb[0].mxu0
      %v1655 = vadd.f32 0.0, %v1654
      %v1656 = vpop.f32.mrb[0].mxu0
      %v1657 = vadd.f32 0.0, %v1656
      %1658 = vmatprep.mubr.f32.mxu0 0.0
      %1659 = vmatmul.mubr.f32.gmra.mrb[0].mxu0 %v1489
      %v1660 = vpop.f32.mrb[0].mxu0
      %v1661 = vadd.f32 0.0, %v1660
      %v1662 = vpop.f32.mrb[0].mxu0
      %v1663 = vadd.f32 0.0, %v1662
      %1664 = vmatprep.mubr.f32.mxu0 0.0
      %1665 = vmatmul.mubr.f32.gmra.mrb[0].mxu0 %v1492
      %v1666 = vpop.f32.mrb[0].mxu0
      %v1667 = vadd.f32 0.0, %v1666
      %v1668 = vpop.f32.mrb[0].mxu0
      %v1669 = vadd.f32 0.0, %v1668
      %1670 = vmatprep.mubr.f32.mxu0 0.0
      %1671 = vmatmul.mubr.f32.gmra.mrb[0].mxu0 %v1495
      %v1672 = vpop.f32.mrb[0].mxu0
      %v1673 = vadd.f32 0.0, %v1672
      %v1674 = vpop.f32.mrb[0].mxu0
      %v1675 = vadd.f32 0.0, %v1674
      %1676 = vdwg.mxu0
      %1677 = vmatprep.subr.mxu0 %v1504
      %1678 = vmatpush1.msra.mxu0 %v1502
      %1679 = vmatprep.subr.mxu0 0.0
      %1680 = vmatpush1.msra.mxu0 0.0
      %1681 = vmatprep.subr.mxu0 0.0
      %1682 = vmatpush1.msra.mxu0 0.0
      %1683 = vmatprep.subr.mxu0 0.0
      %1684 = vmatpush1.msra.mxu0 0.0
      %1685 = vmatprep.subr.mxu0 0.0
      %1686 = vmatpush1.msra.mxu0 0.0
      %1687 = vmatprep.subr.mxu0 0.0
      %1688 = vmatpush1.msra.mxu0 0.0
      %1689 = vmatprep.subr.mxu0 0.0
      %1690 = vmatpush1.msra.mxu0 0.0
      %1691 = vmatprep.subr.mxu0 0.0
      %1692 = vmatpush1.msra.mxu0 0.0
      %1693 = vmatprep.subr.mxu0 0.0
      %1694 = vmatpush1.msra.mxu0 0.0
      %1695 = vmatprep.subr.mxu0 0.0
      %1696 = vmatpush1.msra.mxu0 0.0
      %1697 = vmatprep.subr.mxu0 0.0
      %1698 = vmatpush1.msra.mxu0 0.0
      %1699 = vmatprep.subr.mxu0 0.0
      %1700 = vmatpush1.msra.mxu0 0.0
      %1701 = vmatprep.subr.mxu0 0.0
      %1702 = vmatpush1.msra.mxu0 0.0
      %1703 = vmatprep.subr.mxu0 0.0
      %1704 = vmatpush1.msra.mxu0 0.0
      %1705 = vmatprep.subr.mxu0 0.0
      %1706 = vmatpush1.msra.mxu0 0.0
      %1707 = vmatprep.subr.mxu0 0.0
      %1708 = vmatpush1.msra.mxu0 0.0
      %1709 = vmatprep.subr.mxu0 0.0
      %1710 = vmatpush1.msra.mxu0 0.0
      %1711 = vmatprep.subr.mxu0 0.0
      %1712 = vmatpush1.msra.mxu0 0.0
      %1713 = vmatprep.subr.mxu0 0.0
      %1714 = vmatpush1.msra.mxu0 0.0
      %1715 = vmatprep.subr.mxu0 0.0
      %1716 = vmatpush1.msra.mxu0 0.0
      %1717 = vmatprep.subr.mxu0 0.0
      %1718 = vmatpush1.msra.mxu0 0.0
      %1719 = vmatprep.subr.mxu0 0.0
      %1720 = vmatpush1.msra.mxu0 0.0
      %1721 = vmatprep.subr.mxu0 0.0
      %1722 = vmatpush1.msra.mxu0 0.0
      %1723 = vmatprep.subr.mxu0 0.0
      %1724 = vmatpush1.msra.mxu0 0.0
      %1725 = vmatprep.subr.mxu0 0.0
      %1726 = vmatpush1.msra.mxu0 0.0
      %1727 = vmatprep.subr.mxu0 0.0
      %1728 = vmatpush1.msra.mxu0 0.0
      %1729 = vmatprep.subr.mxu0 0.0
      %1730 = vmatpush1.msra.mxu0 0.0
      %1731 = vmatprep.subr.mxu0 0.0
      %1732 = vmatpush1.msra.mxu0 0.0
      %1733 = vmatprep.subr.mxu0 0.0
      %1734 = vmatpush1.msra.mxu0 0.0
      %1735 = vmatprep.subr.mxu0 0.0
      %1736 = vmatpush1.msra.mxu0 0.0
      %1737 = vmatprep.subr.mxu0 0.0
      %1738 = vmatpush1.msra.mxu0 0.0
      %1739 = vmatprep.subr.mxu0 0.0
      %1740 = vmatpush1.msra.mxu0 0.0
      %1741 = vmatprep.mubr.f32.mxu0 0.0
      %1742 = vmatmul.mubr.f32.gmra.mrb[0].mxu0 %v1450
      %v1743 = vpop.f32.mrb[0].mxu0
      %v1744 = vadd.f32 0.0, %v1743
      %v1745 = vpop.f32.mrb[0].mxu0
      %v1746 = vadd.f32 0.0, %v1745
      %1747 = vmatprep.mubr.f32.mxu0 0.0
      %1748 = vmatmul.mubr.f32.gmra.mrb[0].mxu0 %v1453
      %v1749 = vpop.f32.mrb[0].mxu0
      %v1750 = vadd.f32 0.0, %v1749
      %v1751 = vpop.f32.mrb[0].mxu0
      %v1752 = vadd.f32 0.0, %v1751
      %1753 = vmatprep.mubr.f32.mxu0 0.0
      %1754 = vmatmul.mubr.f32.gmra.mrb[0].mxu0 %v1456
      %v1755 = vpop.f32.mrb[0].mxu0
      %v1756 = vadd.f32 0.0, %v1755
      %v1757 = vpop.f32.mrb[0].mxu0
      %v1758 = vadd.f32 0.0, %v1757
      %1759 = vmatprep.mubr.f32.mxu0 0.0
      %1760 = vmatmul.mubr.f32.gmra.mrb[0].mxu0 %v1459
      %v1761 = vpop.f32.mrb[0].mxu0
      %v1762 = vadd.f32 0.0, %v1761
      %v1763 = vpop.f32.mrb[0].mxu0
      %v1764 = vadd.f32 0.0, %v1763
      %1765 = vmatprep.mubr.f32.mxu0 0.0
      %1766 = vmatmul.mubr.f32.gmra.mrb[0].mxu0 %v1462
      %v1767 = vpop.f32.mrb[0].mxu0
      %v1768 = vadd.f32 0.0, %v1767
      %v1769 = vpop.f32.mrb[0].mxu0
      %v1770 = vadd.f32 0.0, %v1769
      %1771 = vmatprep.mubr.f32.mxu0 0.0
      %1772 = vmatmul.mubr.f32.gmra.mrb[0].mxu0 %v1465
      %v1773 = vpop.f32.mrb[0].mxu0
      %v1774 = vadd.f32 0.0, %v1773
      %v1775 = vpop.f32.mrb[0].mxu0
      %v1776 = vadd.f32 0.0, %v1775
      %1777 = vmatprep.mubr.f32.mxu0 0.0
      %1778 = vmatmul.mubr.f32.gmra.mrb[0].mxu0 %v1468
      %v1779 = vpop.f32.mrb[0].mxu0
      %v1780 = vadd.f32 0.0, %v1779
      %v1781 = vpop.f32.mrb[0].mxu0
      %v1782 = vadd.f32 0.0, %v1781
      %1783 = vmatprep.mubr.f32.mxu0 0.0
      %1784 = vmatmul.mubr.f32.gmra.mrb[0].mxu0 %v1471
      %v1785 = vpop.f32.mrb[0].mxu0
      %v1786 = vadd.f32 0.0, %v1785
      %v1787 = vpop.f32.mrb[0].mxu0
      %v1788 = vadd.f32 0.0, %v1787
      %1789 = vmatprep.mubr.f32.mxu0 0.0
      %1790 = vmatmul.mubr.f32.gmra.mrb[0].mxu0 %v1474
      %v1791 = vpop.f32.mrb[0].mxu0
      %v1792 = vadd.f32 0.0, %v1791
      %v1793 = vpop.f32.mrb[0].mxu0
      %v1794 = vadd.f32 0.0, %v1793
      %1795 = vmatprep.mubr.f32.mxu0 0.0
      %1796 = vmatmul.mubr.f32.gmra.mrb[0].mxu0 %v1477
      %v1797 = vpop.f32.mrb[0].mxu0
      %v1798 = vadd.f32 0.0, %v1797
      %v1799 = vpop.f32.mrb[0].mxu0
      %v1800 = vadd.f32 0.0, %v1799
      %1801 = vmatprep.mubr.f32.mxu0 0.0
      %1802 = vmatmul.mubr.f32.gmra.mrb[0].mxu0 %v1480
      %v1803 = vpop.f32.mrb[0].mxu0
      %v1804 = vadd.f32 0.0, %v1803
      %v1805 = vpop.f32.mrb[0].mxu0
      %v1806 = vadd.f32 0.0, %v1805
      %1807 = vmatprep.mubr.f32.mxu0 0.0
      %1808 = vmatmul.mubr.f32.gmra.mrb[0].mxu0 %v1483
      %v1809 = vpop.f32.mrb[0].mxu0
      %v1810 = vadd.f32 0.0, %v1809
      %v1811 = vpop.f32.mrb[0].mxu0
      %v1812 = vadd.f32 0.0, %v1811
      %1813 = vmatprep.mubr.f32.mxu0 0.0
      %1814 = vmatmul.mubr.f32.gmra.mrb[0].mxu0 %v1486
      %v1815 = vpop.f32.mrb[0].mxu0
      %v1816 = vadd.f32 0.0, %v1815
      %v1817 = vpop.f32.mrb[0].mxu0
      %v1818 = vadd.f32 0.0, %v1817
      %1819 = vmatprep.mubr.f32.mxu0 0.0
      %1820 = vmatmul.mubr.f32.gmra.mrb[0].mxu0 %v1489
      %v1821 = vpop.f32.mrb[0].mxu0
      %v1822 = vadd.f32 0.0, %v1821
      %v1823 = vpop.f32.mrb[0].mxu0
      %v1824 = vadd.f32 0.0, %v1823
      %1825 = vmatprep.mubr.f32.mxu0 0.0
      %1826 = vmatmul.mubr.f32.gmra.mrb[0].mxu0 %v1492
      %v1827 = vpop.f32.mrb[0].mxu0
      %v1828 = vadd.f32 0.0, %v1827
      %v1829 = vpop.f32.mrb[0].mxu0
      %v1830 = vadd.f32 0.0, %v1829
      %1831 = vmatprep.mubr.f32.mxu0 0.0
      %1832 = vmatmul.mubr.f32.gmra.mrb[0].mxu0 %v1495
      %v1833 = vpop.f32.mrb[0].mxu0
      %v1834 = vadd.f32 0.0, %v1833
      %v1835 = vpop.f32.mrb[0].mxu0
      %v1836 = vadd.f32 0.0, %v1835
      %1837 = vdwg.mxu0
      %1838 = vmatprep.subr.mxu0 %v1508
      %1839 = vmatpush1.msra.mxu0 %v1506
      %1840 = vmatprep.subr.mxu0 0.0
      %1841 = vmatpush1.msra.mxu0 0.0
      %1842 = vmatprep.subr.mxu0 0.0
      %1843 = vmatpush1.msra.mxu0 0.0
      %1844 = vmatprep.subr.mxu0 0.0
      %1845 = vmatpush1.msra.mxu0 0.0
      %1846 = vmatprep.subr.mxu0 0.0
      %1847 = vmatpush1.msra.mxu0 0.0
      %1848 = vmatprep.subr.mxu0 0.0
      %1849 = vmatpush1.msra.mxu0 0.0
      %1850 = vmatprep.subr.mxu0 0.0
      %1851 = vmatpush1.msra.mxu0 0.0
      %1852 = vmatprep.subr.mxu0 0.0
      %1853 = vmatpush1.msra.mxu0 0.0
      %1854 = vmatprep.subr.mxu0 0.0
      %1855 = vmatpush1.msra.mxu0 0.0
      %1856 = vmatprep.subr.mxu0 0.0
      %1857 = vmatpush1.msra.mxu0 0.0
      %1858 = vmatprep.subr.mxu0 0.0
      %1859 = vmatpush1.msra.mxu0 0.0
      %1860 = vmatprep.subr.mxu0 0.0
      %1861 = vmatpush1.msra.mxu0 0.0
      %1862 = vmatprep.subr.mxu0 0.0
      %1863 = vmatpush1.msra.mxu0 0.0
      %1864 = vmatprep.subr.mxu0 0.0
      %1865 = vmatpush1.msra.mxu0 0.0
      %1866 = vmatprep.subr.mxu0 0.0
      %1867 = vmatpush1.msra.mxu0 0.0
      %1868 = vmatprep.subr.mxu0 0.0
      %1869 = vmatpush1.msra.mxu0 0.0
      %1870 = vmatprep.subr.mxu0 0.0
      %1871 = vmatpush1.msra.mxu0 0.0
      %1872 = vmatprep.subr.mxu0 0.0
      %1873 = vmatpush1.msra.mxu0 0.0
      %1874 = vmatprep.subr.mxu0 0.0
      %1875 = vmatpush1.msra.mxu0 0.0
      %1876 = vmatprep.subr.mxu0 0.0
      %1877 = vmatpush1.msra.mxu0 0.0
      %1878 = vmatprep.subr.mxu0 0.0
      %1879 = vmatpush1.msra.mxu0 0.0
      %1880 = vmatprep.subr.mxu0 0.0
      %1881 = vmatpush1.msra.mxu0 0.0
      %1882 = vmatprep.subr.mxu0 0.0
      %1883 = vmatpush1.msra.mxu0 0.0
      %1884 = vmatprep.subr.mxu0 0.0
      %1885 = vmatpush1.msra.mxu0 0.0
      %1886 = vmatprep.subr.mxu0 0.0
      %1887 = vmatpush1.msra.mxu0 0.0
      %1888 = vmatprep.subr.mxu0 0.0
      %1889 = vmatpush1.msra.mxu0 0.0
      %1890 = vmatprep.subr.mxu0 0.0
      %1891 = vmatpush1.msra.mxu0 0.0
      %1892 = vmatprep.subr.mxu0 0.0
      %1893 = vmatpush1.msra.mxu0 0.0
      %1894 = vmatprep.subr.mxu0 0.0
      %1895 = vmatpush1.msra.mxu0 0.0
      %1896 = vmatprep.subr.mxu0 0.0
      %1897 = vmatpush1.msra.mxu0 0.0
      %1898 = vmatprep.subr.mxu0 0.0
      %1899 = vmatpush1.msra.mxu0 0.0
      %1900 = vmatprep.subr.mxu0 0.0
      %1901 = vmatpush1.msra.mxu0 0.0
      %1902 = vmatprep.mubr.f32.mxu0 0.0
      %1903 = vmatmul.mubr.f32.gmra.mrb[0].mxu0 %v1450
      %v1904 = vpop.f32.mrb[0].mxu0
      %v1905 = vadd.f32 0.0, %v1904
      %v1906 = vpop.f32.mrb[0].mxu0
      %v1907 = vadd.f32 0.0, %v1906
      %1908 = vmatprep.mubr.f32.mxu0 0.0
      %1909 = vmatmul.mubr.f32.gmra.mrb[0].mxu0 %v1453
      %v1910 = vpop.f32.mrb[0].mxu0
      %v1911 = vadd.f32 0.0, %v1910
      %v1912 = vpop.f32.mrb[0].mxu0
      %v1913 = vadd.f32 0.0, %v1912
      %1914 = vmatprep.mubr.f32.mxu0 0.0
      %1915 = vmatmul.mubr.f32.gmra.mrb[0].mxu0 %v1456
      %v1916 = vpop.f32.mrb[0].mxu0
      %v1917 = vadd.f32 0.0, %v1916
      %v1918 = vpop.f32.mrb[0].mxu0
      %v1919 = vadd.f32 0.0, %v1918
      %1920 = vmatprep.mubr.f32.mxu0 0.0
      %1921 = vmatmul.mubr.f32.gmra.mrb[0].mxu0 %v1459
      %v1922 = vpop.f32.mrb[0].mxu0
      %v1923 = vadd.f32 0.0, %v1922
      %v1924 = vpop.f32.mrb[0].mxu0
      %v1925 = vadd.f32 0.0, %v1924
      %1926 = vmatprep.mubr.f32.mxu0 0.0
      %1927 = vmatmul.mubr.f32.gmra.mrb[0].mxu0 %v1462
      %v1928 = vpop.f32.mrb[0].mxu0
      %v1929 = vadd.f32 0.0, %v1928
      %v1930 = vpop.f32.mrb[0].mxu0
      %v1931 = vadd.f32 0.0, %v1930
      %1932 = vmatprep.mubr.f32.mxu0 0.0
      %1933 = vmatmul.mubr.f32.gmra.mrb[0].mxu0 %v1465
      %v1934 = vpop.f32.mrb[0].mxu0
      %v1935 = vadd.f32 0.0, %v1934
      %v1936 = vpop.f32.mrb[0].mxu0
      %v1937 = vadd.f32 0.0, %v1936
      %1938 = vmatprep.mubr.f32.mxu0 0.0
      %1939 = vmatmul.mubr.f32.gmra.mrb[0].mxu0 %v1468
      %v1940 = vpop.f32.mrb[0].mxu0
      %v1941 = vadd.f32 0.0, %v1940
      %v1942 = vpop.f32.mrb[0].mxu0
      %v1943 = vadd.f32 0.0, %v1942
      %1944 = vmatprep.mubr.f32.mxu0 0.0
      %1945 = vmatmul.mubr.f32.gmra.mrb[0].mxu0 %v1471
      %v1946 = vpop.f32.mrb[0].mxu0
      %v1947 = vadd.f32 0.0, %v1946
      %v1948 = vpop.f32.mrb[0].mxu0
      %v1949 = vadd.f32 0.0, %v1948
      %1950 = vmatprep.mubr.f32.mxu0 0.0
      %1951 = vmatmul.mubr.f32.gmra.mrb[0].mxu0 %v1474
      %v1952 = vpop.f32.mrb[0].mxu0
      %v1953 = vadd.f32 0.0, %v1952
      %v1954 = vpop.f32.mrb[0].mxu0
      %v1955 = vadd.f32 0.0, %v1954
      %1956 = vmatprep.mubr.f32.mxu0 0.0
      %1957 = vmatmul.mubr.f32.gmra.mrb[0].mxu0 %v1477
      %v1958 = vpop.f32.mrb[0].mxu0
      %v1959 = vadd.f32 0.0, %v1958
      %v1960 = vpop.f32.mrb[0].mxu0
      %v1961 = vadd.f32 0.0, %v1960
      %1962 = vmatprep.mubr.f32.mxu0 0.0
      %1963 = vmatmul.mubr.f32.gmra.mrb[0].mxu0 %v1480
      %v1964 = vpop.f32.mrb[0].mxu0
      %v1965 = vadd.f32 0.0, %v1964
      %v1966 = vpop.f32.mrb[0].mxu0
      %v1967 = vadd.f32 0.0, %v1966
      %1968 = vmatprep.mubr.f32.mxu0 0.0
      %1969 = vmatmul.mubr.f32.gmra.mrb[0].mxu0 %v1483
      %v1970 = vpop.f32.mrb[0].mxu0
      %v1971 = vadd.f32 0.0, %v1970
      %v1972 = vpop.f32.mrb[0].mxu0
      %v1973 = vadd.f32 0.0, %v1972
      %1974 = vmatprep.mubr.f32.mxu0 0.0
      %1975 = vmatmul.mubr.f32.gmra.mrb[0].mxu0 %v1486
      %v1976 = vpop.f32.mrb[0].mxu0
      %v1977 = vadd.f32 0.0, %v1976
      %v1978 = vpop.f32.mrb[0].mxu0
      %v1979 = vadd.f32 0.0, %v1978
      %1980 = vmatprep.mubr.f32.mxu0 0.0
      %1981 = vmatmul.mubr.f32.gmra.mrb[0].mxu0 %v1489
      %v1982 = vpop.f32.mrb[0].mxu0
      %v1983 = vadd.f32 0.0, %v1982
      %v1984 = vpop.f32.mrb[0].mxu0
      %v1985 = vadd.f32 0.0, %v1984
      %1986 = vmatprep.mubr.f32.mxu0 0.0
      %1987 = vmatmul.mubr.f32.gmra.mrb[0].mxu0 %v1492
      %v1988 = vpop.f32.mrb[0].mxu0
      %v1989 = vadd.f32 0.0, %v1988
      %v1990 = vpop.f32.mrb[0].mxu0
      %v1991 = vadd.f32 0.0, %v1990
      %1992 = vmatprep.mubr.f32.mxu0 0.0
      %1993 = vmatmul.mubr.f32.gmra.mrb[0].mxu0 %v1495
      %v1994 = vpop.f32.mrb[0].mxu0
      %v1995 = vadd.f32 0.0, %v1994
      %v1996 = vpop.f32.mrb[0].mxu0
      %v1997 = vadd.f32 0.0, %v1996
      %1998 = vdwg.mxu0
      %1999 = vmatprep.subr.mxu0 %v1512
      %2000 = vmatpush1.msra.mxu0 %v1510
      %2001 = vmatprep.subr.mxu0 0.0
      %2002 = vmatpush1.msra.mxu0 0.0
      %2003 = vmatprep.subr.mxu0 0.0
      %2004 = vmatpush1.msra.mxu0 0.0
      %2005 = vmatprep.subr.mxu0 0.0
      %2006 = vmatpush1.msra.mxu0 0.0
      %2007 = vmatprep.subr.mxu0 0.0
      %2008 = vmatpush1.msra.mxu0 0.0
      %2009 = vmatprep.subr.mxu0 0.0
      %2010 = vmatpush1.msra.mxu0 0.0
      %2011 = vmatprep.subr.mxu0 0.0
      %2012 = vmatpush1.msra.mxu0 0.0
      %2013 = vmatprep.subr.mxu0 0.0
      %2014 = vmatpush1.msra.mxu0 0.0
      %2015 = vmatprep.subr.mxu0 0.0
      %2016 = vmatpush1.msra.mxu0 0.0
      %2017 = vmatprep.subr.mxu0 0.0
      %2018 = vmatpush1.msra.mxu0 0.0
      %2019 = vmatprep.subr.mxu0 0.0
      %2020 = vmatpush1.msra.mxu0 0.0
      %2021 = vmatprep.subr.mxu0 0.0
      %2022 = vmatpush1.msra.mxu0 0.0
      %2023 = vmatprep.subr.mxu0 0.0
      %2024 = vmatpush1.msra.mxu0 0.0
      %2025 = vmatprep.subr.mxu0 0.0
      %2026 = vmatpush1.msra.mxu0 0.0
      %2027 = vmatprep.subr.mxu0 0.0
      %2028 = vmatpush1.msra.mxu0 0.0
      %2029 = vmatprep.subr.mxu0 0.0
      %2030 = vmatpush1.msra.mxu0 0.0
      %2031 = vmatprep.subr.mxu0 0.0
      %2032 = vmatpush1.msra.mxu0 0.0
      %2033 = vmatprep.subr.mxu0 0.0
      %2034 = vmatpush1.msra.mxu0 0.0
      %2035 = vmatprep.subr.mxu0 0.0
      %2036 = vmatpush1.msra.mxu0 0.0
      %2037 = vmatprep.subr.mxu0 0.0
      %2038 = vmatpush1.msra.mxu0 0.0
      %2039 = vmatprep.subr.mxu0 0.0
      %2040 = vmatpush1.msra.mxu0 0.0
      %2041 = vmatprep.subr.mxu0 0.0
      %2042 = vmatpush1.msra.mxu0 0.0
      %2043 = vmatprep.subr.mxu0 0.0
      %2044 = vmatpush1.msra.mxu0 0.0
      %2045 = vmatprep.subr.mxu0 0.0
      %2046 = vmatpush1.msra.mxu0 0.0
      %2047 = vmatprep.subr.mxu0 0.0
      %2048 = vmatpush1.msra.mxu0 0.0
      %2049 = vmatprep.subr.mxu0 0.0
      %2050 = vmatpush1.msra.mxu0 0.0
      %2051 = vmatprep.subr.mxu0 0.0
      %2052 = vmatpush1.msra.mxu0 0.0
      %2053 = vmatprep.subr.mxu0 0.0
      %2054 = vmatpush1.msra.mxu0 0.0
      %2055 = vmatprep.subr.mxu0 0.0
      %2056 = vmatpush1.msra.mxu0 0.0
      %2057 = vmatprep.subr.mxu0 0.0
      %2058 = vmatpush1.msra.mxu0 0.0
      %2059 = vmatprep.subr.mxu0 0.0
      %2060 = vmatpush1.msra.mxu0 0.0
      %2061 = vmatprep.subr.mxu0 0.0
      %2062 = vmatpush1.msra.mxu0 0.0
      %2063 = vmatprep.mubr.f32.mxu0 0.0
      %2064 = vmatmul.mubr.f32.gmra.mrb[0].mxu0 %v1450
      %v2065 = vpop.f32.mrb[0].mxu0
      %v2066 = vadd.f32 0.0, %v2065
      %v2067 = vpop.f32.mrb[0].mxu0
      %v2068 = vadd.f32 0.0, %v2067
      %2069 = vmatprep.mubr.f32.mxu0 0.0
      %2070 = vmatmul.mubr.f32.gmra.mrb[0].mxu0 %v1453
      %v2071 = vpop.f32.mrb[0].mxu0
      %v2072 = vadd.f32 0.0, %v2071
      %v2073 = vpop.f32.mrb[0].mxu0
      %v2074 = vadd.f32 0.0, %v2073
      %2075 = vmatprep.mubr.f32.mxu0 0.0
      %2076 = vmatmul.mubr.f32.gmra.mrb[0].mxu0 %v1456
      %v2077 = vpop.f32.mrb[0].mxu0
      %v2078 = vadd.f32 0.0, %v2077
      %v2079 = vpop.f32.mrb[0].mxu0
      %v2080 = vadd.f32 0.0, %v2079
      %2081 = vmatprep.mubr.f32.mxu0 0.0
      %2082 = vmatmul.mubr.f32.gmra.mrb[0].mxu0 %v1459
      %v2083 = vpop.f32.mrb[0].mxu0
      %v2084 = vadd.f32 0.0, %v2083
      %v2085 = vpop.f32.mrb[0].mxu0
      %v2086 = vadd.f32 0.0, %v2085
      %2087 = vmatprep.mubr.f32.mxu0 0.0
      %2088 = vmatmul.mubr.f32.gmra.mrb[0].mxu0 %v1462
      %v2089 = vpop.f32.mrb[0].mxu0
      %v2090 = vadd.f32 0.0, %v2089
      %v2091 = vpop.f32.mrb[0].mxu0
      %v2092 = vadd.f32 0.0, %v2091
      %2093 = vmatprep.mubr.f32.mxu0 0.0
      %2094 = vmatmul.mubr.f32.gmra.mrb[0].mxu0 %v1465
      %v2095 = vpop.f32.mrb[0].mxu0
      %v2096 = vadd.f32 0.0, %v2095
      %v2097 = vpop.f32.mrb[0].mxu0
      %v2098 = vadd.f32 0.0, %v2097
      %2099 = vmatprep.mubr.f32.mxu0 0.0
      %2100 = vmatmul.mubr.f32.gmra.mrb[0].mxu0 %v1468
      %v2101 = vpop.f32.mrb[0].mxu0
      %v2102 = vadd.f32 0.0, %v2101
      %v2103 = vpop.f32.mrb[0].mxu0
      %v2104 = vadd.f32 0.0, %v2103
      %2105 = vmatprep.mubr.f32.mxu0 0.0
      %2106 = vmatmul.mubr.f32.gmra.mrb[0].mxu0 %v1471
      %v2107 = vpop.f32.mrb[0].mxu0
      %v2108 = vadd.f32 0.0, %v2107
      %v2109 = vpop.f32.mrb[0].mxu0
      %v2110 = vadd.f32 0.0, %v2109
      %2111 = vmatprep.mubr.f32.mxu0 0.0
      %2112 = vmatmul.mubr.f32.gmra.mrb[0].mxu0 %v1474
      %v2113 = vpop.f32.mrb[0].mxu0
      %v2114 = vadd.f32 0.0, %v2113
      %v2115 = vpop.f32.mrb[0].mxu0
      %v2116 = vadd.f32 0.0, %v2115
      %2117 = vmatprep.mubr.f32.mxu0 0.0
      %2118 = vmatmul.mubr.f32.gmra.mrb[0].mxu0 %v1477
      %v2119 = vpop.f32.mrb[0].mxu0
      %v2120 = vadd.f32 0.0, %v2119
      %v2121 = vpop.f32.mrb[0].mxu0
      %v2122 = vadd.f32 0.0, %v2121
      %2123 = vmatprep.mubr.f32.mxu0 0.0
      %2124 = vmatmul.mubr.f32.gmra.mrb[0].mxu0 %v1480
      %v2125 = vpop.f32.mrb[0].mxu0
      %v2126 = vadd.f32 0.0, %v2125
      %v2127 = vpop.f32.mrb[0].mxu0
      %v2128 = vadd.f32 0.0, %v2127
      %2129 = vmatprep.mubr.f32.mxu0 0.0
      %2130 = vmatmul.mubr.f32.gmra.mrb[0].mxu0 %v1483
      %v2131 = vpop.f32.mrb[0].mxu0
      %v2132 = vadd.f32 0.0, %v2131
      %v2133 = vpop.f32.mrb[0].mxu0
      %v2134 = vadd.f32 0.0, %v2133
      %2135 = vmatprep.mubr.f32.mxu0 0.0
      %2136 = vmatmul.mubr.f32.gmra.mrb[0].mxu0 %v1486
      %v2137 = vpop.f32.mrb[0].mxu0
      %v2138 = vadd.f32 0.0, %v2137
      %v2139 = vpop.f32.mrb[0].mxu0
      %v2140 = vadd.f32 0.0, %v2139
      %2141 = vmatprep.mubr.f32.mxu0 0.0
      %2142 = vmatmul.mubr.f32.gmra.mrb[0].mxu0 %v1489
      %v2143 = vpop.f32.mrb[0].mxu0
      %v2144 = vadd.f32 0.0, %v2143
      %v2145 = vpop.f32.mrb[0].mxu0
      %v2146 = vadd.f32 0.0, %v2145
      %2147 = vmatprep.mubr.f32.mxu0 0.0
      %2148 = vmatmul.mubr.f32.gmra.mrb[0].mxu0 %v1492
      %v2149 = vpop.f32.mrb[0].mxu0
      %v2150 = vadd.f32 0.0, %v2149
      %v2151 = vpop.f32.mrb[0].mxu0
      %v2152 = vadd.f32 0.0, %v2151
      %2153 = vmatprep.mubr.f32.mxu0 0.0
      %2154 = vmatmul.mubr.f32.gmra.mrb[0].mxu0 %v1495
      %v2155 = vpop.f32.mrb[0].mxu0
      %v2156 = vadd.f32 0.0, %v2155
      %v2157 = vpop.f32.mrb[0].mxu0
      %v2158 = vadd.f32 0.0, %v2157
      %2159 = vdwg.mxu0
      %2160 = vmatprep.subr.mxu0 0.0
      %2161 = vmatpush1.msra.mxu0 %v1514
      %2162 = vmatprep.subr.mxu0 0.0
      %2163 = vmatpush1.msra.mxu0 0.0
      %2164 = vmatprep.subr.mxu0 0.0
      %2165 = vmatpush1.msra.mxu0 0.0
      %2166 = vmatprep.subr.mxu0 0.0
      %2167 = vmatpush1.msra.mxu0 0.0
      %2168 = vmatprep.subr.mxu0 0.0
      %2169 = vmatpush1.msra.mxu0 0.0
      %2170 = vmatprep.subr.mxu0 0.0
      %2171 = vmatpush1.msra.mxu0 0.0
      %2172 = vmatprep.subr.mxu0 0.0
      %2173 = vmatpush1.msra.mxu0 0.0
      %2174 = vmatprep.subr.mxu0 0.0
      %2175 = vmatpush1.msra.mxu0 0.0
      %2176 = vmatprep.subr.mxu0 0.0
      %2177 = vmatpush1.msra.mxu0 0.0
      %2178 = vmatprep.subr.mxu0 0.0
      %2179 = vmatpush1.msra.mxu0 0.0
      %2180 = vmatprep.subr.mxu0 0.0
      %2181 = vmatpush1.msra.mxu0 0.0
      %2182 = vmatprep.subr.mxu0 0.0
      %2183 = vmatpush1.msra.mxu0 0.0
      %2184 = vmatprep.subr.mxu0 0.0
      %2185 = vmatpush1.msra.mxu0 0.0
      %2186 = vmatprep.subr.mxu0 0.0
      %2187 = vmatpush1.msra.mxu0 0.0
      %2188 = vmatprep.subr.mxu0 0.0
      %2189 = vmatpush1.msra.mxu0 0.0
      %2190 = vmatprep.subr.mxu0 0.0
      %2191 = vmatpush1.msra.mxu0 0.0
      %2192 = vmatprep.subr.mxu0 0.0
      %2193 = vmatpush1.msra.mxu0 0.0
      %2194 = vmatprep.subr.mxu0 0.0
      %2195 = vmatpush1.msra.mxu0 0.0
      %2196 = vmatprep.subr.mxu0 0.0
      %2197 = vmatpush1.msra.mxu0 0.0
      %2198 = vmatprep.subr.mxu0 0.0
      %2199 = vmatpush1.msra.mxu0 0.0
      %2200 = vmatprep.subr.mxu0 0.0
      %2201 = vmatpush1.msra.mxu0 0.0
      %2202 = vmatprep.subr.mxu0 0.0
      %2203 = vmatpush1.msra.mxu0 0.0
      %2204 = vmatprep.subr.mxu0 0.0
      %2205 = vmatpush1.msra.mxu0 0.0
      %2206 = vmatprep.subr.mxu0 0.0
      %2207 = vmatpush1.msra.mxu0 0.0
      %2208 = vmatprep.subr.mxu0 0.0
      %2209 = vmatpush1.msra.mxu0 0.0
      %2210 = vmatprep.subr.mxu0 0.0
      %2211 = vmatpush1.msra.mxu0 0.0
      %2212 = vmatprep.subr.mxu0 0.0
      %2213 = vmatpush1.msra.mxu0 0.0
      %2214 = vmatprep.subr.mxu0 0.0
      %2215 = vmatpush1.msra.mxu0 0.0
      %2216 = vmatprep.subr.mxu0 0.0
      %2217 = vmatpush1.msra.mxu0 0.0
      %2218 = vmatprep.subr.mxu0 0.0
      %2219 = vmatpush1.msra.mxu0 0.0
      %2220 = vmatprep.subr.mxu0 0.0
      %2221 = vmatpush1.msra.mxu0 0.0
      %2222 = vmatprep.subr.mxu0 0.0
      %2223 = vmatpush1.msra.mxu0 0.0
      %2224 = vmatprep.mubr.f32.mxu0 0.0
      %2225 = vmatmul.mubr.f32.gmra.mrb[0].mxu0 %v1450
      %v2226 = vpop.f32.mrb[0].mxu0
      %v2227 = vadd.f32 0.0, %v2226
      %v2228 = vpop.f32.mrb[0].mxu0
      %2229 = vmatprep.mubr.f32.mxu0 0.0
      %2230 = vmatmul.mubr.f32.gmra.mrb[0].mxu0 %v1453
      %v2231 = vpop.f32.mrb[0].mxu0
      %v2232 = vadd.f32 0.0, %v2231
      %v2233 = vpop.f32.mrb[0].mxu0
      %2234 = vmatprep.mubr.f32.mxu0 0.0
      %2235 = vmatmul.mubr.f32.gmra.mrb[0].mxu0 %v1456
      %v2236 = vpop.f32.mrb[0].mxu0
      %v2237 = vadd.f32 0.0, %v2236
      %v2238 = vpop.f32.mrb[0].mxu0
      %2239 = vmatprep.mubr.f32.mxu0 0.0
      %2240 = vmatmul.mubr.f32.gmra.mrb[0].mxu0 %v1459
      %v2241 = vpop.f32.mrb[0].mxu0
      %v2242 = vadd.f32 0.0, %v2241
      %v2243 = vpop.f32.mrb[0].mxu0
      %2244 = vmatprep.mubr.f32.mxu0 0.0
      %2245 = vmatmul.mubr.f32.gmra.mrb[0].mxu0 %v1462
      %v2246 = vpop.f32.mrb[0].mxu0
      %v2247 = vadd.f32 0.0, %v2246
      %v2248 = vpop.f32.mrb[0].mxu0
      %2249 = vmatprep.mubr.f32.mxu0 0.0
      %2250 = vmatmul.mubr.f32.gmra.mrb[0].mxu0 %v1465
      %v2251 = vpop.f32.mrb[0].mxu0
      %v2252 = vadd.f32 0.0, %v2251
      %v2253 = vpop.f32.mrb[0].mxu0
      %2254 = vmatprep.mubr.f32.mxu0 0.0
      %2255 = vmatmul.mubr.f32.gmra.mrb[0].mxu0 %v1468
      %v2256 = vpop.f32.mrb[0].mxu0
      %v2257 = vadd.f32 0.0, %v2256
      %v2258 = vpop.f32.mrb[0].mxu0
      %2259 = vmatprep.mubr.f32.mxu0 0.0
      %2260 = vmatmul.mubr.f32.gmra.mrb[0].mxu0 %v1471
      %v2261 = vpop.f32.mrb[0].mxu0
      %v2262 = vadd.f32 0.0, %v2261
      %v2263 = vpop.f32.mrb[0].mxu0
      %2264 = vmatprep.mubr.f32.mxu0 0.0
      %2265 = vmatmul.mubr.f32.gmra.mrb[0].mxu0 %v1474
      %v2266 = vpop.f32.mrb[0].mxu0
      %v2267 = vadd.f32 0.0, %v2266
      %v2268 = vpop.f32.mrb[0].mxu0
      %2269 = vmatprep.mubr.f32.mxu0 0.0
      %2270 = vmatmul.mubr.f32.gmra.mrb[0].mxu0 %v1477
      %v2271 = vpop.f32.mrb[0].mxu0
      %v2272 = vadd.f32 0.0, %v2271
      %v2273 = vpop.f32.mrb[0].mxu0
      %2274 = vmatprep.mubr.f32.mxu0 0.0
      %2275 = vmatmul.mubr.f32.gmra.mrb[0].mxu0 %v1480
      %v2276 = vpop.f32.mrb[0].mxu0
      %v2277 = vadd.f32 0.0, %v2276
      %v2278 = vpop.f32.mrb[0].mxu0
      %2279 = vmatprep.mubr.f32.mxu0 0.0
      %2280 = vmatmul.mubr.f32.gmra.mrb[0].mxu0 %v1483
      %v2281 = vpop.f32.mrb[0].mxu0
      %v2282 = vadd.f32 0.0, %v2281
      %v2283 = vpop.f32.mrb[0].mxu0
      %2284 = vmatprep.mubr.f32.mxu0 0.0
      %2285 = vmatmul.mubr.f32.gmra.mrb[0].mxu0 %v1486
      %v2286 = vpop.f32.mrb[0].mxu0
      %v2287 = vadd.f32 0.0, %v2286
      %v2288 = vpop.f32.mrb[0].mxu0
      %2289 = vmatprep.mubr.f32.mxu0 0.0
      %2290 = vmatmul.mubr.f32.gmra.mrb[0].mxu0 %v1489
      %v2291 = vpop.f32.mrb[0].mxu0
      %v2292 = vadd.f32 0.0, %v2291
      %v2293 = vpop.f32.mrb[0].mxu0
      %2294 = vmatprep.mubr.f32.mxu0 0.0
      %2295 = vmatmul.mubr.f32.gmra.mrb[0].mxu0 %v1492
      %v2296 = vpop.f32.mrb[0].mxu0
      %v2297 = vadd.f32 0.0, %v2296
      %v2298 = vpop.f32.mrb[0].mxu0
      %2299 = vmatprep.mubr.f32.mxu0 0.0
      %2300 = vmatmul.mubr.f32.gmra.mrb[0].mxu0 %v1495
      %v2301 = vpop.f32.mrb[0].mxu0
      %v2302 = vadd.f32 0.0, %v2301
      %v2303 = vpop.f32.mrb[0].mxu0
      %2304 = vdwg.mxu0
      %v2305 = vmul.f32 %v1274, %v1583
      %v2306 = vmul.f32 %v1275, %v1585
      %v2307 = vmul.f32 %v1276, %v1744
      %v2308 = vmul.f32 %v1277, %v1746
      %v2309 = vmul.f32 %v1278, %v1905
      %v2310 = vmul.f32 %v1279, %v1907
      %v2311 = vmul.f32 %v1280, %v2066
      %v2312 = vmul.f32 %v1281, %v2068
      %v2313 = vmul.f32 %v1282, %v2227
      %v2314 = vmul.f32 %v1283, %v1589
      %v2315 = vmul.f32 %v1284, %v1591
      %v2316 = vmul.f32 %v1285, %v1750
      %v2317 = vmul.f32 %v1286, %v1752
      %v2318 = vmul.f32 %v1287, %v1911
      %v2319 = vmul.f32 %v1288, %v1913
      %v2320 = vmul.f32 %v1289, %v2072
      %v2321 = vmul.f32 %v1290, %v2074
      %v2322 = vmul.f32 %v1291, %v2232
      %v2323 = vmul.f32 %v1292, %v1595
      %v2324 = vmul.f32 %v1293, %v1597
      %v2325 = vmul.f32 %v1294, %v1756
      %v2326 = vmul.f32 %v1295, %v1758
      %v2327 = vmul.f32 %v1296, %v1917
      %v2328 = vmul.f32 %v1297, %v1919
      %v2329 = vmul.f32 %v1298, %v2078
      %v2330 = vmul.f32 %v1299, %v2080
      %v2331 = vmul.f32 %v1300, %v2237
      %v2332 = vmul.f32 %v1301, %v1601
      %v2333 = vmul.f32 %v1302, %v1603
      %v2334 = vmul.f32 %v1303, %v1762
      %v2335 = vmul.f32 %v1304, %v1764
      %v2336 = vmul.f32 %v1305, %v1923
      %v2337 = vmul.f32 %v1306, %v1925
      %v2338 = vmul.f32 %v1307, %v2084
      %v2339 = vmul.f32 %v1308, %v2086
      %v2340 = vmul.f32 %v1309, %v2242
      %v2341 = vmul.f32 %v1310, %v1607
      %v2342 = vmul.f32 %v1311, %v1609
      %v2343 = vmul.f32 %v1312, %v1768
      %v2344 = vmul.f32 %v1313, %v1770
      %v2345 = vmul.f32 %v1314, %v1929
      %v2346 = vmul.f32 %v1315, %v1931
      %v2347 = vmul.f32 %v1316, %v2090
      %v2348 = vmul.f32 %v1317, %v2092
      %v2349 = vmul.f32 %v1318, %v2247
      %v2350 = vmul.f32 %v1319, %v1613
      %v2351 = vmul.f32 %v1320, %v1615
      %v2352 = vmul.f32 %v1321, %v1774
      %v2353 = vmul.f32 %v1322, %v1776
      %v2354 = vmul.f32 %v1323, %v1935
      %v2355 = vmul.f32 %v1324, %v1937
      %v2356 = vmul.f32 %v1325, %v2096
      %v2357 = vmul.f32 %v1326, %v2098
      %v2358 = vmul.f32 %v1327, %v2252
      %v2359 = vmul.f32 %v1328, %v1619
      %v2360 = vmul.f32 %v1329, %v1621
      %v2361 = vmul.f32 %v1330, %v1780
      %v2362 = vmul.f32 %v1331, %v1782
      %v2363 = vmul.f32 %v1332, %v1941
      %v2364 = vmul.f32 %v1333, %v1943
      %v2365 = vmul.f32 %v1334, %v2102
      %v2366 = vmul.f32 %v1335, %v2104
      %v2367 = vmul.f32 %v1336, %v2257
      %v2368 = vmul.f32 %v1337, %v1625
      %v2369 = vmul.f32 %v1338, %v1627
      %v2370 = vmul.f32 %v1339, %v1786
      %v2371 = vmul.f32 %v1340, %v1788
      %v2372 = vmul.f32 %v1341, %v1947
      %v2373 = vmul.f32 %v1342, %v1949
      %v2374 = vmul.f32 %v1343, %v2108
      %v2375 = vmul.f32 %v1344, %v2110
      %v2376 = vmul.f32 %v1345, %v2262
      %v2377 = vmul.f32 %v1346, %v1631
      %v2378 = vmul.f32 %v1347, %v1633
      %v2379 = vmul.f32 %v1348, %v1792
      %v2380 = vmul.f32 %v1349, %v1794
      %v2381 = vmul.f32 %v1350, %v1953
      %v2382 = vmul.f32 %v1351, %v1955
      %v2383 = vmul.f32 %v1352, %v2114
      %v2384 = vmul.f32 %v1353, %v2116
      %v2385 = vmul.f32 %v1354, %v2267
      %v2386 = vmul.f32 %v1355, %v1637
      %v2387 = vmul.f32 %v1356, %v1639
      %v2388 = vmul.f32 %v1357, %v1798
      %v2389 = vmul.f32 %v1358, %v1800
      %v2390 = vmul.f32 %v1359, %v1959
      %v2391 = vmul.f32 %v1360, %v1961
      %v2392 = vmul.f32 %v1361, %v2120
      %v2393 = vmul.f32 %v1362, %v2122
      %v2394 = vmul.f32 %v1363, %v2272
      %v2395 = vmul.f32 %v1364, %v1643
      %v2396 = vmul.f32 %v1365, %v1645
      %v2397 = vmul.f32 %v1366, %v1804
      %v2398 = vmul.f32 %v1367, %v1806
      %v2399 = vmul.f32 %v1368, %v1965
      %v2400 = vmul.f32 %v1369, %v1967
      %v2401 = vmul.f32 %v1370, %v2126
      %v2402 = vmul.f32 %v1371, %v2128
      %v2403 = vmul.f32 %v1372, %v2277
      %v2404 = vmul.f32 %v1373, %v1649
      %v2405 = vmul.f32 %v1374, %v1651
      %v2406 = vmul.f32 %v1375, %v1810
      %v2407 = vmul.f32 %v1376, %v1812
      %v2408 = vmul.f32 %v1377, %v1971
      %v2409 = vmul.f32 %v1378, %v1973
      %v2410 = vmul.f32 %v1379, %v2132
      %v2411 = vmul.f32 %v1380, %v2134
      %v2412 = vmul.f32 %v1381, %v2282
      %v2413 = vmul.f32 %v1382, %v1655
      %v2414 = vmul.f32 %v1383, %v1657
      %v2415 = vmul.f32 %v1384, %v1816
      %v2416 = vmul.f32 %v1385, %v1818
      %v2417 = vmul.f32 %v1386, %v1977
      %v2418 = vmul.f32 %v1387, %v1979
      %v2419 = vmul.f32 %v1388, %v2138
      %v2420 = vmul.f32 %v1389, %v2140
      %v2421 = vmul.f32 %v1390, %v2287
      %v2422 = vmul.f32 %v1391, %v1661
      %v2423 = vmul.f32 %v1392, %v1663
      %v2424 = vmul.f32 %v1393, %v1822
      %v2425 = vmul.f32 %v1394, %v1824
      %v2426 = vmul.f32 %v1395, %v1983
      %v2427 = vmul.f32 %v1396, %v1985
      %v2428 = vmul.f32 %v1397, %v2144
      %v2429 = vmul.f32 %v1398, %v2146
      %v2430 = vmul.f32 %v1399, %v2292
      %v2431 = vmul.f32 %v1400, %v1667
      %v2432 = vmul.f32 %v1401, %v1669
      %v2433 = vmul.f32 %v1402, %v1828
      %v2434 = vmul.f32 %v1403, %v1830
      %v2435 = vmul.f32 %v1404, %v1989
      %v2436 = vmul.f32 %v1405, %v1991
      %v2437 = vmul.f32 %v1406, %v2150
      %v2438 = vmul.f32 %v1407, %v2152
      %v2439 = vmul.f32 %v1408, %v2297
      %v2440 = vmul.f32 %v1409, %v1673
      %v2441 = vmul.f32 %v1410, %v1675
      %v2442 = vmul.f32 %v1411, %v1834
      %v2443 = vmul.f32 %v1412, %v1836
      %v2444 = vmul.f32 %v1413, %v1995
      %v2445 = vmul.f32 %v1414, %v1997
      %v2446 = vmul.f32 %v1415, %v2156
      %v2447 = vmul.f32 %v1416, %v2158
      %v2448 = vmul.f32 %v1417, %v2302
      %2449 = vst [vmem:[%s304] sm:$0xff] %v2305
      %2450 = vst [vmem:[%s304 + $0x8] sm:$0xff] %v2306
      %2451 = vst [vmem:[%s304 + $0x10] sm:$0xff] %v2307
      %2452 = vst [vmem:[%s304 + $0x18] sm:$0xff] %v2308
      %2453 = vst [vmem:[%s304 + $0x20] sm:$0xff] %v2309
      %2454 = vst [vmem:[%s304 + $0x28] sm:$0xff] %v2310
      %2455 = vst [vmem:[%s304 + $0x30] sm:$0xff] %v2311
      %2456 = vst [vmem:[%s304 + $0x38] sm:$0xff] %v2312
      %2457 = vst [vmem:[%s304 + $0x40] sm:$0xff] %v2313
      %2458 = vst [vmem:[%s304 + $0x48] sm:$0xff] %v2314
      %2459 = vst [vmem:[%s304 + $0x50] sm:$0xff] %v2315
      %2460 = vst [vmem:[%s304 + $0x58] sm:$0xff] %v2316
      %2461 = vst [vmem:[%s304 + $0x60] sm:$0xff] %v2317
      %2462 = vst [vmem:[%s304 + $0x68] sm:$0xff] %v2318
      %2463 = vst [vmem:[%s304 + $0x70] sm:$0xff] %v2319
      %2464 = vst [vmem:[%s304 + $0x78] sm:$0xff] %v2320
      %2465 = vst [vmem:[%s304 + $0x80] sm:$0xff] %v2321
      %2466 = vst [vmem:[%s304 + $0x88] sm:$0xff] %v2322
      %2467 = vst [vmem:[%s304 + $0x90] sm:$0xff] %v2323
      %2468 = vst [vmem:[%s304 + $0x98] sm:$0xff] %v2324
      %2469 = vst [vmem:[%s304 + $0xa0] sm:$0xff] %v2325
      %2470 = vst [vmem:[%s304 + $0xa8] sm:$0xff] %v2326
      %2471 = vst [vmem:[%s304 + $0xb0] sm:$0xff] %v2327
      %2472 = vst [vmem:[%s304 + $0xb8] sm:$0xff] %v2328
      %2473 = vst [vmem:[%s304 + $0xc0] sm:$0xff] %v2329
      %2474 = vst [vmem:[%s304 + $0xc8] sm:$0xff] %v2330
      %2475 = vst [vmem:[%s304 + $0xd0] sm:$0xff] %v2331
      %2476 = vst [vmem:[%s304 + $0xd8] sm:$0xff] %v2332
      %2477 = vst [vmem:[%s304 + $0xe0] sm:$0xff] %v2333
      %2478 = vst [vmem:[%s304 + $0xe8] sm:$0xff] %v2334
      %2479 = vst [vmem:[%s304 + $0xf0] sm:$0xff] %v2335
      %2480 = vst [vmem:[%s304 + $0xf8] sm:$0xff] %v2336
      %2481 = vst [vmem:[%s304 + $0x100] sm:$0xff] %v2337
      %2482 = vst [vmem:[%s304 + $0x108] sm:$0xff] %v2338
      %2483 = vst [vmem:[%s304 + $0x110] sm:$0xff] %v2339
      %2484 = vst [vmem:[%s304 + $0x118] sm:$0xff] %v2340
      %2485 = vst [vmem:[%s304 + $0x120] sm:$0xff] %v2341
      %2486 = vst [vmem:[%s304 + $0x128] sm:$0xff] %v2342
      %2487 = vst [vmem:[%s304 + $0x130] sm:$0xff] %v2343
      %2488 = vst [vmem:[%s304 + $0x138] sm:$0xff] %v2344
      %2489 = vst [vmem:[%s304 + $0x140] sm:$0xff] %v2345
      %2490 = vst [vmem:[%s304 + $0x148] sm:$0xff] %v2346
      %2491 = vst [vmem:[%s304 + $0x150] sm:$0xff] %v2347
      %2492 = vst [vmem:[%s304 + $0x158] sm:$0xff] %v2348
      %2493 = vst [vmem:[%s304 + $0x160] sm:$0xff] %v2349
      %2494 = vst [vmem:[%s304 + $0x168] sm:$0xff] %v2350
      %2495 = vst [vmem:[%s304 + $0x170] sm:$0xff] %v2351
      %2496 = vst [vmem:[%s304 + $0x178] sm:$0xff] %v2352
      %2497 = vst [vmem:[%s304 + $0x180] sm:$0xff] %v2353
      %2498 = vst [vmem:[%s304 + $0x188] sm:$0xff] %v2354
      %2499 = vst [vmem:[%s304 + $0x190] sm:$0xff] %v2355
      %2500 = vst [vmem:[%s304 + $0x198] sm:$0xff] %v2356
      %2501 = vst [vmem:[%s304 + $0x1a0] sm:$0xff] %v2357
      %2502 = vst [vmem:[%s304 + $0x1a8] sm:$0xff] %v2358
      %2503 = vst [vmem:[%s304 + $0x1b0] sm:$0xff] %v2359
      %2504 = vst [vmem:[%s304 + $0x1b8] sm:$0xff] %v2360
      %2505 = vst [vmem:[%s304 + $0x1c0] sm:$0xff] %v2361
      %2506 = vst [vmem:[%s304 + $0x1c8] sm:$0xff] %v2362
      %2507 = vst [vmem:[%s304 + $0x1d0] sm:$0xff] %v2363
      %2508 = vst [vmem:[%s304 + $0x1d8] sm:$0xff] %v2364
      %2509 = vst [vmem:[%s304 + $0x1e0] sm:$0xff] %v2365
      %2510 = vst [vmem:[%s304 + $0x1e8] sm:$0xff] %v2366
      %2511 = vst [vmem:[%s304 + $0x1f0] sm:$0xff] %v2367
      %2512 = vst [vmem:[%s304 + $0x1f8] sm:$0xff] %v2368
      %2513 = vst [vmem:[%s304 + $0x200] sm:$0xff] %v2369
      %2514 = vst [vmem:[%s304 + $0x208] sm:$0xff] %v2370
      %2515 = vst [vmem:[%s304 + $0x210] sm:$0xff] %v2371
      %2516 = vst [vmem:[%s304 + $0x218] sm:$0xff] %v2372
      %2517 = vst [vmem:[%s304 + $0x220] sm:$0xff] %v2373
      %2518 = vst [vmem:[%s304 + $0x228] sm:$0xff] %v2374
      %2519 = vst [vmem:[%s304 + $0x230] sm:$0xff] %v2375
      %2520 = vst [vmem:[%s304 + $0x238] sm:$0xff] %v2376
      %2521 = vst [vmem:[%s304 + $0x240] sm:$0xff] %v2377
      %2522 = vst [vmem:[%s304 + $0x248] sm:$0xff] %v2378
      %2523 = vst [vmem:[%s304 + $0x250] sm:$0xff] %v2379
      %2524 = vst [vmem:[%s304 + $0x258] sm:$0xff] %v2380
      %2525 = vst [vmem:[%s304 + $0x260] sm:$0xff] %v2381
      %2526 = vst [vmem:[%s304 + $0x268] sm:$0xff] %v2382
      %2527 = vst [vmem:[%s304 + $0x270] sm:$0xff] %v2383
      %2528 = vst [vmem:[%s304 + $0x278] sm:$0xff] %v2384
      %2529 = vst [vmem:[%s304 + $0x280] sm:$0xff] %v2385
      %2530 = vst [vmem:[%s304 + $0x288] sm:$0xff] %v2386
      %2531 = vst [vmem:[%s304 + $0x290] sm:$0xff] %v2387
      %2532 = vst [vmem:[%s304 + $0x298] sm:$0xff] %v2388
      %2533 = vst [vmem:[%s304 + $0x2a0] sm:$0xff] %v2389
      %2534 = vst [vmem:[%s304 + $0x2a8] sm:$0xff] %v2390
      %2535 = vst [vmem:[%s304 + $0x2b0] sm:$0xff] %v2391
      %2536 = vst [vmem:[%s304 + $0x2b8] sm:$0xff] %v2392
      %2537 = vst [vmem:[%s304 + $0x2c0] sm:$0xff] %v2393
      %2538 = vst [vmem:[%s304 + $0x2c8] sm:$0xff] %v2394
      %2539 = vst [vmem:[%s304 + $0x2d0] sm:$0xff] %v2395
      %2540 = vst [vmem:[%s304 + $0x2d8] sm:$0xff] %v2396
      %2541 = vst [vmem:[%s304 + $0x2e0] sm:$0xff] %v2397
      %2542 = vst [vmem:[%s304 + $0x2e8] sm:$0xff] %v2398
      %2543 = vst [vmem:[%s304 + $0x2f0] sm:$0xff] %v2399
      %2544 = vst [vmem:[%s304 + $0x2f8] sm:$0xff] %v2400
      %2545 = vst [vmem:[%s304 + $0x300] sm:$0xff] %v2401
      %2546 = vst [vmem:[%s304 + $0x308] sm:$0xff] %v2402
      %2547 = vst [vmem:[%s304 + $0x310] sm:$0xff] %v2403
      %2548 = vst [vmem:[%s304 + $0x318] sm:$0xff] %v2404
      %2549 = vst [vmem:[%s304 + $0x320] sm:$0xff] %v2405
      %2550 = vst [vmem:[%s304 + $0x328] sm:$0xff] %v2406
      %2551 = vst [vmem:[%s304 + $0x330] sm:$0xff] %v2407
      %2552 = vst [vmem:[%s304 + $0x338] sm:$0xff] %v2408
      %2553 = vst [vmem:[%s304 + $0x340] sm:$0xff] %v2409
      %2554 = vst [vmem:[%s304 + $0x348] sm:$0xff] %v2410
      %2555 = vst [vmem:[%s304 + $0x350] sm:$0xff] %v2411
      %2556 = vst [vmem:[%s304 + $0x358] sm:$0xff] %v2412
      %2557 = vst [vmem:[%s304 + $0x360] sm:$0xff] %v2413
      %2558 = vst [vmem:[%s304 + $0x368] sm:$0xff] %v2414
      %2559 = vst [vmem:[%s304 + $0x370] sm:$0xff] %v2415
      %2560 = vst [vmem:[%s304 + $0x378] sm:$0xff] %v2416
      %2561 = vst [vmem:[%s304 + $0x380] sm:$0xff] %v2417
      %2562 = vst [vmem:[%s304 + $0x388] sm:$0xff] %v2418
      %2563 = vst [vmem:[%s304 + $0x390] sm:$0xff] %v2419
      %2564 = vst [vmem:[%s304 + $0x398] sm:$0xff] %v2420
      %2565 = vst [vmem:[%s304 + $0x3a0] sm:$0xff] %v2421
      %2566 = vst [vmem:[%s304 + $0x3a8] sm:$0xff] %v2422
      %2567 = vst [vmem:[%s304 + $0x3b0] sm:$0xff] %v2423
      %2568 = vst [vmem:[%s304 + $0x3b8] sm:$0xff] %v2424
      %2569 = vst [vmem:[%s304 + $0x3c0] sm:$0xff] %v2425
      %2570 = vst [vmem:[%s304 + $0x3c8] sm:$0xff] %v2426
      %2571 = vst [vmem:[%s304 + $0x3d0] sm:$0xff] %v2427
      %2572 = vst [vmem:[%s304 + $0x3d8] sm:$0xff] %v2428
      %2573 = vst [vmem:[%s304 + $0x3e0] sm:$0xff] %v2429
      %2574 = vst [vmem:[%s304 + $0x3e8] sm:$0xff] %v2430
      %2575 = vst [vmem:[%s304 + $0x3f0] sm:$0xff] %v2431
      %2576 = vst [vmem:[%s304 + $0x3f8] sm:$0xff] %v2432
      %2577 = vst [vmem:[%s304 + $0x400] sm:$0xff] %v2433
      %2578 = vst [vmem:[%s304 + $0x408] sm:$0xff] %v2434
      %2579 = vst [vmem:[%s304 + $0x410] sm:$0xff] %v2435
      %2580 = vst [vmem:[%s304 + $0x418] sm:$0xff] %v2436
      %2581 = vst [vmem:[%s304 + $0x420] sm:$0xff] %v2437
      %2582 = vst [vmem:[%s304 + $0x428] sm:$0xff] %v2438
      %2583 = vst [vmem:[%s304 + $0x430] sm:$0xff] %v2439
      %2584 = vst [vmem:[%s304 + $0x438] sm:$0xff] %v2440
      %2585 = vst [vmem:[%s304 + $0x440] sm:$0xff] %v2441
      %2586 = vst [vmem:[%s304 + $0x448] sm:$0xff] %v2442
      %2587 = vst [vmem:[%s304 + $0x450] sm:$0xff] %v2443
      %2588 = vst [vmem:[%s304 + $0x458] sm:$0xff] %v2444
      %2589 = vst [vmem:[%s304 + $0x460] sm:$0xff] %v2445
      %2590 = vst [vmem:[%s304 + $0x468] sm:$0xff] %v2446
      %2591 = vst [vmem:[%s304 + $0x470] sm:$0xff] %v2447
      %2592 = vst [vmem:[%s304 + $0x478] sm:$0xff] %v2448
      %s2593 = smul.u32 9, %s20
      %p2594 = scmp.lt.s32.totalorder %s21, 1
      %s2595 = scalar_select %p2594, %s21, 1
      %p2596 = scmp.lt.s32.totalorder %s2593, 8
      %s2597 = scalar_select %p2596, %s2593, 8
      %s2598 = smul.addr %s2595, 144
      %s2599 = sadd.s32 %s2597, %s2598
      %s2600 = smul.addr %s2599, 8
      %s2601 = scalar_lea.vmem %s5, %s2600
      // Predicated region
      $region41: #{lraspp_forward.3} parent=39 // pred_check
        %p2602 = pneg %p170
      $region42: #{lraspp_forward.3} parent=39 // pred_check_branch
        %2604 = sbr.rel (%p2602) target = $region44
      $region43: #{lraspp_forward.3} parent=39 // pred_region
        %s2605 = smul.u32 9, %s20
      $region44: #{lraspp_forward.3} parent=39 // pred_fallthru
        _
    $region40: #{lraspp_forward.3} parent=5 // pred_fallthru
      _
    %p2606 = scmp.le.s32.totalorder 2, %s11
    // Predicated region
    $region45: #{lraspp_forward.3} parent=5 // pred_check
      %p2607 = pneg %p2606
    $region46: #{lraspp_forward.3} parent=5 // pred_check_branch
      %2609 = sbr.rel (%p2607) target = $region48
    $region47: #{lraspp_forward.3} parent=5 // pred_region
      %s2610 = ssub.s32 %s11, 2
      // Predicated region
      $region49: #{lraspp_forward.3} parent=47 // pred_check
        %p2611 = pneg %p176
      $region50: #{lraspp_forward.3} parent=47 // pred_check_branch
        %2613 = sbr.rel (%p2611) target = $region52
      $region51: #{lraspp_forward.3} parent=47 // pred_region
        %s2614 = smul.u32 9, %s22
        %p2615 = scmp.lt.s32.totalorder %s23, 1
        %s2616 = scalar_select %p2615, %s23, 1
        %p2617 = scmp.lt.s32.totalorder %s2614, 8
        %s2618 = scalar_select %p2617, %s2614, 8
        %s2619 = smul.addr %s2616, 144
        %s2620 = sadd.s32 %s2618, %s2619
        %s2621 = smul.addr %s2620, 8
        %s2622 = scalar_lea.vmem %s5, %s2621
      $region52: #{lraspp_forward.3} parent=47 // pred_fallthru
        _
    $region48: #{lraspp_forward.3} parent=5 // pred_fallthru
      _
  $region6: #{lraspp_forward.3} parent=0 // loop_footer
    %s15 = sadd.s32 1, %s11
  $region7: #{lraspp_forward.3} parent=0 // loop_footer_branch
    %10 = sbr.rel target = $region3
  $region8: #{lraspp_forward.3} parent=0 // loop_exit
    _

</llo_original>
